<compile_context>
chip_gen: v7x
topology: tpu7x:2x2x1
jax: 0.10.0
libtpu: 0.0.40
codegen_flags: <defaults>
</compile_context>

<pallas_src>
import functools

import jax
import jax.numpy as jnp
import numpy as np
from jax.experimental import pallas as pl
from jax.experimental.pallas import tpu as pltpu


KSIZE = 3  # conv kernel size (module default k=3, stride 1, padding 0)


# ---------------------------------------------------------------------------
# Kernel 1: fused conv1 -> conv2 -> conv3 (valid, stride 1) + bias + ReLU.
# One grid step == one batch sample.
# ---------------------------------------------------------------------------
def _conv_stack_kernel(x_ref, w1_ref, b1_ref, w2_ref, b2_ref, w3_ref, b3_ref,
                       o_ref, a1_ref, a2_ref, a3_ref, *, width, s3, cols):
    def conv_layer(src_ref, dst_ref, w_ref, b_ref, n_cols):
        c_out = dst_ref.shape[0]
        acc = jnp.zeros((c_out, n_cols), jnp.float32)
        for dh in range(KSIZE):
            for dw in range(KSIZE):
                off = dh * width + dw
                lhs = w_ref[dh * KSIZE + dw]                      # (Cout, Cin) bf16
                rhs = src_ref[:, off:off + n_cols].astype(jnp.bfloat16)
                acc = acc + jnp.dot(lhs, rhs,
                                    preferred_element_type=jnp.float32)
        dst_ref[...] = jnp.maximum(acc + b_ref[...], 0.0)

    conv_layer(x_ref, a1_ref, w1_ref, b1_ref, cols[0])
    conv_layer(a1_ref, a2_ref, w2_ref, b2_ref, cols[1])
    conv_layer(a2_ref, a3_ref, w3_ref, b3_ref, cols[2])

    # Gather the valid (h, w) columns of conv3 into the (C3, s3*s3) output.
    for i in range(s3):
        o_ref[:, i * s3:(i + 1) * s3] = a3_ref[:, i * width:i * width + s3]


# ---------------------------------------------------------------------------
# Kernel 2: FC layer  relu(feats @ Wfc + b), K-tiled with f32 accumulator.
# ---------------------------------------------------------------------------
def _fc_kernel(x_ref, w_ref, b_ref, o_ref, acc_ref):
    @pl.when(pl.program_id(0) == 0)
    def _init():
        acc_ref[...] = jnp.zeros_like(acc_ref)

    acc_ref[...] += jnp.dot(x_ref[...].astype(jnp.bfloat16), w_ref[...],
                            preferred_element_type=jnp.float32)

    @pl.when(pl.program_id(0) == pl.num_programs(0) - 1)
    def _finish():
        o_ref[...] = jnp.maximum(acc_ref[...] + b_ref[...], 0.0)


# ---------------------------------------------------------------------------
# Parameters: PyTorch-layout init + one-time repack into kernel layouts.
# ---------------------------------------------------------------------------
def init_conv_network_params(key, input_size, num_input_channels,
                             output_vec_size, k=KSIZE):
    """PyTorch-layout parameters with PyTorch-like U(+-1/sqrt(fan_in)) init."""
    s3 = input_size - 3 * (k - 1)
    fc_in = 64 * s3 * s3

    def uinit(kk, shape, fan_in):
        bound = 1.0 / float(np.sqrt(fan_in))
        return jax.random.uniform(kk, shape, jnp.float32, -bound, bound)

    ks = jax.random.split(key, 8)
    return dict(
        w1=uinit(ks[0], (16, num_input_channels, k, k), num_input_channels * k * k),
        b1=uinit(ks[1], (16,), num_input_channels * k * k),
        w2=uinit(ks[2], (32, 16, k, k), 16 * k * k),
        b2=uinit(ks[3], (32,), 16 * k * k),
        w3=uinit(ks[4], (64, 32, k, k), 32 * k * k),
        b3=uinit(ks[5], (64,), 32 * k * k),
        wfc=uinit(ks[6], (output_vec_size, fc_in), fc_in),   # PyTorch (out, in)
        bfc=uinit(ks[7], (output_vec_size,), fc_in),
    )


def prepare_params(tp, k=KSIZE, n_pad=128):
    """One-time repack (hoisted out of the hot path):
       conv weights -> (k*k, Cout, Cin) bf16 tap stacks, biases -> (Cout, 1),
       FC weight -> (fc_in, 128) bf16 (transposed, zero-padded output lanes)."""
    def conv_w(w):
        co, ci = w.shape[0], w.shape[1]
        return jnp.transpose(w, (2, 3, 0, 1)).reshape(k * k, co, ci).astype(jnp.bfloat16)

    n_out, fc_in = tp["wfc"].shape
    assert n_out <= n_pad
    wfc = jnp.zeros((fc_in, n_pad), jnp.bfloat16)
    wfc = wfc.at[:, :n_out].set(tp["wfc"].T.astype(jnp.bfloat16))
    bfc = jnp.zeros((1, n_pad), jnp.float32).at[0, :n_out].set(tp["bfc"])
    return dict(
        w1=conv_w(tp["w1"]), b1=tp["b1"].reshape(-1, 1),
        w2=conv_w(tp["w2"]), b2=tp["b2"].reshape(-1, 1),
        w3=conv_w(tp["w3"]), b3=tp["b3"].reshape(-1, 1),
        wfc=wfc, bfc=bfc,
    )


# ---------------------------------------------------------------------------
# Forward pass (matches ConvNetwork.forward semantics).
# ---------------------------------------------------------------------------
def conv_network_forward(params, x_nchw, *, n_out):
    B, c_in, H, W = x_nchw.shape
    assert H == W, "square inputs expected"
    c1, c2, c3 = 16, 32, 64
    s3 = W - 3 * (KSIZE - 1)
    shrink = (KSIZE - 1) * (W + 1)
    cols = (W * W - shrink, W * W - 2 * shrink, W * W - 3 * shrink)

    x2d = x_nchw.reshape(B, c_in, W * W)       # free reshape, channel-major

    flops1 = 2 * B * KSIZE * KSIZE * (
        c1 * c_in * cols[0] + c2 * c1 * cols[1] + c3 * c2 * cols[2])
    bytes1 = (x2d.size * 4
              + (params["w1"].size + params["w2"].size + params["w3"].size) * 2
              + (params["b1"].size + params["b2"].size + params["b3"].size) * 4
              + B * c3 * s3 * s3 * 4)

    kernel1 = functools.partial(_conv_stack_kernel, width=W, s3=s3, cols=cols)
    feats = pl.pallas_call(
        kernel1,
        grid=(B,),
        in_specs=[
            pl.BlockSpec((None, c_in, W * W), lambda b: (b, 0, 0)),
            pl.BlockSpec((KSIZE * KSIZE, c1, c_in), lambda b: (0, 0, 0)),
            pl.BlockSpec((c1, 1), lambda b: (0, 0)),
            pl.BlockSpec((KSIZE * KSIZE, c2, c1), lambda b: (0, 0, 0)),
            pl.BlockSpec((c2, 1), lambda b: (0, 0)),
            pl.BlockSpec((KSIZE * KSIZE, c3, c2), lambda b: (0, 0, 0)),
            pl.BlockSpec((c3, 1), lambda b: (0, 0)),
        ],
        out_specs=pl.BlockSpec((None, c3, s3 * s3), lambda b: (b, 0, 0)),
        out_shape=jax.ShapeDtypeStruct((B, c3, s3 * s3), jnp.float32),
        scratch_shapes=[
            pltpu.VMEM((c1, cols[0]), jnp.float32),
            pltpu.VMEM((c2, cols[1]), jnp.float32),
            pltpu.VMEM((c3, cols[2]), jnp.float32),
        ],
        compiler_params=pltpu.CompilerParams(
            dimension_semantics=("parallel",),
            vmem_limit_bytes=32 * 1024 * 1024),
        cost_estimate=pl.CostEstimate(flops=flops1, transcendentals=0,
                                      bytes_accessed=bytes1),
    )(x2d, params["w1"], params["b1"], params["w2"], params["b2"],
      params["w3"], params["b3"])

    # (c, h, w) flatten order == PyTorch's NCHW view(-1, C*H*W); zero-copy.
    feats = feats.reshape(B, c3 * s3 * s3)

    wfc, bfc = params["wfc"], params["bfc"]    # (fc_in, 128) bf16, (1, 128) f32
    fc_in, n_pad = wfc.shape
    # Pick a K tile that keeps the lane (minor) dim a multiple of 128.
    nk = 1
    for cand in (8, 5, 4, 2):
        if fc_in % cand == 0 and (fc_in // cand) % 128 == 0:
            nk = cand
            break
    kt = fc_in // nk

    out = pl.pallas_call(
        _fc_kernel,
        grid=(nk,),
        in_specs=[
            pl.BlockSpec((B, kt), lambda k: (0, k)),
            pl.BlockSpec((kt, n_pad), lambda k: (k, 0)),
            pl.BlockSpec((1, n_pad), lambda k: (0, 0)),
        ],
        out_specs=pl.BlockSpec((B, n_pad), lambda k: (0, 0)),
        out_shape=jax.ShapeDtypeStruct((B, n_pad), jnp.float32),
        scratch_shapes=[pltpu.VMEM((B, n_pad), jnp.float32)],
        compiler_params=pltpu.CompilerParams(
            dimension_semantics=("arbitrary",),
            vmem_limit_bytes=32 * 1024 * 1024),
        cost_estimate=pl.CostEstimate(
            flops=2 * B * fc_in * n_pad, transcendentals=0,
            bytes_accessed=feats.size * 4 + wfc.size * 2 + B * n_pad * 4),
    )(feats, wfc, bfc)

    return out[:, :n_out]


# Pure-JAX reference (NCHW, same math as the PyTorch module) for validation.
def conv_network_reference(tp, x_nchw):
    def conv(x, w, b):
        y = jax.lax.conv_general_dilated(
            x, w, window_strides=(1, 1), padding="VALID",
            dimension_numbers=("NCHW", "OIHW", "NCHW"))
        return jax.nn.relu(y + b[None, :, None, None])

    x = conv(x_nchw, tp["w1"], tp["b1"])
    x = conv(x, tp["w2"], tp["b2"])
    x = conv(x, tp["w3"], tp["b3"])
    xf = x.reshape(x.shape[0], -1)
    return jax.nn.relu(xf @ tp["wfc"].T + tp["bfc"])


if __name__ == "__main__":
    input_size, num_input_channels, output_vec_size = 16, 4, 32
    batch = 2

    key = jax.random.PRNGKey(0)
    pkey, xkey = jax.random.split(key)
    torch_params = init_conv_network_params(
        pkey, input_size, num_input_channels, output_vec_size, KSIZE)
    params = prepare_params(torch_params)
    x = jax.random.normal(
        xkey, (batch, num_input_channels, input_size, input_size), jnp.float32)

    fwd = jax.jit(functools.partial(conv_network_forward, n_out=output_vec_size))
    out = jax.block_until_ready(fwd(params, x))
    ref = jax.block_until_ready(conv_network_reference(torch_params, x))

    assert out.shape == (batch, output_vec_size), out.shape
    np.testing.assert_allclose(np.asarray(out), np.asarray(ref),
                               rtol=5e-2, atol=5e-2)
    print("KERNEL_OK")
</pallas_src>

<mosaic_0001>
module attributes {stable_mosaic.version = 11 : i64} {
  func.func @_conv_stack_kernel(%arg0: i32, %arg1: memref<1x4x256xf32, #tpu.memory_space<vmem>>, %arg2: memref<9x16x4xbf16, #tpu.memory_space<vmem>>, %arg3: memref<16x1xf32, #tpu.memory_space<vmem>>, %arg4: memref<9x32x16xbf16, #tpu.memory_space<vmem>>, %arg5: memref<32x1xf32, #tpu.memory_space<vmem>>, %arg6: memref<9x64x32xbf16, #tpu.memory_space<vmem>>, %arg7: memref<64x1xf32, #tpu.memory_space<vmem>>, %arg8: memref<1x64x100xf32, #tpu.memory_space<vmem>>, %arg9: memref<16x222xf32, #tpu.memory_space<vmem>>, %arg10: memref<32x188xf32, #tpu.memory_space<vmem>>, %arg11: memref<64x154xf32, #tpu.memory_space<vmem>>) attributes {dimension_semantics = [#tpu.dimension_semantics<parallel>], iteration_bounds = array<i64: 2>, scalar_prefetch = 0 : i64, scratch_operands = 3 : i64, tpu.core_type = #tpu.core_type<tc>, window_params = [{transform_indices = @transform_0, window_bounds = array<i64: 1, 4, 256>}, {pipeline_mode = #tpu.pipeline_mode<synchronous>, transform_indices = @transform_1, window_bounds = array<i64: 9, 16, 4>}, {pipeline_mode = #tpu.pipeline_mode<synchronous>, transform_indices = @transform_2, window_bounds = array<i64: 16, 1>}, {pipeline_mode = #tpu.pipeline_mode<synchronous>, transform_indices = @transform_3, window_bounds = array<i64: 9, 32, 16>}, {pipeline_mode = #tpu.pipeline_mode<synchronous>, transform_indices = @transform_4, window_bounds = array<i64: 32, 1>}, {pipeline_mode = #tpu.pipeline_mode<synchronous>, transform_indices = @transform_5, window_bounds = array<i64: 9, 64, 32>}, {pipeline_mode = #tpu.pipeline_mode<synchronous>, transform_indices = @transform_6, window_bounds = array<i64: 64, 1>}, {transform_indices = @transform_7, window_bounds = array<i64: 1, 64, 100>}]} {
    %cst = arith.constant 0.000000e+00 : f32
    %0 = vector.broadcast %cst : f32 to vector<16x222xf32>
    %c0 = arith.constant 0 : index
    %c0_0 = arith.constant 0 : index
    %c0_1 = arith.constant 0 : index
    %1 = vector.load %arg2[%c0, %c0_0, %c0_1] : memref<9x16x4xbf16, #tpu.memory_space<vmem>>, vector<1x16x4xbf16>
    %2 = vector.shape_cast %1 : vector<1x16x4xbf16> to vector<16x4xbf16>
    %c0_2 = arith.constant 0 : index
    %c0_3 = arith.constant 0 : index
    %c0_4 = arith.constant 0 : index
    %3 = vector.load %arg1[%c0_2, %c0_3, %c0_4] : memref<1x4x256xf32, #tpu.memory_space<vmem>>, vector<1x4x222xf32>
    %4 = vector.shape_cast %3 : vector<1x4x222xf32> to vector<4x222xf32>
    %5 = arith.truncf %4 : vector<4x222xf32> to vector<4x222xbf16>
    %cst_5 = arith.constant dense<0.000000e+00> : vector<16x222xf32>
    %6 = tpu.matmul %2, %5, %cst_5 {dimension_numbers = #tpu.dot_dimension_numbers<[1], [0], [0], [1], [0, 0, 1, 1], [], []>} : vector<16x4xbf16>, vector<4x222xbf16>, vector<16x222xf32> -> vector<16x222xf32>
    %7 = arith.addf %0, %6 : vector<16x222xf32>
    %c1 = arith.constant 1 : index
    %c0_6 = arith.constant 0 : index
    %c0_7 = arith.constant 0 : index
    %8 = vector.load %arg2[%c1, %c0_6, %c0_7] : memref<9x16x4xbf16, #tpu.memory_space<vmem>>, vector<1x16x4xbf16>
    %9 = vector.shape_cast %8 : vector<1x16x4xbf16> to vector<16x4xbf16>
    %c0_8 = arith.constant 0 : index
    %c0_9 = arith.constant 0 : index
    %c1_10 = arith.constant 1 : index
    %10 = vector.load %arg1[%c0_8, %c0_9, %c1_10] : memref<1x4x256xf32, #tpu.memory_space<vmem>>, vector<1x4x222xf32>
    %11 = vector.shape_cast %10 : vector<1x4x222xf32> to vector<4x222xf32>
    %12 = arith.truncf %11 : vector<4x222xf32> to vector<4x222xbf16>
    %cst_11 = arith.constant dense<0.000000e+00> : vector<16x222xf32>
    %13 = tpu.matmul %9, %12, %cst_11 {dimension_numbers = #tpu.dot_dimension_numbers<[1], [0], [0], [1], [0, 0, 1, 1], [], []>} : vector<16x4xbf16>, vector<4x222xbf16>, vector<16x222xf32> -> vector<16x222xf32>
    %14 = arith.addf %7, %13 : vector<16x222xf32>
    %c2 = arith.constant 2 : index
    %c0_12 = arith.constant 0 : index
    %c0_13 = arith.constant 0 : index
    %15 = vector.load %arg2[%c2, %c0_12, %c0_13] : memref<9x16x4xbf16, #tpu.memory_space<vmem>>, vector<1x16x4xbf16>
    %16 = vector.shape_cast %15 : vector<1x16x4xbf16> to vector<16x4xbf16>
    %c0_14 = arith.constant 0 : index
    %c0_15 = arith.constant 0 : index
    %c2_16 = arith.constant 2 : index
    %17 = vector.load %arg1[%c0_14, %c0_15, %c2_16] : memref<1x4x256xf32, #tpu.memory_space<vmem>>, vector<1x4x222xf32>
    %18 = vector.shape_cast %17 : vector<1x4x222xf32> to vector<4x222xf32>
    %19 = arith.truncf %18 : vector<4x222xf32> to vector<4x222xbf16>
    %cst_17 = arith.constant dense<0.000000e+00> : vector<16x222xf32>
    %20 = tpu.matmul %16, %19, %cst_17 {dimension_numbers = #tpu.dot_dimension_numbers<[1], [0], [0], [1], [0, 0, 1, 1], [], []>} : vector<16x4xbf16>, vector<4x222xbf16>, vector<16x222xf32> -> vector<16x222xf32>
    %21 = arith.addf %14, %20 : vector<16x222xf32>
    %c3 = arith.constant 3 : index
    %c0_18 = arith.constant 0 : index
    %c0_19 = arith.constant 0 : index
    %22 = vector.load %arg2[%c3, %c0_18, %c0_19] : memref<9x16x4xbf16, #tpu.memory_space<vmem>>, vector<1x16x4xbf16>
    %23 = vector.shape_cast %22 : vector<1x16x4xbf16> to vector<16x4xbf16>
    %c0_20 = arith.constant 0 : index
    %c0_21 = arith.constant 0 : index
    %c16 = arith.constant 16 : index
    %24 = vector.load %arg1[%c0_20, %c0_21, %c16] : memref<1x4x256xf32, #tpu.memory_space<vmem>>, vector<1x4x222xf32>
    %25 = vector.shape_cast %24 : vector<1x4x222xf32> to vector<4x222xf32>
    %26 = arith.truncf %25 : vector<4x222xf32> to vector<4x222xbf16>
    %cst_22 = arith.constant dense<0.000000e+00> : vector<16x222xf32>
    %27 = tpu.matmul %23, %26, %cst_22 {dimension_numbers = #tpu.dot_dimension_numbers<[1], [0], [0], [1], [0, 0, 1, 1], [], []>} : vector<16x4xbf16>, vector<4x222xbf16>, vector<16x222xf32> -> vector<16x222xf32>
    %28 = arith.addf %21, %27 : vector<16x222xf32>
    %c4 = arith.constant 4 : index
    %c0_23 = arith.constant 0 : index
    %c0_24 = arith.constant 0 : index
    %29 = vector.load %arg2[%c4, %c0_23, %c0_24] : memref<9x16x4xbf16, #tpu.memory_space<vmem>>, vector<1x16x4xbf16>
    %30 = vector.shape_cast %29 : vector<1x16x4xbf16> to vector<16x4xbf16>
    %c0_25 = arith.constant 0 : index
    %c0_26 = arith.constant 0 : index
    %c17 = arith.constant 17 : index
    %31 = vector.load %arg1[%c0_25, %c0_26, %c17] : memref<1x4x256xf32, #tpu.memory_space<vmem>>, vector<1x4x222xf32>
    %32 = vector.shape_cast %31 : vector<1x4x222xf32> to vector<4x222xf32>
    %33 = arith.truncf %32 : vector<4x222xf32> to vector<4x222xbf16>
    %cst_27 = arith.constant dense<0.000000e+00> : vector<16x222xf32>
    %34 = tpu.matmul %30, %33, %cst_27 {dimension_numbers = #tpu.dot_dimension_numbers<[1], [0], [0], [1], [0, 0, 1, 1], [], []>} : vector<16x4xbf16>, vector<4x222xbf16>, vector<16x222xf32> -> vector<16x222xf32>
    %35 = arith.addf %28, %34 : vector<16x222xf32>
    %c5 = arith.constant 5 : index
    %c0_28 = arith.constant 0 : index
    %c0_29 = arith.constant 0 : index
    %36 = vector.load %arg2[%c5, %c0_28, %c0_29] : memref<9x16x4xbf16, #tpu.memory_space<vmem>>, vector<1x16x4xbf16>
    %37 = vector.shape_cast %36 : vector<1x16x4xbf16> to vector<16x4xbf16>
    %c0_30 = arith.constant 0 : index
    %c0_31 = arith.constant 0 : index
    %c18 = arith.constant 18 : index
    %38 = vector.load %arg1[%c0_30, %c0_31, %c18] : memref<1x4x256xf32, #tpu.memory_space<vmem>>, vector<1x4x222xf32>
    %39 = vector.shape_cast %38 : vector<1x4x222xf32> to vector<4x222xf32>
    %40 = arith.truncf %39 : vector<4x222xf32> to vector<4x222xbf16>
    %cst_32 = arith.constant dense<0.000000e+00> : vector<16x222xf32>
    %41 = tpu.matmul %37, %40, %cst_32 {dimension_numbers = #tpu.dot_dimension_numbers<[1], [0], [0], [1], [0, 0, 1, 1], [], []>} : vector<16x4xbf16>, vector<4x222xbf16>, vector<16x222xf32> -> vector<16x222xf32>
    %42 = arith.addf %35, %41 : vector<16x222xf32>
    %c6 = arith.constant 6 : index
    %c0_33 = arith.constant 0 : index
    %c0_34 = arith.constant 0 : index
    %43 = vector.load %arg2[%c6, %c0_33, %c0_34] : memref<9x16x4xbf16, #tpu.memory_space<vmem>>, vector<1x16x4xbf16>
    %44 = vector.shape_cast %43 : vector<1x16x4xbf16> to vector<16x4xbf16>
    %c0_35 = arith.constant 0 : index
    %c0_36 = arith.constant 0 : index
    %c32 = arith.constant 32 : index
    %45 = vector.load %arg1[%c0_35, %c0_36, %c32] : memref<1x4x256xf32, #tpu.memory_space<vmem>>, vector<1x4x222xf32>
    %46 = vector.shape_cast %45 : vector<1x4x222xf32> to vector<4x222xf32>
    %47 = arith.truncf %46 : vector<4x222xf32> to vector<4x222xbf16>
    %cst_37 = arith.constant dense<0.000000e+00> : vector<16x222xf32>
    %48 = tpu.matmul %44, %47, %cst_37 {dimension_numbers = #tpu.dot_dimension_numbers<[1], [0], [0], [1], [0, 0, 1, 1], [], []>} : vector<16x4xbf16>, vector<4x222xbf16>, vector<16x222xf32> -> vector<16x222xf32>
    %49 = arith.addf %42, %48 : vector<16x222xf32>
    %c7 = arith.constant 7 : index
    %c0_38 = arith.constant 0 : index
    %c0_39 = arith.constant 0 : index
    %50 = vector.load %arg2[%c7, %c0_38, %c0_39] : memref<9x16x4xbf16, #tpu.memory_space<vmem>>, vector<1x16x4xbf16>
    %51 = vector.shape_cast %50 : vector<1x16x4xbf16> to vector<16x4xbf16>
    %c0_40 = arith.constant 0 : index
    %c0_41 = arith.constant 0 : index
    %c33 = arith.constant 33 : index
    %52 = vector.load %arg1[%c0_40, %c0_41, %c33] : memref<1x4x256xf32, #tpu.memory_space<vmem>>, vector<1x4x222xf32>
    %53 = vector.shape_cast %52 : vector<1x4x222xf32> to vector<4x222xf32>
    %54 = arith.truncf %53 : vector<4x222xf32> to vector<4x222xbf16>
    %cst_42 = arith.constant dense<0.000000e+00> : vector<16x222xf32>
    %55 = tpu.matmul %51, %54, %cst_42 {dimension_numbers = #tpu.dot_dimension_numbers<[1], [0], [0], [1], [0, 0, 1, 1], [], []>} : vector<16x4xbf16>, vector<4x222xbf16>, vector<16x222xf32> -> vector<16x222xf32>
    %56 = arith.addf %49, %55 : vector<16x222xf32>
    %c8 = arith.constant 8 : index
    %c0_43 = arith.constant 0 : index
    %c0_44 = arith.constant 0 : index
    %57 = vector.load %arg2[%c8, %c0_43, %c0_44] : memref<9x16x4xbf16, #tpu.memory_space<vmem>>, vector<1x16x4xbf16>
    %58 = vector.shape_cast %57 : vector<1x16x4xbf16> to vector<16x4xbf16>
    %c0_45 = arith.constant 0 : index
    %c0_46 = arith.constant 0 : index
    %c34 = arith.constant 34 : index
    %59 = vector.load %arg1[%c0_45, %c0_46, %c34] : memref<1x4x256xf32, #tpu.memory_space<vmem>>, vector<1x4x222xf32>
    %60 = vector.shape_cast %59 : vector<1x4x222xf32> to vector<4x222xf32>
    %61 = arith.truncf %60 : vector<4x222xf32> to vector<4x222xbf16>
    %cst_47 = arith.constant dense<0.000000e+00> : vector<16x222xf32>
    %62 = tpu.matmul %58, %61, %cst_47 {dimension_numbers = #tpu.dot_dimension_numbers<[1], [0], [0], [1], [0, 0, 1, 1], [], []>} : vector<16x4xbf16>, vector<4x222xbf16>, vector<16x222xf32> -> vector<16x222xf32>
    %63 = arith.addf %56, %62 : vector<16x222xf32>
    %c0_48 = arith.constant 0 : index
    %c0_49 = arith.constant 0 : index
    %64 = vector.load %arg3[%c0_48, %c0_49] : memref<16x1xf32, #tpu.memory_space<vmem>>, vector<16x1xf32>
    %65 = vector.broadcast %64 : vector<16x1xf32> to vector<16x222xf32>
    %66 = arith.addf %63, %65 : vector<16x222xf32>
    %cst_50 = arith.constant 0.000000e+00 : f32
    %67 = vector.broadcast %cst_50 : f32 to vector<16x222xf32>
    %68 = arith.maximumf %66, %67 : vector<16x222xf32>
    %c0_51 = arith.constant 0 : index
    %c0_52 = arith.constant 0 : index
    %69 = vector.load %arg9[%c0_51, %c0_52] : memref<16x222xf32, #tpu.memory_space<vmem>>, vector<16x222xf32>
    tpu.vector_store %arg9[%c0_51, %c0_52], %68 {strides = array<i32>} : memref<16x222xf32, #tpu.memory_space<vmem>>, vector<16x222xf32>,
    %cst_53 = arith.constant 0.000000e+00 : f32
    %70 = vector.broadcast %cst_53 : f32 to vector<32x188xf32>
    %c0_54 = arith.constant 0 : index
    %c0_55 = arith.constant 0 : index
    %c0_56 = arith.constant 0 : index
    %71 = vector.load %arg4[%c0_54, %c0_55, %c0_56] : memref<9x32x16xbf16, #tpu.memory_space<vmem>>, vector<1x32x16xbf16>
    %72 = vector.shape_cast %71 : vector<1x32x16xbf16> to vector<32x16xbf16>
    %c0_57 = arith.constant 0 : index
    %c0_58 = arith.constant 0 : index
    %73 = vector.load %arg9[%c0_57, %c0_58] : memref<16x222xf32, #tpu.memory_space<vmem>>, vector<16x188xf32>
    %74 = arith.truncf %73 : vector<16x188xf32> to vector<16x188xbf16>
    %cst_59 = arith.constant dense<0.000000e+00> : vector<32x188xf32>
    %75 = tpu.matmul %72, %74, %cst_59 {dimension_numbers = #tpu.dot_dimension_numbers<[1], [0], [0], [1], [0, 0, 1, 1], [], []>} : vector<32x16xbf16>, vector<16x188xbf16>, vector<32x188xf32> -> vector<32x188xf32>
    %76 = arith.addf %70, %75 : vector<32x188xf32>
    %c1_60 = arith.constant 1 : index
    %c0_61 = arith.constant 0 : index
    %c0_62 = arith.constant 0 : index
    %77 = vector.load %arg4[%c1_60, %c0_61, %c0_62] : memref<9x32x16xbf16, #tpu.memory_space<vmem>>, vector<1x32x16xbf16>
    %78 = vector.shape_cast %77 : vector<1x32x16xbf16> to vector<32x16xbf16>
    %c0_63 = arith.constant 0 : index
    %c1_64 = arith.constant 1 : index
    %79 = vector.load %arg9[%c0_63, %c1_64] : memref<16x222xf32, #tpu.memory_space<vmem>>, vector<16x188xf32>
    %80 = arith.truncf %79 : vector<16x188xf32> to vector<16x188xbf16>
    %cst_65 = arith.constant dense<0.000000e+00> : vector<32x188xf32>
    %81 = tpu.matmul %78, %80, %cst_65 {dimension_numbers = #tpu.dot_dimension_numbers<[1], [0], [0], [1], [0, 0, 1, 1], [], []>} : vector<32x16xbf16>, vector<16x188xbf16>, vector<32x188xf32> -> vector<32x188xf32>
    %82 = arith.addf %76, %81 : vector<32x188xf32>
    %c2_66 = arith.constant 2 : index
    %c0_67 = arith.constant 0 : index
    %c0_68 = arith.constant 0 : index
    %83 = vector.load %arg4[%c2_66, %c0_67, %c0_68] : memref<9x32x16xbf16, #tpu.memory_space<vmem>>, vector<1x32x16xbf16>
    %84 = vector.shape_cast %83 : vector<1x32x16xbf16> to vector<32x16xbf16>
    %c0_69 = arith.constant 0 : index
    %c2_70 = arith.constant 2 : index
    %85 = vector.load %arg9[%c0_69, %c2_70] : memref<16x222xf32, #tpu.memory_space<vmem>>, vector<16x188xf32>
    %86 = arith.truncf %85 : vector<16x188xf32> to vector<16x188xbf16>
    %cst_71 = arith.constant dense<0.000000e+00> : vector<32x188xf32>
    %87 = tpu.matmul %84, %86, %cst_71 {dimension_numbers = #tpu.dot_dimension_numbers<[1], [0], [0], [1], [0, 0, 1, 1], [], []>} : vector<32x16xbf16>, vector<16x188xbf16>, vector<32x188xf32> -> vector<32x188xf32>
    %88 = arith.addf %82, %87 : vector<32x188xf32>
    %c3_72 = arith.constant 3 : index
    %c0_73 = arith.constant 0 : index
    %c0_74 = arith.constant 0 : index
    %89 = vector.load %arg4[%c3_72, %c0_73, %c0_74] : memref<9x32x16xbf16, #tpu.memory_space<vmem>>, vector<1x32x16xbf16>
    %90 = vector.shape_cast %89 : vector<1x32x16xbf16> to vector<32x16xbf16>
    %c0_75 = arith.constant 0 : index
    %c16_76 = arith.constant 16 : index
    %91 = vector.load %arg9[%c0_75, %c16_76] : memref<16x222xf32, #tpu.memory_space<vmem>>, vector<16x188xf32>
    %92 = arith.truncf %91 : vector<16x188xf32> to vector<16x188xbf16>
    %cst_77 = arith.constant dense<0.000000e+00> : vector<32x188xf32>
    %93 = tpu.matmul %90, %92, %cst_77 {dimension_numbers = #tpu.dot_dimension_numbers<[1], [0], [0], [1], [0, 0, 1, 1], [], []>} : vector<32x16xbf16>, vector<16x188xbf16>, vector<32x188xf32> -> vector<32x188xf32>
    %94 = arith.addf %88, %93 : vector<32x188xf32>
    %c4_78 = arith.constant 4 : index
    %c0_79 = arith.constant 0 : index
    %c0_80 = arith.constant 0 : index
    %95 = vector.load %arg4[%c4_78, %c0_79, %c0_80] : memref<9x32x16xbf16, #tpu.memory_space<vmem>>, vector<1x32x16xbf16>
    %96 = vector.shape_cast %95 : vector<1x32x16xbf16> to vector<32x16xbf16>
    %c0_81 = arith.constant 0 : index
    %c17_82 = arith.constant 17 : index
    %97 = vector.load %arg9[%c0_81, %c17_82] : memref<16x222xf32, #tpu.memory_space<vmem>>, vector<16x188xf32>
    %98 = arith.truncf %97 : vector<16x188xf32> to vector<16x188xbf16>
    %cst_83 = arith.constant dense<0.000000e+00> : vector<32x188xf32>
    %99 = tpu.matmul %96, %98, %cst_83 {dimension_numbers = #tpu.dot_dimension_numbers<[1], [0], [0], [1], [0, 0, 1, 1], [], []>} : vector<32x16xbf16>, vector<16x188xbf16>, vector<32x188xf32> -> vector<32x188xf32>
    %100 = arith.addf %94, %99 : vector<32x188xf32>
    %c5_84 = arith.constant 5 : index
    %c0_85 = arith.constant 0 : index
    %c0_86 = arith.constant 0 : index
    %101 = vector.load %arg4[%c5_84, %c0_85, %c0_86] : memref<9x32x16xbf16, #tpu.memory_space<vmem>>, vector<1x32x16xbf16>
    %102 = vector.shape_cast %101 : vector<1x32x16xbf16> to vector<32x16xbf16>
    %c0_87 = arith.constant 0 : index
    %c18_88 = arith.constant 18 : index
    %103 = vector.load %arg9[%c0_87, %c18_88] : memref<16x222xf32, #tpu.memory_space<vmem>>, vector<16x188xf32>
    %104 = arith.truncf %103 : vector<16x188xf32> to vector<16x188xbf16>
    %cst_89 = arith.constant dense<0.000000e+00> : vector<32x188xf32>
    %105 = tpu.matmul %102, %104, %cst_89 {dimension_numbers = #tpu.dot_dimension_numbers<[1], [0], [0], [1], [0, 0, 1, 1], [], []>} : vector<32x16xbf16>, vector<16x188xbf16>, vector<32x188xf32> -> vector<32x188xf32>
    %106 = arith.addf %100, %105 : vector<32x188xf32>
    %c6_90 = arith.constant 6 : index
    %c0_91 = arith.constant 0 : index
    %c0_92 = arith.constant 0 : index
    %107 = vector.load %arg4[%c6_90, %c0_91, %c0_92] : memref<9x32x16xbf16, #tpu.memory_space<vmem>>, vector<1x32x16xbf16>
    %108 = vector.shape_cast %107 : vector<1x32x16xbf16> to vector<32x16xbf16>
    %c0_93 = arith.constant 0 : index
    %c32_94 = arith.constant 32 : index
    %109 = vector.load %arg9[%c0_93, %c32_94] : memref<16x222xf32, #tpu.memory_space<vmem>>, vector<16x188xf32>
    %110 = arith.truncf %109 : vector<16x188xf32> to vector<16x188xbf16>
    %cst_95 = arith.constant dense<0.000000e+00> : vector<32x188xf32>
    %111 = tpu.matmul %108, %110, %cst_95 {dimension_numbers = #tpu.dot_dimension_numbers<[1], [0], [0], [1], [0, 0, 1, 1], [], []>} : vector<32x16xbf16>, vector<16x188xbf16>, vector<32x188xf32> -> vector<32x188xf32>
    %112 = arith.addf %106, %111 : vector<32x188xf32>
    %c7_96 = arith.constant 7 : index
    %c0_97 = arith.constant 0 : index
    %c0_98 = arith.constant 0 : index
    %113 = vector.load %arg4[%c7_96, %c0_97, %c0_98] : memref<9x32x16xbf16, #tpu.memory_space<vmem>>, vector<1x32x16xbf16>
    %114 = vector.shape_cast %113 : vector<1x32x16xbf16> to vector<32x16xbf16>
    %c0_99 = arith.constant 0 : index
    %c33_100 = arith.constant 33 : index
    %115 = vector.load %arg9[%c0_99, %c33_100] : memref<16x222xf32, #tpu.memory_space<vmem>>, vector<16x188xf32>
    %116 = arith.truncf %115 : vector<16x188xf32> to vector<16x188xbf16>
    %cst_101 = arith.constant dense<0.000000e+00> : vector<32x188xf32>
    %117 = tpu.matmul %114, %116, %cst_101 {dimension_numbers = #tpu.dot_dimension_numbers<[1], [0], [0], [1], [0, 0, 1, 1], [], []>} : vector<32x16xbf16>, vector<16x188xbf16>, vector<32x188xf32> -> vector<32x188xf32>
    %118 = arith.addf %112, %117 : vector<32x188xf32>
    %c8_102 = arith.constant 8 : index
    %c0_103 = arith.constant 0 : index
    %c0_104 = arith.constant 0 : index
    %119 = vector.load %arg4[%c8_102, %c0_103, %c0_104] : memref<9x32x16xbf16, #tpu.memory_space<vmem>>, vector<1x32x16xbf16>
    %120 = vector.shape_cast %119 : vector<1x32x16xbf16> to vector<32x16xbf16>
    %c0_105 = arith.constant 0 : index
    %c34_106 = arith.constant 34 : index
    %121 = vector.load %arg9[%c0_105, %c34_106] : memref<16x222xf32, #tpu.memory_space<vmem>>, vector<16x188xf32>
    %122 = arith.truncf %121 : vector<16x188xf32> to vector<16x188xbf16>
    %cst_107 = arith.constant dense<0.000000e+00> : vector<32x188xf32>
    %123 = tpu.matmul %120, %122, %cst_107 {dimension_numbers = #tpu.dot_dimension_numbers<[1], [0], [0], [1], [0, 0, 1, 1], [], []>} : vector<32x16xbf16>, vector<16x188xbf16>, vector<32x188xf32> -> vector<32x188xf32>
    %124 = arith.addf %118, %123 : vector<32x188xf32>
    %c0_108 = arith.constant 0 : index
    %c0_109 = arith.constant 0 : index
    %125 = vector.load %arg5[%c0_108, %c0_109] : memref<32x1xf32, #tpu.memory_space<vmem>>, vector<32x1xf32>
    %126 = vector.broadcast %125 : vector<32x1xf32> to vector<32x188xf32>
    %127 = arith.addf %124, %126 : vector<32x188xf32>
    %cst_110 = arith.constant 0.000000e+00 : f32
    %128 = vector.broadcast %cst_110 : f32 to vector<32x188xf32>
    %129 = arith.maximumf %127, %128 : vector<32x188xf32>
    %c0_111 = arith.constant 0 : index
    %c0_112 = arith.constant 0 : index
    %130 = vector.load %arg10[%c0_111, %c0_112] : memref<32x188xf32, #tpu.memory_space<vmem>>, vector<32x188xf32>
    tpu.vector_store %arg10[%c0_111, %c0_112], %129 {strides = array<i32>} : memref<32x188xf32, #tpu.memory_space<vmem>>, vector<32x188xf32>,
    %cst_113 = arith.constant 0.000000e+00 : f32
    %131 = vector.broadcast %cst_113 : f32 to vector<64x154xf32>
    %c0_114 = arith.constant 0 : index
    %c0_115 = arith.constant 0 : index
    %c0_116 = arith.constant 0 : index
    %132 = vector.load %arg6[%c0_114, %c0_115, %c0_116] : memref<9x64x32xbf16, #tpu.memory_space<vmem>>, vector<1x64x32xbf16>
    %133 = vector.shape_cast %132 : vector<1x64x32xbf16> to vector<64x32xbf16>
    %c0_117 = arith.constant 0 : index
    %c0_118 = arith.constant 0 : index
    %134 = vector.load %arg10[%c0_117, %c0_118] : memref<32x188xf32, #tpu.memory_space<vmem>>, vector<32x154xf32>
    %135 = arith.truncf %134 : vector<32x154xf32> to vector<32x154xbf16>
    %cst_119 = arith.constant dense<0.000000e+00> : vector<64x154xf32>
    %136 = tpu.matmul %133, %135, %cst_119 {dimension_numbers = #tpu.dot_dimension_numbers<[1], [0], [0], [1], [0, 0, 1, 1], [], []>} : vector<64x32xbf16>, vector<32x154xbf16>, vector<64x154xf32> -> vector<64x154xf32>
    %137 = arith.addf %131, %136 : vector<64x154xf32>
    %c1_120 = arith.constant 1 : index
    %c0_121 = arith.constant 0 : index
    %c0_122 = arith.constant 0 : index
    %138 = vector.load %arg6[%c1_120, %c0_121, %c0_122] : memref<9x64x32xbf16, #tpu.memory_space<vmem>>, vector<1x64x32xbf16>
    %139 = vector.shape_cast %138 : vector<1x64x32xbf16> to vector<64x32xbf16>
    %c0_123 = arith.constant 0 : index
    %c1_124 = arith.constant 1 : index
    %140 = vector.load %arg10[%c0_123, %c1_124] : memref<32x188xf32, #tpu.memory_space<vmem>>, vector<32x154xf32>
    %141 = arith.truncf %140 : vector<32x154xf32> to vector<32x154xbf16>
    %cst_125 = arith.constant dense<0.000000e+00> : vector<64x154xf32>
    %142 = tpu.matmul %139, %141, %cst_125 {dimension_numbers = #tpu.dot_dimension_numbers<[1], [0], [0], [1], [0, 0, 1, 1], [], []>} : vector<64x32xbf16>, vector<32x154xbf16>, vector<64x154xf32> -> vector<64x154xf32>
    %143 = arith.addf %137, %142 : vector<64x154xf32>
    %c2_126 = arith.constant 2 : index
    %c0_127 = arith.constant 0 : index
    %c0_128 = arith.constant 0 : index
    %144 = vector.load %arg6[%c2_126, %c0_127, %c0_128] : memref<9x64x32xbf16, #tpu.memory_space<vmem>>, vector<1x64x32xbf16>
    %145 = vector.shape_cast %144 : vector<1x64x32xbf16> to vector<64x32xbf16>
    %c0_129 = arith.constant 0 : index
    %c2_130 = arith.constant 2 : index
    %146 = vector.load %arg10[%c0_129, %c2_130] : memref<32x188xf32, #tpu.memory_space<vmem>>, vector<32x154xf32>
    %147 = arith.truncf %146 : vector<32x154xf32> to vector<32x154xbf16>
    %cst_131 = arith.constant dense<0.000000e+00> : vector<64x154xf32>
    %148 = tpu.matmul %145, %147, %cst_131 {dimension_numbers = #tpu.dot_dimension_numbers<[1], [0], [0], [1], [0, 0, 1, 1], [], []>} : vector<64x32xbf16>, vector<32x154xbf16>, vector<64x154xf32> -> vector<64x154xf32>
    %149 = arith.addf %143, %148 : vector<64x154xf32>
    %c3_132 = arith.constant 3 : index
    %c0_133 = arith.constant 0 : index
    %c0_134 = arith.constant 0 : index
    %150 = vector.load %arg6[%c3_132, %c0_133, %c0_134] : memref<9x64x32xbf16, #tpu.memory_space<vmem>>, vector<1x64x32xbf16>
    %151 = vector.shape_cast %150 : vector<1x64x32xbf16> to vector<64x32xbf16>
    %c0_135 = arith.constant 0 : index
    %c16_136 = arith.constant 16 : index
    %152 = vector.load %arg10[%c0_135, %c16_136] : memref<32x188xf32, #tpu.memory_space<vmem>>, vector<32x154xf32>
    %153 = arith.truncf %152 : vector<32x154xf32> to vector<32x154xbf16>
    %cst_137 = arith.constant dense<0.000000e+00> : vector<64x154xf32>
    %154 = tpu.matmul %151, %153, %cst_137 {dimension_numbers = #tpu.dot_dimension_numbers<[1], [0], [0], [1], [0, 0, 1, 1], [], []>} : vector<64x32xbf16>, vector<32x154xbf16>, vector<64x154xf32> -> vector<64x154xf32>
    %155 = arith.addf %149, %154 : vector<64x154xf32>
    %c4_138 = arith.constant 4 : index
    %c0_139 = arith.constant 0 : index
    %c0_140 = arith.constant 0 : index
    %156 = vector.load %arg6[%c4_138, %c0_139, %c0_140] : memref<9x64x32xbf16, #tpu.memory_space<vmem>>, vector<1x64x32xbf16>
    %157 = vector.shape_cast %156 : vector<1x64x32xbf16> to vector<64x32xbf16>
    %c0_141 = arith.constant 0 : index
    %c17_142 = arith.constant 17 : index
    %158 = vector.load %arg10[%c0_141, %c17_142] : memref<32x188xf32, #tpu.memory_space<vmem>>, vector<32x154xf32>
    %159 = arith.truncf %158 : vector<32x154xf32> to vector<32x154xbf16>
    %cst_143 = arith.constant dense<0.000000e+00> : vector<64x154xf32>
    %160 = tpu.matmul %157, %159, %cst_143 {dimension_numbers = #tpu.dot_dimension_numbers<[1], [0], [0], [1], [0, 0, 1, 1], [], []>} : vector<64x32xbf16>, vector<32x154xbf16>, vector<64x154xf32> -> vector<64x154xf32>
    %161 = arith.addf %155, %160 : vector<64x154xf32>
    %c5_144 = arith.constant 5 : index
    %c0_145 = arith.constant 0 : index
    %c0_146 = arith.constant 0 : index
    %162 = vector.load %arg6[%c5_144, %c0_145, %c0_146] : memref<9x64x32xbf16, #tpu.memory_space<vmem>>, vector<1x64x32xbf16>
    %163 = vector.shape_cast %162 : vector<1x64x32xbf16> to vector<64x32xbf16>
    %c0_147 = arith.constant 0 : index
    %c18_148 = arith.constant 18 : index
    %164 = vector.load %arg10[%c0_147, %c18_148] : memref<32x188xf32, #tpu.memory_space<vmem>>, vector<32x154xf32>
    %165 = arith.truncf %164 : vector<32x154xf32> to vector<32x154xbf16>
    %cst_149 = arith.constant dense<0.000000e+00> : vector<64x154xf32>
    %166 = tpu.matmul %163, %165, %cst_149 {dimension_numbers = #tpu.dot_dimension_numbers<[1], [0], [0], [1], [0, 0, 1, 1], [], []>} : vector<64x32xbf16>, vector<32x154xbf16>, vector<64x154xf32> -> vector<64x154xf32>
    %167 = arith.addf %161, %166 : vector<64x154xf32>
    %c6_150 = arith.constant 6 : index
    %c0_151 = arith.constant 0 : index
    %c0_152 = arith.constant 0 : index
    %168 = vector.load %arg6[%c6_150, %c0_151, %c0_152] : memref<9x64x32xbf16, #tpu.memory_space<vmem>>, vector<1x64x32xbf16>
    %169 = vector.shape_cast %168 : vector<1x64x32xbf16> to vector<64x32xbf16>
    %c0_153 = arith.constant 0 : index
    %c32_154 = arith.constant 32 : index
    %170 = vector.load %arg10[%c0_153, %c32_154] : memref<32x188xf32, #tpu.memory_space<vmem>>, vector<32x154xf32>
    %171 = arith.truncf %170 : vector<32x154xf32> to vector<32x154xbf16>
    %cst_155 = arith.constant dense<0.000000e+00> : vector<64x154xf32>
    %172 = tpu.matmul %169, %171, %cst_155 {dimension_numbers = #tpu.dot_dimension_numbers<[1], [0], [0], [1], [0, 0, 1, 1], [], []>} : vector<64x32xbf16>, vector<32x154xbf16>, vector<64x154xf32> -> vector<64x154xf32>
    %173 = arith.addf %167, %172 : vector<64x154xf32>
    %c7_156 = arith.constant 7 : index
    %c0_157 = arith.constant 0 : index
    %c0_158 = arith.constant 0 : index
    %174 = vector.load %arg6[%c7_156, %c0_157, %c0_158] : memref<9x64x32xbf16, #tpu.memory_space<vmem>>, vector<1x64x32xbf16>
    %175 = vector.shape_cast %174 : vector<1x64x32xbf16> to vector<64x32xbf16>
    %c0_159 = arith.constant 0 : index
    %c33_160 = arith.constant 33 : index
    %176 = vector.load %arg10[%c0_159, %c33_160] : memref<32x188xf32, #tpu.memory_space<vmem>>, vector<32x154xf32>
    %177 = arith.truncf %176 : vector<32x154xf32> to vector<32x154xbf16>
    %cst_161 = arith.constant dense<0.000000e+00> : vector<64x154xf32>
    %178 = tpu.matmul %175, %177, %cst_161 {dimension_numbers = #tpu.dot_dimension_numbers<[1], [0], [0], [1], [0, 0, 1, 1], [], []>} : vector<64x32xbf16>, vector<32x154xbf16>, vector<64x154xf32> -> vector<64x154xf32>
    %179 = arith.addf %173, %178 : vector<64x154xf32>
    %c8_162 = arith.constant 8 : index
    %c0_163 = arith.constant 0 : index
    %c0_164 = arith.constant 0 : index
    %180 = vector.load %arg6[%c8_162, %c0_163, %c0_164] : memref<9x64x32xbf16, #tpu.memory_space<vmem>>, vector<1x64x32xbf16>
    %181 = vector.shape_cast %180 : vector<1x64x32xbf16> to vector<64x32xbf16>
    %c0_165 = arith.constant 0 : index
    %c34_166 = arith.constant 34 : index
    %182 = vector.load %arg10[%c0_165, %c34_166] : memref<32x188xf32, #tpu.memory_space<vmem>>, vector<32x154xf32>
    %183 = arith.truncf %182 : vector<32x154xf32> to vector<32x154xbf16>
    %cst_167 = arith.constant dense<0.000000e+00> : vector<64x154xf32>
    %184 = tpu.matmul %181, %183, %cst_167 {dimension_numbers = #tpu.dot_dimension_numbers<[1], [0], [0], [1], [0, 0, 1, 1], [], []>} : vector<64x32xbf16>, vector<32x154xbf16>, vector<64x154xf32> -> vector<64x154xf32>
    %185 = arith.addf %179, %184 : vector<64x154xf32>
    %c0_168 = arith.constant 0 : index
    %c0_169 = arith.constant 0 : index
    %186 = vector.load %arg7[%c0_168, %c0_169] : memref<64x1xf32, #tpu.memory_space<vmem>>, vector<64x1xf32>
    %187 = vector.broadcast %186 : vector<64x1xf32> to vector<64x154xf32>
    %188 = arith.addf %185, %187 : vector<64x154xf32>
    %cst_170 = arith.constant 0.000000e+00 : f32
    %189 = vector.broadcast %cst_170 : f32 to vector<64x154xf32>
    %190 = arith.maximumf %188, %189 : vector<64x154xf32>
    %c0_171 = arith.constant 0 : index
    %c0_172 = arith.constant 0 : index
    %191 = vector.load %arg11[%c0_171, %c0_172] : memref<64x154xf32, #tpu.memory_space<vmem>>, vector<64x154xf32>
    tpu.vector_store %arg11[%c0_171, %c0_172], %190 {strides = array<i32>} : memref<64x154xf32, #tpu.memory_space<vmem>>, vector<64x154xf32>,
    %c0_173 = arith.constant 0 : index
    %c0_174 = arith.constant 0 : index
    %192 = vector.load %arg11[%c0_173, %c0_174] : memref<64x154xf32, #tpu.memory_space<vmem>>, vector<64x10xf32>
    %c0_175 = arith.constant 0 : index
    %c0_176 = arith.constant 0 : index
    %c0_177 = arith.constant 0 : index
    %193 = vector.load %arg8[%c0_175, %c0_176, %c0_177] : memref<1x64x100xf32, #tpu.memory_space<vmem>>, vector<1x64x10xf32>
    %194 = vector.shape_cast %193 : vector<1x64x10xf32> to vector<64x10xf32>
    %195 = vector.shape_cast %192 : vector<64x10xf32> to vector<1x64x10xf32>
    tpu.vector_store %arg8[%c0_175, %c0_176, %c0_177], %195 {strides = array<i32>} : memref<1x64x100xf32, #tpu.memory_space<vmem>>, vector<1x64x10xf32>,
    %c0_178 = arith.constant 0 : index
    %c16_179 = arith.constant 16 : index
    %196 = vector.load %arg11[%c0_178, %c16_179] : memref<64x154xf32, #tpu.memory_space<vmem>>, vector<64x10xf32>
    %c0_180 = arith.constant 0 : index
    %c0_181 = arith.constant 0 : index
    %c10 = arith.constant 10 : index
    %197 = vector.load %arg8[%c0_180, %c0_181, %c10] : memref<1x64x100xf32, #tpu.memory_space<vmem>>, vector<1x64x10xf32>
    %198 = vector.shape_cast %197 : vector<1x64x10xf32> to vector<64x10xf32>
    %199 = vector.shape_cast %196 : vector<64x10xf32> to vector<1x64x10xf32>
    tpu.vector_store %arg8[%c0_180, %c0_181, %c10], %199 {strides = array<i32>} : memref<1x64x100xf32, #tpu.memory_space<vmem>>, vector<1x64x10xf32>,
    %c0_182 = arith.constant 0 : index
    %c32_183 = arith.constant 32 : index
    %200 = vector.load %arg11[%c0_182, %c32_183] : memref<64x154xf32, #tpu.memory_space<vmem>>, vector<64x10xf32>
    %c0_184 = arith.constant 0 : index
    %c0_185 = arith.constant 0 : index
    %c20 = arith.constant 20 : index
    %201 = vector.load %arg8[%c0_184, %c0_185, %c20] : memref<1x64x100xf32, #tpu.memory_space<vmem>>, vector<1x64x10xf32>
    %202 = vector.shape_cast %201 : vector<1x64x10xf32> to vector<64x10xf32>
    %203 = vector.shape_cast %200 : vector<64x10xf32> to vector<1x64x10xf32>
    tpu.vector_store %arg8[%c0_184, %c0_185, %c20], %203 {strides = array<i32>} : memref<1x64x100xf32, #tpu.memory_space<vmem>>, vector<1x64x10xf32>,
    %c0_186 = arith.constant 0 : index
    %c48 = arith.constant 48 : index
    %204 = vector.load %arg11[%c0_186, %c48] : memref<64x154xf32, #tpu.memory_space<vmem>>, vector<64x10xf32>
    %c0_187 = arith.constant 0 : index
    %c0_188 = arith.constant 0 : index
    %c30 = arith.constant 30 : index
    %205 = vector.load %arg8[%c0_187, %c0_188, %c30] : memref<1x64x100xf32, #tpu.memory_space<vmem>>, vector<1x64x10xf32>
    %206 = vector.shape_cast %205 : vector<1x64x10xf32> to vector<64x10xf32>
    %207 = vector.shape_cast %204 : vector<64x10xf32> to vector<1x64x10xf32>
    tpu.vector_store %arg8[%c0_187, %c0_188, %c30], %207 {strides = array<i32>} : memref<1x64x100xf32, #tpu.memory_space<vmem>>, vector<1x64x10xf32>,
    %c0_189 = arith.constant 0 : index
    %c64 = arith.constant 64 : index
    %208 = vector.load %arg11[%c0_189, %c64] : memref<64x154xf32, #tpu.memory_space<vmem>>, vector<64x10xf32>
    %c0_190 = arith.constant 0 : index
    %c0_191 = arith.constant 0 : index
    %c40 = arith.constant 40 : index
    %209 = vector.load %arg8[%c0_190, %c0_191, %c40] : memref<1x64x100xf32, #tpu.memory_space<vmem>>, vector<1x64x10xf32>
    %210 = vector.shape_cast %209 : vector<1x64x10xf32> to vector<64x10xf32>
    %211 = vector.shape_cast %208 : vector<64x10xf32> to vector<1x64x10xf32>
    tpu.vector_store %arg8[%c0_190, %c0_191, %c40], %211 {strides = array<i32>} : memref<1x64x100xf32, #tpu.memory_space<vmem>>, vector<1x64x10xf32>,
    %c0_192 = arith.constant 0 : index
    %c80 = arith.constant 80 : index
    %212 = vector.load %arg11[%c0_192, %c80] : memref<64x154xf32, #tpu.memory_space<vmem>>, vector<64x10xf32>
    %c0_193 = arith.constant 0 : index
    %c0_194 = arith.constant 0 : index
    %c50 = arith.constant 50 : index
    %213 = vector.load %arg8[%c0_193, %c0_194, %c50] : memref<1x64x100xf32, #tpu.memory_space<vmem>>, vector<1x64x10xf32>
    %214 = vector.shape_cast %213 : vector<1x64x10xf32> to vector<64x10xf32>
    %215 = vector.shape_cast %212 : vector<64x10xf32> to vector<1x64x10xf32>
    tpu.vector_store %arg8[%c0_193, %c0_194, %c50], %215 {strides = array<i32>} : memref<1x64x100xf32, #tpu.memory_space<vmem>>, vector<1x64x10xf32>,
    %c0_195 = arith.constant 0 : index
    %c96 = arith.constant 96 : index
    %216 = vector.load %arg11[%c0_195, %c96] : memref<64x154xf32, #tpu.memory_space<vmem>>, vector<64x10xf32>
    %c0_196 = arith.constant 0 : index
    %c0_197 = arith.constant 0 : index
    %c60 = arith.constant 60 : index
    %217 = vector.load %arg8[%c0_196, %c0_197, %c60] : memref<1x64x100xf32, #tpu.memory_space<vmem>>, vector<1x64x10xf32>
    %218 = vector.shape_cast %217 : vector<1x64x10xf32> to vector<64x10xf32>
    %219 = vector.shape_cast %216 : vector<64x10xf32> to vector<1x64x10xf32>
    tpu.vector_store %arg8[%c0_196, %c0_197, %c60], %219 {strides = array<i32>} : memref<1x64x100xf32, #tpu.memory_space<vmem>>, vector<1x64x10xf32>,
    %c0_198 = arith.constant 0 : index
    %c112 = arith.constant 112 : index
    %220 = vector.load %arg11[%c0_198, %c112] : memref<64x154xf32, #tpu.memory_space<vmem>>, vector<64x10xf32>
    %c0_199 = arith.constant 0 : index
    %c0_200 = arith.constant 0 : index
    %c70 = arith.constant 70 : index
    %221 = vector.load %arg8[%c0_199, %c0_200, %c70] : memref<1x64x100xf32, #tpu.memory_space<vmem>>, vector<1x64x10xf32>
    %222 = vector.shape_cast %221 : vector<1x64x10xf32> to vector<64x10xf32>
    %223 = vector.shape_cast %220 : vector<64x10xf32> to vector<1x64x10xf32>
    tpu.vector_store %arg8[%c0_199, %c0_200, %c70], %223 {strides = array<i32>} : memref<1x64x100xf32, #tpu.memory_space<vmem>>, vector<1x64x10xf32>,
    %c0_201 = arith.constant 0 : index
    %c128 = arith.constant 128 : index
    %224 = vector.load %arg11[%c0_201, %c128] : memref<64x154xf32, #tpu.memory_space<vmem>>, vector<64x10xf32>
    %c0_202 = arith.constant 0 : index
    %c0_203 = arith.constant 0 : index
    %c80_204 = arith.constant 80 : index
    %225 = vector.load %arg8[%c0_202, %c0_203, %c80_204] : memref<1x64x100xf32, #tpu.memory_space<vmem>>, vector<1x64x10xf32>
    %226 = vector.shape_cast %225 : vector<1x64x10xf32> to vector<64x10xf32>
    %227 = vector.shape_cast %224 : vector<64x10xf32> to vector<1x64x10xf32>
    tpu.vector_store %arg8[%c0_202, %c0_203, %c80_204], %227 {strides = array<i32>} : memref<1x64x100xf32, #tpu.memory_space<vmem>>, vector<1x64x10xf32>,
    %c0_205 = arith.constant 0 : index
    %c144 = arith.constant 144 : index
    %228 = vector.load %arg11[%c0_205, %c144] : memref<64x154xf32, #tpu.memory_space<vmem>>, vector<64x10xf32>
    %c0_206 = arith.constant 0 : index
    %c0_207 = arith.constant 0 : index
    %c90 = arith.constant 90 : index
    %229 = vector.load %arg8[%c0_206, %c0_207, %c90] : memref<1x64x100xf32, #tpu.memory_space<vmem>>, vector<1x64x10xf32>
    %230 = vector.shape_cast %229 : vector<1x64x10xf32> to vector<64x10xf32>
    %231 = vector.shape_cast %228 : vector<64x10xf32> to vector<1x64x10xf32>
    tpu.vector_store %arg8[%c0_206, %c0_207, %c90], %231 {strides = array<i32>} : memref<1x64x100xf32, #tpu.memory_space<vmem>>, vector<1x64x10xf32>,
    return
  }
  func.func @transform_0(%arg0: i32) -> (i32, i32, i32) {
    %c0_i32 = arith.constant 0 : i32
    %c0_i32_0 = arith.constant 0 : i32
    %c0_i32_1 = arith.constant 0 : i32
    return %arg0, %c0_i32, %c0_i32_0 : i32, i32, i32
  }
  func.func @transform_1(%arg0: i32) -> (i32, i32, i32) {
    %c0_i32 = arith.constant 0 : i32
    %c0_i32_0 = arith.constant 0 : i32
    %c0_i32_1 = arith.constant 0 : i32
    %c0_i32_2 = arith.constant 0 : i32
    return %c0_i32, %c0_i32_0, %c0_i32_1 : i32, i32, i32
  }
  func.func @transform_2(%arg0: i32) -> (i32, i32) {
    %c0_i32 = arith.constant 0 : i32
    %c0_i32_0 = arith.constant 0 : i32
    %c0_i32_1 = arith.constant 0 : i32
    return %c0_i32, %c0_i32_0 : i32, i32
  }
  func.func @transform_3(%arg0: i32) -> (i32, i32, i32) {
    %c0_i32 = arith.constant 0 : i32
    %c0_i32_0 = arith.constant 0 : i32
    %c0_i32_1 = arith.constant 0 : i32
    %c0_i32_2 = arith.constant 0 : i32
    return %c0_i32, %c0_i32_0, %c0_i32_1 : i32, i32, i32
  }
  func.func @transform_4(%arg0: i32) -> (i32, i32) {
    %c0_i32 = arith.constant 0 : i32
    %c0_i32_0 = arith.constant 0 : i32
    %c0_i32_1 = arith.constant 0 : i32
    return %c0_i32, %c0_i32_0 : i32, i32
  }
  func.func @transform_5(%arg0: i32) -> (i32, i32, i32) {
    %c0_i32 = arith.constant 0 : i32
    %c0_i32_0 = arith.constant 0 : i32
    %c0_i32_1 = arith.constant 0 : i32
    %c0_i32_2 = arith.constant 0 : i32
    return %c0_i32, %c0_i32_0, %c0_i32_1 : i32, i32, i32
  }
  func.func @transform_6(%arg0: i32) -> (i32, i32) {
    %c0_i32 = arith.constant 0 : i32
    %c0_i32_0 = arith.constant 0 : i32
    %c0_i32_1 = arith.constant 0 : i32
    return %c0_i32, %c0_i32_0 : i32, i32
  }
  func.func @transform_7(%arg0: i32) -> (i32, i32, i32) {
    %c0_i32 = arith.constant 0 : i32
    %c0_i32_0 = arith.constant 0 : i32
    %c0_i32_1 = arith.constant 0 : i32
    return %arg0, %c0_i32, %c0_i32_0 : i32, i32, i32
  }
}

module attributes {stable_mosaic.version = 11 : i64} {
  func.func @_fc_kernel(%arg0: i32, %arg1: memref<2x1280xf32, #tpu.memory_space<vmem>>, %arg2: memref<1280x128xbf16, #tpu.memory_space<vmem>>, %arg3: memref<1x128xf32, #tpu.memory_space<vmem>>, %arg4: memref<2x128xf32, #tpu.memory_space<vmem>>, %arg5: memref<2x128xf32, #tpu.memory_space<vmem>>) attributes {dimension_semantics = [#tpu.dimension_semantics<arbitrary>], iteration_bounds = array<i64: 5>, scalar_prefetch = 0 : i64, scratch_operands = 1 : i64, tpu.core_type = #tpu.core_type<tc>, window_params = [{transform_indices = @transform_0, window_bounds = array<i64: 2, 1280>}, {transform_indices = @transform_1, window_bounds = array<i64: 1280, 128>}, {pipeline_mode = #tpu.pipeline_mode<synchronous>, transform_indices = @transform_2, window_bounds = array<i64: 1, 128>}, {pipeline_mode = #tpu.pipeline_mode<synchronous>, transform_indices = @transform_3, window_bounds = array<i64: 2, 128>}]} {
    %c0_i32 = arith.constant 0 : i32
    %0 = arith.cmpi eq, %arg0, %c0_i32 : i32
    %1 = arith.extui %0 : i1 to i32
    %c0_i32_0 = arith.constant 0 : i32
    %2 = arith.cmpi ne, %1, %c0_i32_0 : i32
    scf.if %2 {
      %cst_9 = arith.constant 0.000000e+00 : f32
      %13 = vector.broadcast %cst_9 : f32 to vector<2x128xf32>
      %c0_10 = arith.constant 0 : index
      %c0_11 = arith.constant 0 : index
      %14 = vector.load %arg5[%c0_10, %c0_11] : memref<2x128xf32, #tpu.memory_space<vmem>>, vector<2x128xf32>
      tpu.vector_store %arg5[%c0_10, %c0_11], %13 {strides = array<i32>} : memref<2x128xf32, #tpu.memory_space<vmem>>, vector<2x128xf32>,
    } else {
    }
    %c0 = arith.constant 0 : index
    %c0_1 = arith.constant 0 : index
    %3 = vector.load %arg5[%c0, %c0_1] : memref<2x128xf32, #tpu.memory_space<vmem>>, vector<2x128xf32>
    %c0_2 = arith.constant 0 : index
    %c0_3 = arith.constant 0 : index
    %4 = vector.load %arg1[%c0_2, %c0_3] : memref<2x1280xf32, #tpu.memory_space<vmem>>, vector<2x1280xf32>
    %5 = arith.truncf %4 : vector<2x1280xf32> to vector<2x1280xbf16>
    %c0_4 = arith.constant 0 : index
    %c0_5 = arith.constant 0 : index
    %6 = vector.load %arg2[%c0_4, %c0_5] : memref<1280x128xbf16, #tpu.memory_space<vmem>>, vector<1280x128xbf16>
    %cst = arith.constant dense<0.000000e+00> : vector<2x128xf32>
    %7 = tpu.matmul %5, %6, %cst {dimension_numbers = #tpu.dot_dimension_numbers<[1], [0], [0], [1], [0, 0, 1, 1], [], []>} : vector<2x1280xbf16>, vector<1280x128xbf16>, vector<2x128xf32> -> vector<2x128xf32>
    %8 = arith.addf %3, %7 : vector<2x128xf32>
    %c0_6 = arith.constant 0 : index
    %c0_7 = arith.constant 0 : index
    %9 = vector.load %arg5[%c0_6, %c0_7] : memref<2x128xf32, #tpu.memory_space<vmem>>, vector<2x128xf32>
    tpu.vector_store %arg5[%c0_6, %c0_7], %8 {strides = array<i32>} : memref<2x128xf32, #tpu.memory_space<vmem>>, vector<2x128xf32>,
    %c4_i32 = arith.constant 4 : i32
    %10 = arith.cmpi eq, %arg0, %c4_i32 : i32
    %11 = arith.extui %10 : i1 to i32
    %c0_i32_8 = arith.constant 0 : i32
    %12 = arith.cmpi ne, %11, %c0_i32_8 : i32
    scf.if %12 {
      %c0_9 = arith.constant 0 : index
      %c0_10 = arith.constant 0 : index
      %13 = vector.load %arg5[%c0_9, %c0_10] : memref<2x128xf32, #tpu.memory_space<vmem>>, vector<2x128xf32>
      %c0_11 = arith.constant 0 : index
      %c0_12 = arith.constant 0 : index
      %14 = vector.load %arg3[%c0_11, %c0_12] : memref<1x128xf32, #tpu.memory_space<vmem>>, vector<1x128xf32>
      %15 = vector.broadcast %14 : vector<1x128xf32> to vector<2x128xf32>
      %16 = arith.addf %13, %15 : vector<2x128xf32>
      %cst_13 = arith.constant 0.000000e+00 : f32
      %17 = vector.broadcast %cst_13 : f32 to vector<2x128xf32>
      %18 = arith.maximumf %16, %17 : vector<2x128xf32>
      %c0_14 = arith.constant 0 : index
      %c0_15 = arith.constant 0 : index
      %19 = vector.load %arg4[%c0_14, %c0_15] : memref<2x128xf32, #tpu.memory_space<vmem>>, vector<2x128xf32>
      tpu.vector_store %arg4[%c0_14, %c0_15], %18 {strides = array<i32>} : memref<2x128xf32, #tpu.memory_space<vmem>>, vector<2x128xf32>,
    } else {
    }
    return
  }
  func.func @transform_0(%arg0: i32) -> (i32, i32) {
    %c0_i32 = arith.constant 0 : i32
    %c0_i32_0 = arith.constant 0 : i32
    return %c0_i32, %arg0 : i32, i32
  }
  func.func @transform_1(%arg0: i32) -> (i32, i32) {
    %c0_i32 = arith.constant 0 : i32
    %c0_i32_0 = arith.constant 0 : i32
    return %arg0, %c0_i32 : i32, i32
  }
  func.func @transform_2(%arg0: i32) -> (i32, i32) {
    %c0_i32 = arith.constant 0 : i32
    %c0_i32_0 = arith.constant 0 : i32
    %c0_i32_1 = arith.constant 0 : i32
    return %c0_i32, %c0_i32_0 : i32, i32
  }
  func.func @transform_3(%arg0: i32) -> (i32, i32) {
    %c0_i32 = arith.constant 0 : i32
    %c0_i32_0 = arith.constant 0 : i32
    %c0_i32_1 = arith.constant 0 : i32
    return %c0_i32, %c0_i32_0 : i32, i32
  }
}

</mosaic_0001>

<llo_original>
// kernel: conv_network_forward.3
$region0: #{conv_network_forward.3}
  #allocation0 [shape = 'u32[]', space=smem, size = 0x4, offset = 0x4, fixed_abs, tag = 'smem constant byte address 0x4 - core index']
  #allocation1 [shape = 'u32[144,128]{1,0:T(1,128)}', space=vmem, size = 0x12000, scoped, tag = 'internal scratch']
  #allocation2 [shape = 'f32[2,128]{1,0:T(2,128)}', space=vmem, size = 0x400, scoped, tag = 'scratch operand']
  %s0 = inlined_call_operand.vmem [shape: f32[2,6400], index: 0, kind: input, shape index: {}]
  %s1 = inlined_call_operand.hbm [shape: bf16[6400,128], index: 1, kind: input, shape index: {}]
  %s2 = inlined_call_operand.hbm [shape: f32[1,128], index: 2, kind: input, shape index: {}]
  %s3 = inlined_call_operand.hbm [shape: f32[2,128], index: 3, kind: output, shape index: {}]
  %s4 = sld [smem:[#allocation0]]
  $region61: #{conv_network_forward.3} parent=0
    _
  %s6 = ssub.s32 1, %s4
  %s7 = scalar_select 0, %s6, %s4
  $region1: #{conv_network_forward.3} parent=0
    #allocation3 [shape = 'u8[655360]{0}', space=vmem, size = 0xa0000, scoped, tag = 'input window, operand 1']
    #allocation4 [shape = 's32[2]{0}', space=sflag, size = 0x8, scoped, tag = 'scoped memory for conv_network_forward.3']
    #allocation5 [shape = 's32[2]{0}', space=sflag, size = 0x8, scoped, tag = 'scoped memory for conv_network_forward.3']
    #allocation6 [shape = 'u8[512]{0}', space=vmem, size = 0x400, scoped, tag = 'input window, operand 2, single buffered']
    #allocation7 [shape = 's32[1]{0}', space=sflag, size = 0x4, scoped, tag = 'scoped memory for conv_network_forward.3']
    #allocation8 [shape = 'u8[1024]{0}', space=vmem, size = 0x400, scoped, tag = 'output window, operand 0, single buffered']
    %8 = vsyncpa [#allocation4], 0
    %s9 = scalar_lea.sflag [#allocation4], 1
    %10 = vsyncpa %s9, 0
    %11 = vsyncpa [#allocation7], 0
    %12 = vsyncpa [#allocation5], 0
    loop: start=0, step=1, limit=7
    $region2: #{conv_network_forward.3} parent=1 // loop_pre_header
      _
    $region3: #{conv_network_forward.3} parent=1 // loop_header
      %s14 = sphi 0, %s18
      %p15 = scmp.ge.s32.totalorder %s14, 7
      %s24 = sphi 0, %s26
      %s27 = sphi 0, %s24
      %s28 = sphi 0, %s27
      %s44 = sphi 0, %s28
      %s50 = sphi 0, %s52
      %s53 = sphi 0, %s50
      %s54 = sphi 0, %s53
      %s70 = sphi 0, %s54
      %s74 = sphi 0, %s74
      %s76 = sphi 0, %s74
      %s77 = sphi 0, %s76
      %s91 = sphi 0, %s77
      %s95 = sphi 0, %s95
      %s97 = sphi 0, %s95
      %s98 = sphi 0, %s97
      %s112 = sphi 0, %s98
    $region4: #{conv_network_forward.3} parent=1 // loop_header_branch
      %17 = sbr.rel (%p15) target = $region8
    $region5: #{conv_network_forward.3} parent=1 // loop_body
      %s19 = ssub.s32 %s14, 1
      %s20 = ssub.s32 %s14, 2
      %s21 = sadd.s32 %s14, 1
      %s22 = ssub.s32 %s14, %s21
      %p23 = scmp.eq.s32.totalorder %s22, 0
      %s25 = sadd.s32 %s24, 1
      %s26 = scalar_select %p23, %s24, %s25
      %p29 = pneg %p23
      %p30 = scmp.eq.s32.totalorder %s14, 4
      %p31 = por %p29, %p30
      %p32 = scmp.ne.s32.totalorder %s24, %s27
      %p33 = scmp.eq.s32.totalorder %s14, 0
      %p34 = por %p32, %p33
      %p35 = scmp.ne.s32.totalorder %s24, %s27
      %p36 = scmp.eq.s32.totalorder %s19, 4
      %p37 = por %p35, %p36
      %p38 = scmp.ne.s32.totalorder %s27, %s28
      %p39 = scmp.eq.s32.totalorder %s19, 0
      %p40 = por %p38, %p39
      %p41 = scmp.ne.s32.totalorder %s27, %s28
      %p42 = scmp.eq.s32.totalorder %s20, 4
      %p43 = por %p41, %p42
      %p45 = scmp.ne.s32.totalorder %s28, %s44
      %p46 = scmp.eq.s32.totalorder %s20, 0
      %p47 = por %p45, %p46
      %s48 = ssub.s32 %s14, %s21
      %p49 = scmp.eq.s32.totalorder %s48, 0
      %s51 = sadd.s32 %s50, 1
      %s52 = scalar_select %p49, %s50, %s51
      %p55 = pneg %p49
      %p56 = scmp.eq.s32.totalorder %s14, 4
      %p57 = por %p55, %p56
      %p58 = scmp.ne.s32.totalorder %s50, %s53
      %p59 = scmp.eq.s32.totalorder %s14, 0
      %p60 = por %p58, %p59
      %p61 = scmp.ne.s32.totalorder %s50, %s53
      %p62 = scmp.eq.s32.totalorder %s19, 4
      %p63 = por %p61, %p62
      %p64 = scmp.ne.s32.totalorder %s53, %s54
      %p65 = scmp.eq.s32.totalorder %s19, 0
      %p66 = por %p64, %p65
      %p67 = scmp.ne.s32.totalorder %s53, %s54
      %p68 = scmp.eq.s32.totalorder %s20, 4
      %p69 = por %p67, %p68
      %p71 = scmp.ne.s32.totalorder %s54, %s70
      %p72 = scmp.eq.s32.totalorder %s20, 0
      %p73 = por %p71, %p72
      %s75 = sadd.s32 %s74, 1
      %p78 = scmp.eq.s32.totalorder %s14, 4
      %p79 = scmp.ne.s32.totalorder %s74, %s76
      %p80 = scmp.eq.s32.totalorder %s14, 0
      %p81 = por %p79, %p80
      %p82 = scmp.ne.s32.totalorder %s74, %s76
      %p83 = scmp.eq.s32.totalorder %s19, 4
      %p84 = por %p82, %p83
      %p85 = scmp.ne.s32.totalorder %s76, %s77
      %p86 = scmp.eq.s32.totalorder %s19, 0
      %p87 = por %p85, %p86
      %p88 = scmp.ne.s32.totalorder %s76, %s77
      %p89 = scmp.eq.s32.totalorder %s20, 4
      %p90 = por %p88, %p89
      %p92 = scmp.ne.s32.totalorder %s77, %s91
      %p93 = scmp.eq.s32.totalorder %s20, 0
      %p94 = por %p92, %p93
      %s96 = sadd.s32 %s95, 1
      %p99 = scmp.eq.s32.totalorder %s14, 4
      %p100 = scmp.ne.s32.totalorder %s95, %s97
      %p101 = scmp.eq.s32.totalorder %s14, 0
      %p102 = por %p100, %p101
      %p103 = scmp.ne.s32.totalorder %s95, %s97
      %p104 = scmp.eq.s32.totalorder %s19, 4
      %p105 = por %p103, %p104
      %p106 = scmp.ne.s32.totalorder %s97, %s98
      %p107 = scmp.eq.s32.totalorder %s19, 0
      %p108 = por %p106, %p107
      %p109 = scmp.ne.s32.totalorder %s97, %s98
      %p110 = scmp.eq.s32.totalorder %s20, 4
      %p111 = por %p109, %p110
      %p113 = scmp.ne.s32.totalorder %s98, %s112
      %p114 = scmp.eq.s32.totalorder %s20, 0
      %p115 = por %p113, %p114
      %p116 = scmp.le.s32.totalorder 1, %s14
      %p117 = scmp.lt.s32.totalorder %s14, 6
      %p118 = pnand %p116, %p117
      %p119 = pneg %p118
      // Predicated region
      $region9: #{conv_network_forward.3} parent=5 // pred_check
        _
      $region10: #{conv_network_forward.3} parent=5 // pred_check_branch
        %121 = sbr.rel (%p118) target = $region12
      $region11: #{conv_network_forward.3} parent=5 // pred_region
        %s122 = ssub.s32 %s14, 1
        // Predicated region
        $region13: #{conv_network_forward.3} parent=11 // pred_check
          %p123 = pneg %p87
        $region14: #{conv_network_forward.3} parent=11 // pred_check_branch
          %125 = sbr.rel (%p123) target = $region16
        $region15: #{conv_network_forward.3} parent=11 // pred_region
          %s127 = ssub.s32 16, 16
          %128 = vsyncadd [#allocation7], %s127
          %s130 = sshll.u32 [#allocation6], 4
          %s131 = int_to_ptr.vmem [resolvable:$true] %s130
          %133 = dma.hbm_to_vmem [thread:$0]  %s2, 16, %s131, [#allocation7]
        $region16: #{conv_network_forward.3} parent=11 // pred_fallthru
          _
      $region12: #{conv_network_forward.3} parent=5 // pred_fallthru
        _
      %p134 = scmp.lt.s32.totalorder %s14, 5
      // Predicated region
      $region17: #{conv_network_forward.3} parent=5 // pred_check
        %p135 = pneg %p134
      $region18: #{conv_network_forward.3} parent=5 // pred_check_branch
        %137 = sbr.rel (%p135) target = $region20
      $region19: #{conv_network_forward.3} parent=5 // pred_region
        // Predicated region
        $region21: #{conv_network_forward.3} parent=19 // pred_check
          %p138 = pneg %p34
        $region22: #{conv_network_forward.3} parent=19 // pred_check_branch
          %140 = sbr.rel (%p138) target = $region24
        $region23: #{conv_network_forward.3} parent=19 // pred_region
          %s141 = smul.u32 10, %s14
          %p142 = scmp.lt.s32.totalorder %s141, 49
          %s143 = scalar_select %p142, %s141, 49
          %s144 = smul.addr %s143, 2
          %s145 = scalar_lea.vmem %s0, %s144
          %s146 = smul.u32 10, %s14
        $region24: #{conv_network_forward.3} parent=19 // pred_fallthru
          _
        // Predicated region
        $region25: #{conv_network_forward.3} parent=19 // pred_check
          %p147 = pneg %p60
        $region26: #{conv_network_forward.3} parent=19 // pred_check_branch
          %149 = sbr.rel (%p147) target = $region28
        $region27: #{conv_network_forward.3} parent=19 // pred_region
          %s150 = sand.u32 %s50, 1
          %s151 = scalar_lea.sflag [#allocation4], %s150
          %s152 = sand.u32 %s50, 1
          %s153 = smul.addr %s152, 640
          %s154 = scalar_lea.vmem [#allocation3], %s153
          %s155 = smul.u32 160, %s14
          %s157 = ssub.s32 10240, 10240
          %158 = vsyncadd %s151, %s157
          %s159 = smul.addr %s155, 64
          %s160 = scalar_lea.hbm %s1, %s159
          %s161 = sshll.u32 %s154, 4
          %s162 = int_to_ptr.vmem [resolvable:$true] %s161
          %167 = dma.hbm_to_vmem [thread:$0]  %s160, 10240, %s162, %s151, 64, 64, 4
        $region28: #{conv_network_forward.3} parent=19 // pred_fallthru
          _
      $region20: #{conv_network_forward.3} parent=5 // pred_fallthru
        _
      %p168 = scmp.le.s32.totalorder 1, %s14
      %p169 = scmp.lt.s32.totalorder %s14, 6
      %p170 = pnand %p168, %p169
      %p171 = pneg %p170
      // Predicated region
      $region29: #{conv_network_forward.3} parent=5 // pred_check
        _
      $region30: #{conv_network_forward.3} parent=5 // pred_check_branch
        %173 = sbr.rel (%p170) target = $region32
      $region31: #{conv_network_forward.3} parent=5 // pred_region
        %s174 = ssub.s32 %s14, 1
        %s175 = sand.u32 %s53, 1
        %s176 = scalar_lea.sflag [#allocation4], %s175
        %s177 = sand.u32 %s53, 1
        %s178 = smul.addr %s177, 640
        %s179 = scalar_lea.vmem [#allocation3], %s178
        // Predicated region
        $region33: #{conv_network_forward.3} parent=31 // pred_check
          %p180 = pneg %p66
        $region34: #{conv_network_forward.3} parent=31 // pred_check_branch
          %182 = sbr.rel (%p180) target = $region36
        $region35: #{conv_network_forward.3} parent=31 // pred_region
          %183 = dma.done %s176, 10240
        $region36: #{conv_network_forward.3} parent=31 // pred_fallthru
          _
        // Predicated region
        $region37: #{conv_network_forward.3} parent=31 // pred_check
          %p184 = pneg %p87
        $region38: #{conv_network_forward.3} parent=31 // pred_check_branch
          %186 = sbr.rel (%p184) target = $region40
        $region39: #{conv_network_forward.3} parent=31 // pred_region
          %187 = dma.done [#allocation7], 16
        $region40: #{conv_network_forward.3} parent=31 // pred_fallthru
          _
        %s188 = smul.u32 10, %s19
        %p189 = scmp.lt.s32.totalorder %s188, 49
        %s190 = scalar_select %p189, %s188, 49
        %s191 = smul.addr %s190, 2
        %s192 = scalar_lea.vmem %s0, %s191
        %p193 = pneg %p40
        %p194 = pneg %p37
        %s195 = sand.u32 %s53, 1
        %s196 = scalar_lea.sflag [#allocation4], %s195
        %s197 = sand.u32 %s53, 1
        %s198 = smul.addr %s197, 640
        %s199 = scalar_lea.vmem [#allocation3], %s198
        %p200 = pneg %p66
        %p201 = pneg %p63
        %p202 = pneg %p87
        %p203 = pneg %p84
        %p204 = pneg %p108
        %p205 = pneg %p105
        %s206 = smul.u32 10, %s19
        %p207 = scmp.lt.s32.totalorder %s206, 49
        %s208 = scalar_select %p207, %s206, 49
        %s209 = smul.addr %s208, 2
        %s210 = scalar_lea.vmem %s0, %s209
        %s211 = smul.u32 10, %s19
        %s212 = smul.u32 160, %s19
        %p214 = scmp.eq.s32.totalorder %s19, 0
        // Predicated region
        $region41: #{conv_network_forward.3} parent=31 // pred_check
          %p215 = pneg %p214
        $region42: #{conv_network_forward.3} parent=31 // pred_check_branch
          %217 = sbr.rel (%p215) target = $region44
        $region43: #{conv_network_forward.3} parent=31 // pred_region
          %218 = vst [vmem:[#allocation2] sm:$0x3] 0.0
        $region44: #{conv_network_forward.3} parent=31 // pred_fallthru
          _
        %v219 = vld [vmem:[#allocation2] sm:$0x3]
        %v220 = vld [vmem:[%s210] sm:$0xff]
        %v221 = vld [vmem:[%s210 + $0x8] sm:$0xff]
        %v222 = vld [vmem:[%s210 + $0x10] sm:$0xf]
        %v226 = vcombine.high %v220, %v220
        %v228 = vunpack.c.l.s4 1983009808
        %v229 = vunpack.c.0.s8 %v228
        %v230 = vlaneseq
        %v231 = vshrl.u32 %v230, 7
        %v232 = vsub.s32 %v229, %v231
        %v233 = vrot.slane %v220, %v232
        %v235 = vunpack.c.l.s4 1983009808
        %v236 = vunpack.c.0.s8 %v235
        %v237 = vlaneseq
        %v238 = vshrl.u32 %v237, 7
        %v239 = vsub.s32 %v236, %v238
        %v240 = vrot.slane %v226, %v239
        %v241 = vcombine.high %v233, %v233
        %v242 = vcombine.high %v240, %v240
        %v243 = vcombine.high %v221, %v221
        %v245 = vunpack.c.l.s4 1983009808
        %v246 = vunpack.c.0.s8 %v245
        %v247 = vlaneseq
        %v248 = vshrl.u32 %v247, 7
        %v249 = vsub.s32 %v246, %v248
        %v250 = vrot.slane %v221, %v249
        %v252 = vunpack.c.l.s4 1983009808
        %v253 = vunpack.c.0.s8 %v252
        %v254 = vlaneseq
        %v255 = vshrl.u32 %v254, 7
        %v256 = vsub.s32 %v253, %v255
        %v257 = vrot.slane %v243, %v256
        %v258 = vcombine.high %v250, %v250
        %v259 = vcombine.high %v257, %v257
        %v261 = vunpack.c.l.s4 1983009808
        %v262 = vunpack.c.0.s8 %v261
        %v263 = vlaneseq
        %v264 = vshrl.u32 %v263, 7
        %v265 = vsub.s32 %v262, %v264
        %v266 = vrot.slane %v222, %v265
        %v267 = vcombine.high %v266, %v266
        %v278 = vpack.c.bf16 %v233, %v233
        %v279 = vpack.c.bf16 %v241, %v241
        %v280 = vpack.c.bf16 %v240, %v240
        %v281 = vpack.c.bf16 %v242, %v242
        %v282 = vpack.c.bf16 %v250, %v250
        %v283 = vpack.c.bf16 %v258, %v258
        %v284 = vpack.c.bf16 %v257, %v257
        %v285 = vpack.c.bf16 %v259, %v259
        %v286 = vpack.c.bf16 %v266, %v266
        %v287 = vpack.c.bf16 %v267, %v267
        %v288 = vld [vmem:[%s179] sm:$0xf]
        %v289 = vld [vmem:[%s179 + $0x4] sm:$0xf]
        %v290 = vld [vmem:[%s179 + $0x8] sm:$0xf]
        %v291 = vld [vmem:[%s179 + $0xc] sm:$0xf]
        %v292 = vld [vmem:[%s179 + $0x10] sm:$0xf]
        %v293 = vld [vmem:[%s179 + $0x14] sm:$0xf]
        %v294 = vld [vmem:[%s179 + $0x18] sm:$0xf]
        %v295 = vld [vmem:[%s179 + $0x1c] sm:$0xf]
        %v296 = vld [vmem:[%s179 + $0x20] sm:$0xf]
        %v297 = vld [vmem:[%s179 + $0x24] sm:$0xf]
        %v298 = vld [vmem:[%s179 + $0x28] sm:$0xf]
        %v299 = vld [vmem:[%s179 + $0x2c] sm:$0xf]
        %v300 = vld [vmem:[%s179 + $0x30] sm:$0xf]
        %v301 = vld [vmem:[%s179 + $0x34] sm:$0xf]
        %v302 = vld [vmem:[%s179 + $0x38] sm:$0xf]
        %v303 = vld [vmem:[%s179 + $0x3c] sm:$0xf]
        %v304 = vld [vmem:[%s179 + $0x40] sm:$0xf]
        %v305 = vld [vmem:[%s179 + $0x44] sm:$0xf]
        %v306 = vld [vmem:[%s179 + $0x48] sm:$0xf]
        %v307 = vld [vmem:[%s179 + $0x4c] sm:$0xf]
        %v308 = vld [vmem:[%s179 + $0x50] sm:$0xf]
        %v309 = vld [vmem:[%s179 + $0x54] sm:$0xf]
        %v310 = vld [vmem:[%s179 + $0x58] sm:$0xf]
        %v311 = vld [vmem:[%s179 + $0x5c] sm:$0xf]
        %v312 = vld [vmem:[%s179 + $0x60] sm:$0xf]
        %v313 = vld [vmem:[%s179 + $0x64] sm:$0xf]
        %v314 = vld [vmem:[%s179 + $0x68] sm:$0xf]
        %v315 = vld [vmem:[%s179 + $0x6c] sm:$0xf]
        %v316 = vld [vmem:[%s179 + $0x70] sm:$0xf]
        %v317 = vld [vmem:[%s179 + $0x74] sm:$0xf]
        %v318 = vld [vmem:[%s179 + $0x78] sm:$0xf]
        %v319 = vld [vmem:[%s179 + $0x7c] sm:$0xf]
        %v320 = vld [vmem:[%s179 + $0x80] sm:$0xf]
        %v321 = vld [vmem:[%s179 + $0x84] sm:$0xf]
        %v322 = vld [vmem:[%s179 + $0x88] sm:$0xf]
        %v323 = vld [vmem:[%s179 + $0x8c] sm:$0xf]
        %v324 = vld [vmem:[%s179 + $0x90] sm:$0xf]
        %v325 = vld [vmem:[%s179 + $0x94] sm:$0xf]
        %v326 = vld [vmem:[%s179 + $0x98] sm:$0xf]
        %v327 = vld [vmem:[%s179 + $0x9c] sm:$0xf]
        %v328 = vld [vmem:[%s179 + $0xa0] sm:$0xf]
        %v329 = vld [vmem:[%s179 + $0xa4] sm:$0xf]
        %v330 = vld [vmem:[%s179 + $0xa8] sm:$0xf]
        %v331 = vld [vmem:[%s179 + $0xac] sm:$0xf]
        %v332 = vld [vmem:[%s179 + $0xb0] sm:$0xf]
        %v333 = vld [vmem:[%s179 + $0xb4] sm:$0xf]
        %v334 = vld [vmem:[%s179 + $0xb8] sm:$0xf]
        %v335 = vld [vmem:[%s179 + $0xbc] sm:$0xf]
        %v336 = vld [vmem:[%s179 + $0xc0] sm:$0xf]
        %v337 = vld [vmem:[%s179 + $0xc4] sm:$0xf]
        %v338 = vld [vmem:[%s179 + $0xc8] sm:$0xf]
        %v339 = vld [vmem:[%s179 + $0xcc] sm:$0xf]
        %v340 = vld [vmem:[%s179 + $0xd0] sm:$0xf]
        %v341 = vld [vmem:[%s179 + $0xd4] sm:$0xf]
        %v342 = vld [vmem:[%s179 + $0xd8] sm:$0xf]
        %v343 = vld [vmem:[%s179 + $0xdc] sm:$0xf]
        %v344 = vld [vmem:[%s179 + $0xe0] sm:$0xf]
        %v345 = vld [vmem:[%s179 + $0xe4] sm:$0xf]
        %v346 = vld [vmem:[%s179 + $0xe8] sm:$0xf]
        %v347 = vld [vmem:[%s179 + $0xec] sm:$0xf]
        %v348 = vld [vmem:[%s179 + $0xf0] sm:$0xf]
        %v349 = vld [vmem:[%s179 + $0xf4] sm:$0xf]
        %v350 = vld [vmem:[%s179 + $0xf8] sm:$0xf]
        %v351 = vld [vmem:[%s179 + $0xfc] sm:$0xf]
        %v352 = vld [vmem:[%s179 + $0x100] sm:$0xf]
        %v353 = vld [vmem:[%s179 + $0x104] sm:$0xf]
        %v354 = vld [vmem:[%s179 + $0x108] sm:$0xf]
        %v355 = vld [vmem:[%s179 + $0x10c] sm:$0xf]
        %v356 = vld [vmem:[%s179 + $0x110] sm:$0xf]
        %v357 = vld [vmem:[%s179 + $0x114] sm:$0xf]
        %v358 = vld [vmem:[%s179 + $0x118] sm:$0xf]
        %v359 = vld [vmem:[%s179 + $0x11c] sm:$0xf]
        %v360 = vld [vmem:[%s179 + $0x120] sm:$0xf]
        %v361 = vld [vmem:[%s179 + $0x124] sm:$0xf]
        %v362 = vld [vmem:[%s179 + $0x128] sm:$0xf]
        %v363 = vld [vmem:[%s179 + $0x12c] sm:$0xf]
        %v364 = vld [vmem:[%s179 + $0x130] sm:$0xf]
        %v365 = vld [vmem:[%s179 + $0x134] sm:$0xf]
        %v366 = vld [vmem:[%s179 + $0x138] sm:$0xf]
        %v367 = vld [vmem:[%s179 + $0x13c] sm:$0xf]
        %v368 = vld [vmem:[%s179 + $0x140] sm:$0xf]
        %v369 = vld [vmem:[%s179 + $0x144] sm:$0xf]
        %v370 = vld [vmem:[%s179 + $0x148] sm:$0xf]
        %v371 = vld [vmem:[%s179 + $0x14c] sm:$0xf]
        %v372 = vld [vmem:[%s179 + $0x150] sm:$0xf]
        %v373 = vld [vmem:[%s179 + $0x154] sm:$0xf]
        %v374 = vld [vmem:[%s179 + $0x158] sm:$0xf]
        %v375 = vld [vmem:[%s179 + $0x15c] sm:$0xf]
        %v376 = vld [vmem:[%s179 + $0x160] sm:$0xf]
        %v377 = vld [vmem:[%s179 + $0x164] sm:$0xf]
        %v378 = vld [vmem:[%s179 + $0x168] sm:$0xf]
        %v379 = vld [vmem:[%s179 + $0x16c] sm:$0xf]
        %v380 = vld [vmem:[%s179 + $0x170] sm:$0xf]
        %v381 = vld [vmem:[%s179 + $0x174] sm:$0xf]
        %v382 = vld [vmem:[%s179 + $0x178] sm:$0xf]
        %v383 = vld [vmem:[%s179 + $0x17c] sm:$0xf]
        %v384 = vld [vmem:[%s179 + $0x180] sm:$0xf]
        %v385 = vld [vmem:[%s179 + $0x184] sm:$0xf]
        %v386 = vld [vmem:[%s179 + $0x188] sm:$0xf]
        %v387 = vld [vmem:[%s179 + $0x18c] sm:$0xf]
        %v388 = vld [vmem:[%s179 + $0x190] sm:$0xf]
        %v389 = vld [vmem:[%s179 + $0x194] sm:$0xf]
        %v390 = vld [vmem:[%s179 + $0x198] sm:$0xf]
        %v391 = vld [vmem:[%s179 + $0x19c] sm:$0xf]
        %v392 = vld [vmem:[%s179 + $0x1a0] sm:$0xf]
        %v393 = vld [vmem:[%s179 + $0x1a4] sm:$0xf]
        %v394 = vld [vmem:[%s179 + $0x1a8] sm:$0xf]
        %v395 = vld [vmem:[%s179 + $0x1ac] sm:$0xf]
        %v396 = vld [vmem:[%s179 + $0x1b0] sm:$0xf]
        %v397 = vld [vmem:[%s179 + $0x1b4] sm:$0xf]
        %v398 = vld [vmem:[%s179 + $0x1b8] sm:$0xf]
        %v399 = vld [vmem:[%s179 + $0x1bc] sm:$0xf]
        %v400 = vld [vmem:[%s179 + $0x1c0] sm:$0xf]
        %v401 = vld [vmem:[%s179 + $0x1c4] sm:$0xf]
        %v402 = vld [vmem:[%s179 + $0x1c8] sm:$0xf]
        %v403 = vld [vmem:[%s179 + $0x1cc] sm:$0xf]
        %v404 = vld [vmem:[%s179 + $0x1d0] sm:$0xf]
        %v405 = vld [vmem:[%s179 + $0x1d4] sm:$0xf]
        %v406 = vld [vmem:[%s179 + $0x1d8] sm:$0xf]
        %v407 = vld [vmem:[%s179 + $0x1dc] sm:$0xf]
        %v408 = vld [vmem:[%s179 + $0x1e0] sm:$0xf]
        %v409 = vld [vmem:[%s179 + $0x1e4] sm:$0xf]
        %v410 = vld [vmem:[%s179 + $0x1e8] sm:$0xf]
        %v411 = vld [vmem:[%s179 + $0x1ec] sm:$0xf]
        %v412 = vld [vmem:[%s179 + $0x1f0] sm:$0xf]
        %v413 = vld [vmem:[%s179 + $0x1f4] sm:$0xf]
        %v414 = vld [vmem:[%s179 + $0x1f8] sm:$0xf]
        %v415 = vld [vmem:[%s179 + $0x1fc] sm:$0xf]
        %v416 = vld [vmem:[%s179 + $0x200] sm:$0xf]
        %v417 = vld [vmem:[%s179 + $0x204] sm:$0xf]
        %v418 = vld [vmem:[%s179 + $0x208] sm:$0xf]
        %v419 = vld [vmem:[%s179 + $0x20c] sm:$0xf]
        %v420 = vld [vmem:[%s179 + $0x210] sm:$0xf]
        %v421 = vld [vmem:[%s179 + $0x214] sm:$0xf]
        %v422 = vld [vmem:[%s179 + $0x218] sm:$0xf]
        %v423 = vld [vmem:[%s179 + $0x21c] sm:$0xf]
        %v424 = vld [vmem:[%s179 + $0x220] sm:$0xf]
        %v425 = vld [vmem:[%s179 + $0x224] sm:$0xf]
        %v426 = vld [vmem:[%s179 + $0x228] sm:$0xf]
        %v427 = vld [vmem:[%s179 + $0x22c] sm:$0xf]
        %v428 = vld [vmem:[%s179 + $0x230] sm:$0xf]
        %v429 = vld [vmem:[%s179 + $0x234] sm:$0xf]
        %v430 = vld [vmem:[%s179 + $0x238] sm:$0xf]
        %v431 = vld [vmem:[%s179 + $0x23c] sm:$0xf]
        %v432 = vld [vmem:[%s179 + $0x240] sm:$0xf]
        %v433 = vld [vmem:[%s179 + $0x244] sm:$0xf]
        %v434 = vld [vmem:[%s179 + $0x248] sm:$0xf]
        %v435 = vld [vmem:[%s179 + $0x24c] sm:$0xf]
        %v436 = vld [vmem:[%s179 + $0x250] sm:$0xf]
        %v437 = vld [vmem:[%s179 + $0x254] sm:$0xf]
        %v438 = vld [vmem:[%s179 + $0x258] sm:$0xf]
        %v439 = vld [vmem:[%s179 + $0x25c] sm:$0xf]
        %v440 = vld [vmem:[%s179 + $0x260] sm:$0xf]
        %v441 = vld [vmem:[%s179 + $0x264] sm:$0xf]
        %v442 = vld [vmem:[%s179 + $0x268] sm:$0xf]
        %v443 = vld [vmem:[%s179 + $0x26c] sm:$0xf]
        %v444 = vld [vmem:[%s179 + $0x270] sm:$0xf]
        %v445 = vld [vmem:[%s179 + $0x274] sm:$0xf]
        %v446 = vld [vmem:[%s179 + $0x278] sm:$0xf]
        %v447 = vld [vmem:[%s179 + $0x27c] sm:$0xf]
        %v608 = vunpack.c.l.b16 %v288
        %v609 = vunpack.c.l.b16 %v289
        %v610 = vunpack.c.l.b16 %v290
        %v611 = vunpack.c.l.b16 %v291
        %v612 = vunpack.c.l.b16 %v292
        %v613 = vunpack.c.l.b16 %v293
        %v614 = vunpack.c.l.b16 %v294
        %v615 = vunpack.c.l.b16 %v295
        %v616 = vunpack.c.l.b16 %v296
        %v617 = vunpack.c.l.b16 %v297
        %v618 = vunpack.c.l.b16 %v298
        %v619 = vunpack.c.l.b16 %v299
        %v620 = vunpack.c.l.b16 %v300
        %v621 = vunpack.c.l.b16 %v301
        %v622 = vunpack.c.l.b16 %v302
        %v623 = vunpack.c.l.b16 %v303
        %v624 = vunpack.c.l.b16 %v304
        %v625 = vunpack.c.l.b16 %v305
        %v626 = vunpack.c.l.b16 %v306
        %v627 = vunpack.c.l.b16 %v307
        %v628 = vunpack.c.l.b16 %v308
        %v629 = vunpack.c.l.b16 %v309
        %v630 = vunpack.c.l.b16 %v310
        %v631 = vunpack.c.l.b16 %v311
        %v632 = vunpack.c.l.b16 %v312
        %v633 = vunpack.c.l.b16 %v313
        %v634 = vunpack.c.l.b16 %v314
        %v635 = vunpack.c.l.b16 %v315
        %v636 = vunpack.c.l.b16 %v316
        %v637 = vunpack.c.l.b16 %v317
        %v638 = vunpack.c.l.b16 %v318
        %v639 = vunpack.c.l.b16 %v319
        %v640 = vunpack.c.l.b16 %v320
        %v641 = vunpack.c.l.b16 %v321
        %v642 = vunpack.c.l.b16 %v322
        %v643 = vunpack.c.l.b16 %v323
        %v644 = vunpack.c.l.b16 %v324
        %v645 = vunpack.c.l.b16 %v325
        %v646 = vunpack.c.l.b16 %v326
        %v647 = vunpack.c.l.b16 %v327
        %v648 = vunpack.c.l.b16 %v328
        %v649 = vunpack.c.l.b16 %v329
        %v650 = vunpack.c.l.b16 %v330
        %v651 = vunpack.c.l.b16 %v331
        %v652 = vunpack.c.l.b16 %v332
        %v653 = vunpack.c.l.b16 %v333
        %v654 = vunpack.c.l.b16 %v334
        %v655 = vunpack.c.l.b16 %v335
        %v656 = vunpack.c.l.b16 %v336
        %v657 = vunpack.c.l.b16 %v337
        %v658 = vunpack.c.l.b16 %v338
        %v659 = vunpack.c.l.b16 %v339
        %v660 = vunpack.c.l.b16 %v340
        %v661 = vunpack.c.l.b16 %v341
        %v662 = vunpack.c.l.b16 %v342
        %v663 = vunpack.c.l.b16 %v343
        %v664 = vunpack.c.l.b16 %v344
        %v665 = vunpack.c.l.b16 %v345
        %v666 = vunpack.c.l.b16 %v346
        %v667 = vunpack.c.l.b16 %v347
        %v668 = vunpack.c.l.b16 %v348
        %v669 = vunpack.c.l.b16 %v349
        %v670 = vunpack.c.l.b16 %v350
        %v671 = vunpack.c.l.b16 %v351
        %v672 = vunpack.c.l.b16 %v352
        %v673 = vunpack.c.l.b16 %v353
        %v674 = vunpack.c.l.b16 %v354
        %v675 = vunpack.c.l.b16 %v355
        %v676 = vunpack.c.l.b16 %v356
        %v677 = vunpack.c.l.b16 %v357
        %v678 = vunpack.c.l.b16 %v358
        %v679 = vunpack.c.l.b16 %v359
        %v680 = vunpack.c.l.b16 %v360
        %v681 = vunpack.c.l.b16 %v361
        %v682 = vunpack.c.l.b16 %v362
        %v683 = vunpack.c.l.b16 %v363
        %v684 = vunpack.c.l.b16 %v364
        %v685 = vunpack.c.l.b16 %v365
        %v686 = vunpack.c.l.b16 %v366
        %v687 = vunpack.c.l.b16 %v367
        %v688 = vunpack.c.l.b16 %v368
        %v689 = vunpack.c.l.b16 %v369
        %v690 = vunpack.c.l.b16 %v370
        %v691 = vunpack.c.l.b16 %v371
        %v692 = vunpack.c.l.b16 %v372
        %v693 = vunpack.c.l.b16 %v373
        %v694 = vunpack.c.l.b16 %v374
        %v695 = vunpack.c.l.b16 %v375
        %v696 = vunpack.c.l.b16 %v376
        %v697 = vunpack.c.l.b16 %v377
        %v698 = vunpack.c.l.b16 %v378
        %v699 = vunpack.c.l.b16 %v379
        %v700 = vunpack.c.l.b16 %v380
        %v701 = vunpack.c.l.b16 %v381
        %v702 = vunpack.c.l.b16 %v382
        %v703 = vunpack.c.l.b16 %v383
        %v704 = vunpack.c.l.b16 %v384
        %v705 = vunpack.c.l.b16 %v385
        %v706 = vunpack.c.l.b16 %v386
        %v707 = vunpack.c.l.b16 %v387
        %v708 = vunpack.c.l.b16 %v388
        %v709 = vunpack.c.l.b16 %v389
        %v710 = vunpack.c.l.b16 %v390
        %v711 = vunpack.c.l.b16 %v391
        %v712 = vunpack.c.l.b16 %v392
        %v713 = vunpack.c.l.b16 %v393
        %v714 = vunpack.c.l.b16 %v394
        %v715 = vunpack.c.l.b16 %v395
        %v716 = vunpack.c.l.b16 %v396
        %v717 = vunpack.c.l.b16 %v397
        %v718 = vunpack.c.l.b16 %v398
        %v719 = vunpack.c.l.b16 %v399
        %v720 = vunpack.c.l.b16 %v400
        %v721 = vunpack.c.l.b16 %v401
        %v722 = vunpack.c.l.b16 %v402
        %v723 = vunpack.c.l.b16 %v403
        %v724 = vunpack.c.l.b16 %v404
        %v725 = vunpack.c.l.b16 %v405
        %v726 = vunpack.c.l.b16 %v406
        %v727 = vunpack.c.l.b16 %v407
        %v728 = vunpack.c.l.b16 %v408
        %v729 = vunpack.c.l.b16 %v409
        %v730 = vunpack.c.l.b16 %v410
        %v731 = vunpack.c.l.b16 %v411
        %v732 = vunpack.c.l.b16 %v412
        %v733 = vunpack.c.l.b16 %v413
        %v734 = vunpack.c.l.b16 %v414
        %v735 = vunpack.c.l.b16 %v415
        %v736 = vunpack.c.l.b16 %v416
        %v737 = vunpack.c.l.b16 %v417
        %v738 = vunpack.c.l.b16 %v418
        %v739 = vunpack.c.l.b16 %v419
        %v740 = vunpack.c.l.b16 %v420
        %v741 = vunpack.c.l.b16 %v421
        %v742 = vunpack.c.l.b16 %v422
        %v743 = vunpack.c.l.b16 %v423
        %v744 = vunpack.c.l.b16 %v424
        %v745 = vunpack.c.l.b16 %v425
        %v746 = vunpack.c.l.b16 %v426
        %v747 = vunpack.c.l.b16 %v427
        %v748 = vunpack.c.l.b16 %v428
        %v749 = vunpack.c.l.b16 %v429
        %v750 = vunpack.c.l.b16 %v430
        %v751 = vunpack.c.l.b16 %v431
        %v752 = vunpack.c.l.b16 %v432
        %v753 = vunpack.c.l.b16 %v433
        %v754 = vunpack.c.l.b16 %v434
        %v755 = vunpack.c.l.b16 %v435
        %v756 = vunpack.c.l.b16 %v436
        %v757 = vunpack.c.l.b16 %v437
        %v758 = vunpack.c.l.b16 %v438
        %v759 = vunpack.c.l.b16 %v439
        %v760 = vunpack.c.l.b16 %v440
        %v761 = vunpack.c.l.b16 %v441
        %v762 = vunpack.c.l.b16 %v442
        %v763 = vunpack.c.l.b16 %v443
        %v764 = vunpack.c.l.b16 %v444
        %v765 = vunpack.c.l.b16 %v445
        %v766 = vunpack.c.l.b16 %v446
        %v767 = vunpack.c.l.b16 %v447
        %v768 = vpack.c.b16 %v609, %v608
        %v769 = vpack.c.b16 %v611, %v610
        %v770 = vpack.c.b16 %v613, %v612
        %v771 = vpack.c.b16 %v615, %v614
        %v772 = vpack.c.b16 %v617, %v616
        %v773 = vpack.c.b16 %v619, %v618
        %v774 = vpack.c.b16 %v621, %v620
        %v775 = vpack.c.b16 %v623, %v622
        %v776 = vpack.c.b16 %v625, %v624
        %v777 = vpack.c.b16 %v627, %v626
        %v778 = vpack.c.b16 %v629, %v628
        %v779 = vpack.c.b16 %v631, %v630
        %v780 = vpack.c.b16 %v633, %v632
        %v781 = vpack.c.b16 %v635, %v634
        %v782 = vpack.c.b16 %v637, %v636
        %v783 = vpack.c.b16 %v639, %v638
        %v784 = vpack.c.b16 %v641, %v640
        %v785 = vpack.c.b16 %v643, %v642
        %v786 = vpack.c.b16 %v645, %v644
        %v787 = vpack.c.b16 %v647, %v646
        %v788 = vpack.c.b16 %v649, %v648
        %v789 = vpack.c.b16 %v651, %v650
        %v790 = vpack.c.b16 %v653, %v652
        %v791 = vpack.c.b16 %v655, %v654
        %v792 = vpack.c.b16 %v657, %v656
        %v793 = vpack.c.b16 %v659, %v658
        %v794 = vpack.c.b16 %v661, %v660
        %v795 = vpack.c.b16 %v663, %v662
        %v796 = vpack.c.b16 %v665, %v664
        %v797 = vpack.c.b16 %v667, %v666
        %v798 = vpack.c.b16 %v669, %v668
        %v799 = vpack.c.b16 %v671, %v670
        %v800 = vpack.c.b16 %v673, %v672
        %v801 = vpack.c.b16 %v675, %v674
        %v802 = vpack.c.b16 %v677, %v676
        %v803 = vpack.c.b16 %v679, %v678
        %v804 = vpack.c.b16 %v681, %v680
        %v805 = vpack.c.b16 %v683, %v682
        %v806 = vpack.c.b16 %v685, %v684
        %v807 = vpack.c.b16 %v687, %v686
        %v808 = vpack.c.b16 %v689, %v688
        %v809 = vpack.c.b16 %v691, %v690
        %v810 = vpack.c.b16 %v693, %v692
        %v811 = vpack.c.b16 %v695, %v694
        %v812 = vpack.c.b16 %v697, %v696
        %v813 = vpack.c.b16 %v699, %v698
        %v814 = vpack.c.b16 %v701, %v700
        %v815 = vpack.c.b16 %v703, %v702
        %v816 = vpack.c.b16 %v705, %v704
        %v817 = vpack.c.b16 %v707, %v706
        %v818 = vpack.c.b16 %v709, %v708
        %v819 = vpack.c.b16 %v711, %v710
        %v820 = vpack.c.b16 %v713, %v712
        %v821 = vpack.c.b16 %v715, %v714
        %v822 = vpack.c.b16 %v717, %v716
        %v823 = vpack.c.b16 %v719, %v718
        %v824 = vpack.c.b16 %v721, %v720
        %v825 = vpack.c.b16 %v723, %v722
        %v826 = vpack.c.b16 %v725, %v724
        %v827 = vpack.c.b16 %v727, %v726
        %v828 = vpack.c.b16 %v729, %v728
        %v829 = vpack.c.b16 %v731, %v730
        %v830 = vpack.c.b16 %v733, %v732
        %v831 = vpack.c.b16 %v735, %v734
        %v832 = vpack.c.b16 %v737, %v736
        %v833 = vpack.c.b16 %v739, %v738
        %v834 = vpack.c.b16 %v741, %v740
        %v835 = vpack.c.b16 %v743, %v742
        %v836 = vpack.c.b16 %v745, %v744
        %v837 = vpack.c.b16 %v747, %v746
        %v838 = vpack.c.b16 %v749, %v748
        %v839 = vpack.c.b16 %v751, %v750
        %v840 = vpack.c.b16 %v753, %v752
        %v841 = vpack.c.b16 %v755, %v754
        %v842 = vpack.c.b16 %v757, %v756
        %v843 = vpack.c.b16 %v759, %v758
        %v844 = vpack.c.b16 %v761, %v760
        %v845 = vpack.c.b16 %v763, %v762
        %v846 = vpack.c.b16 %v765, %v764
        %v847 = vpack.c.b16 %v767, %v766
        %928 = vmatprep.subr.bf16.mxu0 0
        %929 = vmatpush1.bf16.msra.mxu0 %v768
        %930 = vmatprep.subr.bf16.mxu0 0
        %931 = vmatpush1.bf16.msra.mxu0 %v769
        %932 = vmatprep.subr.bf16.mxu0 0
        %933 = vmatpush1.bf16.msra.mxu0 %v770
        %934 = vmatprep.subr.bf16.mxu0 0
        %935 = vmatpush1.bf16.msra.mxu0 %v771
        %936 = vmatprep.subr.bf16.mxu0 0
        %937 = vmatpush1.bf16.msra.mxu0 %v772
        %938 = vmatprep.subr.bf16.mxu0 0
        %939 = vmatpush1.bf16.msra.mxu0 %v773
        %940 = vmatprep.subr.bf16.mxu0 0
        %941 = vmatpush1.bf16.msra.mxu0 %v774
        %942 = vmatprep.subr.bf16.mxu0 0
        %943 = vmatpush1.bf16.msra.mxu0 %v775
        %944 = vmatprep.subr.bf16.mxu0 0
        %945 = vmatpush1.bf16.msra.mxu0 %v776
        %946 = vmatprep.subr.bf16.mxu0 0
        %947 = vmatpush1.bf16.msra.mxu0 %v777
        %948 = vmatprep.subr.bf16.mxu0 0
        %949 = vmatpush1.bf16.msra.mxu0 %v778
        %950 = vmatprep.subr.bf16.mxu0 0
        %951 = vmatpush1.bf16.msra.mxu0 %v779
        %952 = vmatprep.subr.bf16.mxu0 0
        %953 = vmatpush1.bf16.msra.mxu0 %v780
        %954 = vmatprep.subr.bf16.mxu0 0
        %955 = vmatpush1.bf16.msra.mxu0 %v781
        %956 = vmatprep.subr.bf16.mxu0 0
        %957 = vmatpush1.bf16.msra.mxu0 %v782
        %958 = vmatprep.subr.bf16.mxu0 0
        %959 = vmatpush1.bf16.msra.mxu0 %v783
        %960 = vmatprep.mubr.bf16.mxu0 %v279
        %961 = vmatmul.mubr.bf16.gmra.mrb[0].mxu0 %v278
        %v962 = vpop.f32.mrb[0].mxu0
        %v963 = vadd.f32 0.0, %v962
        %v964 = vpop.f32.mrb[0].mxu0
        %v965 = vpop.f32.mrb[0].mxu0
        %v966 = vpop.f32.mrb[0].mxu0
        %967 = vdwg.mxu0
        %968 = vmatprep.subr.bf16.mxu0 0
        %969 = vmatpush1.bf16.msra.mxu0 %v784
        %970 = vmatprep.subr.bf16.mxu0 0
        %971 = vmatpush1.bf16.msra.mxu0 %v785
        %972 = vmatprep.subr.bf16.mxu0 0
        %973 = vmatpush1.bf16.msra.mxu0 %v786
        %974 = vmatprep.subr.bf16.mxu0 0
        %975 = vmatpush1.bf16.msra.mxu0 %v787
        %976 = vmatprep.subr.bf16.mxu0 0
        %977 = vmatpush1.bf16.msra.mxu0 %v788
        %978 = vmatprep.subr.bf16.mxu0 0
        %979 = vmatpush1.bf16.msra.mxu0 %v789
        %980 = vmatprep.subr.bf16.mxu0 0
        %981 = vmatpush1.bf16.msra.mxu0 %v790
        %982 = vmatprep.subr.bf16.mxu0 0
        %983 = vmatpush1.bf16.msra.mxu0 %v791
        %984 = vmatprep.subr.bf16.mxu0 0
        %985 = vmatpush1.bf16.msra.mxu0 %v792
        %986 = vmatprep.subr.bf16.mxu0 0
        %987 = vmatpush1.bf16.msra.mxu0 %v793
        %988 = vmatprep.subr.bf16.mxu0 0
        %989 = vmatpush1.bf16.msra.mxu0 %v794
        %990 = vmatprep.subr.bf16.mxu0 0
        %991 = vmatpush1.bf16.msra.mxu0 %v795
        %992 = vmatprep.subr.bf16.mxu0 0
        %993 = vmatpush1.bf16.msra.mxu0 %v796
        %994 = vmatprep.subr.bf16.mxu0 0
        %995 = vmatpush1.bf16.msra.mxu0 %v797
        %996 = vmatprep.subr.bf16.mxu0 0
        %997 = vmatpush1.bf16.msra.mxu0 %v798
        %998 = vmatprep.subr.bf16.mxu0 0
        %999 = vmatpush1.bf16.msra.mxu0 %v799
        %1000 = vmatprep.mubr.bf16.mxu0 %v281
        %1001 = vmatmul.mubr.bf16.gmra.mrb[0].mxu0 %v280
        %v1002 = vpop.f32.mrb[0].mxu0
        %v1003 = vadd.f32 %v963, %v1002
        %v1004 = vpop.f32.mrb[0].mxu0
        %v1005 = vpop.f32.mrb[0].mxu0
        %v1006 = vpop.f32.mrb[0].mxu0
        %1007 = vdwg.mxu0
        %1008 = vmatprep.subr.bf16.mxu0 0
        %1009 = vmatpush1.bf16.msra.mxu0 %v800
        %1010 = vmatprep.subr.bf16.mxu0 0
        %1011 = vmatpush1.bf16.msra.mxu0 %v801
        %1012 = vmatprep.subr.bf16.mxu0 0
        %1013 = vmatpush1.bf16.msra.mxu0 %v802
        %1014 = vmatprep.subr.bf16.mxu0 0
        %1015 = vmatpush1.bf16.msra.mxu0 %v803
        %1016 = vmatprep.subr.bf16.mxu0 0
        %1017 = vmatpush1.bf16.msra.mxu0 %v804
        %1018 = vmatprep.subr.bf16.mxu0 0
        %1019 = vmatpush1.bf16.msra.mxu0 %v805
        %1020 = vmatprep.subr.bf16.mxu0 0
        %1021 = vmatpush1.bf16.msra.mxu0 %v806
        %1022 = vmatprep.subr.bf16.mxu0 0
        %1023 = vmatpush1.bf16.msra.mxu0 %v807
        %1024 = vmatprep.subr.bf16.mxu0 0
        %1025 = vmatpush1.bf16.msra.mxu0 %v808
        %1026 = vmatprep.subr.bf16.mxu0 0
        %1027 = vmatpush1.bf16.msra.mxu0 %v809
        %1028 = vmatprep.subr.bf16.mxu0 0
        %1029 = vmatpush1.bf16.msra.mxu0 %v810
        %1030 = vmatprep.subr.bf16.mxu0 0
        %1031 = vmatpush1.bf16.msra.mxu0 %v811
        %1032 = vmatprep.subr.bf16.mxu0 0
        %1033 = vmatpush1.bf16.msra.mxu0 %v812
        %1034 = vmatprep.subr.bf16.mxu0 0
        %1035 = vmatpush1.bf16.msra.mxu0 %v813
        %1036 = vmatprep.subr.bf16.mxu0 0
        %1037 = vmatpush1.bf16.msra.mxu0 %v814
        %1038 = vmatprep.subr.bf16.mxu0 0
        %1039 = vmatpush1.bf16.msra.mxu0 %v815
        %1040 = vmatprep.mubr.bf16.mxu0 %v283
        %1041 = vmatmul.mubr.bf16.gmra.mrb[0].mxu0 %v282
        %v1042 = vpop.f32.mrb[0].mxu0
        %v1043 = vadd.f32 %v1003, %v1042
        %v1044 = vpop.f32.mrb[0].mxu0
        %v1045 = vpop.f32.mrb[0].mxu0
        %v1046 = vpop.f32.mrb[0].mxu0
        %1047 = vdwg.mxu0
        %1048 = vmatprep.subr.bf16.mxu0 0
        %1049 = vmatpush1.bf16.msra.mxu0 %v816
        %1050 = vmatprep.subr.bf16.mxu0 0
        %1051 = vmatpush1.bf16.msra.mxu0 %v817
        %1052 = vmatprep.subr.bf16.mxu0 0
        %1053 = vmatpush1.bf16.msra.mxu0 %v818
        %1054 = vmatprep.subr.bf16.mxu0 0
        %1055 = vmatpush1.bf16.msra.mxu0 %v819
        %1056 = vmatprep.subr.bf16.mxu0 0
        %1057 = vmatpush1.bf16.msra.mxu0 %v820
        %1058 = vmatprep.subr.bf16.mxu0 0
        %1059 = vmatpush1.bf16.msra.mxu0 %v821
        %1060 = vmatprep.subr.bf16.mxu0 0
        %1061 = vmatpush1.bf16.msra.mxu0 %v822
        %1062 = vmatprep.subr.bf16.mxu0 0
        %1063 = vmatpush1.bf16.msra.mxu0 %v823
        %1064 = vmatprep.subr.bf16.mxu0 0
        %1065 = vmatpush1.bf16.msra.mxu0 %v824
        %1066 = vmatprep.subr.bf16.mxu0 0
        %1067 = vmatpush1.bf16.msra.mxu0 %v825
        %1068 = vmatprep.subr.bf16.mxu0 0
        %1069 = vmatpush1.bf16.msra.mxu0 %v826
        %1070 = vmatprep.subr.bf16.mxu0 0
        %1071 = vmatpush1.bf16.msra.mxu0 %v827
        %1072 = vmatprep.subr.bf16.mxu0 0
        %1073 = vmatpush1.bf16.msra.mxu0 %v828
        %1074 = vmatprep.subr.bf16.mxu0 0
        %1075 = vmatpush1.bf16.msra.mxu0 %v829
        %1076 = vmatprep.subr.bf16.mxu0 0
        %1077 = vmatpush1.bf16.msra.mxu0 %v830
        %1078 = vmatprep.subr.bf16.mxu0 0
        %1079 = vmatpush1.bf16.msra.mxu0 %v831
        %1080 = vmatprep.mubr.bf16.mxu0 %v285
        %1081 = vmatmul.mubr.bf16.gmra.mrb[0].mxu0 %v284
        %v1082 = vpop.f32.mrb[0].mxu0
        %v1083 = vadd.f32 %v1043, %v1082
        %v1084 = vpop.f32.mrb[0].mxu0
        %v1085 = vpop.f32.mrb[0].mxu0
        %v1086 = vpop.f32.mrb[0].mxu0
        %1087 = vdwg.mxu0
        %1088 = vmatprep.subr.bf16.mxu0 0
        %1089 = vmatpush1.bf16.msra.mxu0 %v832
        %1090 = vmatprep.subr.bf16.mxu0 0
        %1091 = vmatpush1.bf16.msra.mxu0 %v833
        %1092 = vmatprep.subr.bf16.mxu0 0
        %1093 = vmatpush1.bf16.msra.mxu0 %v834
        %1094 = vmatprep.subr.bf16.mxu0 0
        %1095 = vmatpush1.bf16.msra.mxu0 %v835
        %1096 = vmatprep.subr.bf16.mxu0 0
        %1097 = vmatpush1.bf16.msra.mxu0 %v836
        %1098 = vmatprep.subr.bf16.mxu0 0
        %1099 = vmatpush1.bf16.msra.mxu0 %v837
        %1100 = vmatprep.subr.bf16.mxu0 0
        %1101 = vmatpush1.bf16.msra.mxu0 %v838
        %1102 = vmatprep.subr.bf16.mxu0 0
        %1103 = vmatpush1.bf16.msra.mxu0 %v839
        %1104 = vmatprep.subr.bf16.mxu0 0
        %1105 = vmatpush1.bf16.msra.mxu0 %v840
        %1106 = vmatprep.subr.bf16.mxu0 0
        %1107 = vmatpush1.bf16.msra.mxu0 %v841
        %1108 = vmatprep.subr.bf16.mxu0 0
        %1109 = vmatpush1.bf16.msra.mxu0 %v842
        %1110 = vmatprep.subr.bf16.mxu0 0
        %1111 = vmatpush1.bf16.msra.mxu0 %v843
        %1112 = vmatprep.subr.bf16.mxu0 0
        %1113 = vmatpush1.bf16.msra.mxu0 %v844
        %1114 = vmatprep.subr.bf16.mxu0 0
        %1115 = vmatpush1.bf16.msra.mxu0 %v845
        %1116 = vmatprep.subr.bf16.mxu0 0
        %1117 = vmatpush1.bf16.msra.mxu0 %v846
        %1118 = vmatprep.subr.bf16.mxu0 0
        %1119 = vmatpush1.bf16.msra.mxu0 %v847
        %1120 = vmatprep.mubr.bf16.mxu0 %v287
        %1121 = vmatmul.mubr.bf16.gmra.mrb[0].mxu0 %v286
        %v1122 = vpop.f32.mrb[0].mxu0
        %v1123 = vadd.f32 %v1083, %v1122
        %v1124 = vpop.f32.mrb[0].mxu0
        %v1125 = vpop.f32.mrb[0].mxu0
        %v1126 = vpop.f32.mrb[0].mxu0
        %1127 = vdwg.mxu0
        %v1128 = vadd.f32 %v219, %v1123
        %1129 = vst [vmem:[#allocation2] sm:$0x3] %v1128
        %p1130 = scmp.eq.s32.totalorder %s19, 4
        // Predicated region
        $region45: #{conv_network_forward.3} parent=31 // pred_check
          %p1131 = pneg %p1130
        $region46: #{conv_network_forward.3} parent=31 // pred_check_branch
          %1133 = sbr.rel (%p1131) target = $region48
        $region47: #{conv_network_forward.3} parent=31 // pred_region
          %v1134 = vld [vmem:[#allocation2] sm:$0x3]
          %v1135 = vld [vmem:[#allocation6] sm:$0x1]
          %v1137 = vlaneseq
          %v1138 = vshrl.u32 %v1137, 7
          %v1139 = vsub.s32 0, %v1138
          %v1140 = vrot.slane %v1135, %v1139
          %v1142 = vadd.f32 %v1134, %v1140
          %v1143 = vmax.f32 %v1142, 0.0
          %1144 = vst [vmem:[#allocation8] sm:$0x3] %v1143
        $region48: #{conv_network_forward.3} parent=31 // pred_fallthru
          _
        // Predicated region
        $region49: #{conv_network_forward.3} parent=31 // pred_check
          %p1145 = pneg %p105
        $region50: #{conv_network_forward.3} parent=31 // pred_check_branch
          %1147 = sbr.rel (%p1145) target = $region52
        $region51: #{conv_network_forward.3} parent=31 // pred_region
          %s1149 = ssub.s32 32, 32
          %1150 = vsyncadd [#allocation5], %s1149
          %s1152 = sshll.u32 [#allocation8], 4
          %s1153 = int_to_ptr.vmem [resolvable:$true] %s1152
          %1155 = dma.vmem_to_hbm [thread:$0]  %s1153, 32, %s3, [#allocation5]
        $region52: #{conv_network_forward.3} parent=31 // pred_fallthru
          _
        // Predicated region
        $region53: #{conv_network_forward.3} parent=31 // pred_check
          %p1156 = pneg %p105
        $region54: #{conv_network_forward.3} parent=31 // pred_check_branch
          %1158 = sbr.rel (%p1156) target = $region56
        $region55: #{conv_network_forward.3} parent=31 // pred_region
          %1159 = dma.done [#allocation5], 32
        $region56: #{conv_network_forward.3} parent=31 // pred_fallthru
          _
      $region32: #{conv_network_forward.3} parent=5 // pred_fallthru
        _
      %p1160 = scmp.le.s32.totalorder 2, %s14
      // Predicated region
      $region57: #{conv_network_forward.3} parent=5 // pred_check
        %p1161 = pneg %p1160
      $region58: #{conv_network_forward.3} parent=5 // pred_check_branch
        %1163 = sbr.rel (%p1161) target = $region60
      $region59: #{conv_network_forward.3} parent=5 // pred_region
        %s1164 = ssub.s32 %s14, 2
      $region60: #{conv_network_forward.3} parent=5 // pred_fallthru
        _
    $region6: #{conv_network_forward.3} parent=1 // loop_footer
      %s18 = sadd.s32 1, %s14
    $region7: #{conv_network_forward.3} parent=1 // loop_footer_branch
      %13 = sbr.rel target = $region3
    $region8: #{conv_network_forward.3} parent=1 // loop_exit
      _
    %1165 = vsyncpa [#allocation4], 1
    %s1166 = scalar_lea.sflag [#allocation4], 1
    %1167 = vsyncpa %s1166, 1
    %1168 = vsyncpa [#allocation7], 1
    %1169 = vsyncpa [#allocation5], 1
    %s1170 = scalar_lea.sflag [#allocation5], 1
    %1171 = vsyncpa %s1170, 1

// kernel: conv_network_forward.2
$region0: #{conv_network_forward.2}
  #allocation0 [shape = 'u32[]', space=smem, size = 0x4, offset = 0x4, fixed_abs, tag = 'smem constant byte address 0x4 - core index']
  #allocation1 [shape = 'u32[144,128]{1,0:T(1,128)}', space=vmem, size = 0x12000, scoped, tag = 'internal scratch']
  #allocation2 [shape = 'f32[16,222]{1,0:T(8,128)}', space=vmem, size = 0x4000, scoped, tag = 'scratch operand']
  #allocation3 [shape = 'f32[32,188]{1,0:T(8,128)}', space=vmem, size = 0x8000, scoped, tag = 'scratch operand']
  #allocation4 [shape = 'f32[64,154]{1,0:T(8,128)}', space=vmem, size = 0x10000, scoped, tag = 'scratch operand']
  %s0 = inlined_call_operand.vmem [shape: f32[2,4,256], index: 0, kind: input, shape index: {}]
  %s1 = inlined_call_operand.vmem [shape: bf16[9,16,4], index: 1, kind: input, shape index: {}]
  %s2 = inlined_call_operand.vmem [shape: f32[16,1], index: 2, kind: input, shape index: {}]
  %s3 = inlined_call_operand.vmem [shape: bf16[9,32,16], index: 3, kind: input, shape index: {}]
  %s4 = inlined_call_operand.vmem [shape: f32[32,1], index: 4, kind: input, shape index: {}]
  %s5 = inlined_call_operand.vmem [shape: bf16[9,64,32], index: 5, kind: input, shape index: {}]
  %s6 = inlined_call_operand.vmem [shape: f32[64,1], index: 6, kind: input, shape index: {}]
  %s7 = inlined_call_operand.vmem [shape: f32[2,64,100], index: 7, kind: output, shape index: {}]
  %s8 = sld [smem:[#allocation0]]
  $region61: #{conv_network_forward.2} parent=0
    _
  %s10 = ssub.s32 1, %s8
  %s11 = scalar_select 0, %s10, %s8
  loop: start=0, step=1, limit=4
  $region2: #{conv_network_forward.2} parent=0 // loop_pre_header
    _
  $region3: #{conv_network_forward.2} parent=0 // loop_header
    %s13 = sphi 0, %s17
    %p14 = scmp.ge.s32.totalorder %s13, 4
    %s23 = sphi 0, %s25
    %s26 = sphi 0, %s23
    %s27 = sphi 0, %s26
    %s43 = sphi 0, %s27
    %s47 = sphi 0, %s47
    %s49 = sphi 0, %s47
    %s50 = sphi 0, %s49
    %s64 = sphi 0, %s50
    %s68 = sphi 0, %s68
    %s70 = sphi 0, %s68
    %s71 = sphi 0, %s70
    %s85 = sphi 0, %s71
    %s89 = sphi 0, %s89
    %s91 = sphi 0, %s89
    %s92 = sphi 0, %s91
    %s106 = sphi 0, %s92
    %s110 = sphi 0, %s110
    %s112 = sphi 0, %s110
    %s113 = sphi 0, %s112
    %s127 = sphi 0, %s113
    %s131 = sphi 0, %s131
    %s133 = sphi 0, %s131
    %s134 = sphi 0, %s133
    %s148 = sphi 0, %s134
    %s152 = sphi 0, %s152
    %s154 = sphi 0, %s152
    %s155 = sphi 0, %s154
    %s169 = sphi 0, %s155
    %s175 = sphi 0, %s177
    %s178 = sphi 0, %s175
    %s179 = sphi 0, %s178
    %s195 = sphi 0, %s179
  $region4: #{conv_network_forward.2} parent=0 // loop_header_branch
    %16 = sbr.rel (%p14) target = $region8
  $region5: #{conv_network_forward.2} parent=0 // loop_body
    %s18 = ssub.s32 %s13, 1
    %s19 = ssub.s32 %s13, 2
    %s20 = sadd.s32 %s13, 1
    %s21 = ssub.s32 %s13, %s20
    %p22 = scmp.eq.s32.totalorder %s21, 0
    %s24 = sadd.s32 %s23, 1
    %s25 = scalar_select %p22, %s23, %s24
    %p28 = pneg %p22
    %p29 = scmp.eq.s32.totalorder %s13, 1
    %p30 = por %p28, %p29
    %p31 = scmp.ne.s32.totalorder %s23, %s26
    %p32 = scmp.eq.s32.totalorder %s13, 0
    %p33 = por %p31, %p32
    %p34 = scmp.ne.s32.totalorder %s23, %s26
    %p35 = scmp.eq.s32.totalorder %s18, 1
    %p36 = por %p34, %p35
    %p37 = scmp.ne.s32.totalorder %s26, %s27
    %p38 = scmp.eq.s32.totalorder %s18, 0
    %p39 = por %p37, %p38
    %p40 = scmp.ne.s32.totalorder %s26, %s27
    %p41 = scmp.eq.s32.totalorder %s19, 1
    %p42 = por %p40, %p41
    %p44 = scmp.ne.s32.totalorder %s27, %s43
    %p45 = scmp.eq.s32.totalorder %s19, 0
    %p46 = por %p44, %p45
    %s48 = sadd.s32 %s47, 1
    %p51 = scmp.eq.s32.totalorder %s13, 1
    %p52 = scmp.ne.s32.totalorder %s47, %s49
    %p53 = scmp.eq.s32.totalorder %s13, 0
    %p54 = por %p52, %p53
    %p55 = scmp.ne.s32.totalorder %s47, %s49
    %p56 = scmp.eq.s32.totalorder %s18, 1
    %p57 = por %p55, %p56
    %p58 = scmp.ne.s32.totalorder %s49, %s50
    %p59 = scmp.eq.s32.totalorder %s18, 0
    %p60 = por %p58, %p59
    %p61 = scmp.ne.s32.totalorder %s49, %s50
    %p62 = scmp.eq.s32.totalorder %s19, 1
    %p63 = por %p61, %p62
    %p65 = scmp.ne.s32.totalorder %s50, %s64
    %p66 = scmp.eq.s32.totalorder %s19, 0
    %p67 = por %p65, %p66
    %s69 = sadd.s32 %s68, 1
    %p72 = scmp.eq.s32.totalorder %s13, 1
    %p73 = scmp.ne.s32.totalorder %s68, %s70
    %p74 = scmp.eq.s32.totalorder %s13, 0
    %p75 = por %p73, %p74
    %p76 = scmp.ne.s32.totalorder %s68, %s70
    %p77 = scmp.eq.s32.totalorder %s18, 1
    %p78 = por %p76, %p77
    %p79 = scmp.ne.s32.totalorder %s70, %s71
    %p80 = scmp.eq.s32.totalorder %s18, 0
    %p81 = por %p79, %p80
    %p82 = scmp.ne.s32.totalorder %s70, %s71
    %p83 = scmp.eq.s32.totalorder %s19, 1
    %p84 = por %p82, %p83
    %p86 = scmp.ne.s32.totalorder %s71, %s85
    %p87 = scmp.eq.s32.totalorder %s19, 0
    %p88 = por %p86, %p87
    %s90 = sadd.s32 %s89, 1
    %p93 = scmp.eq.s32.totalorder %s13, 1
    %p94 = scmp.ne.s32.totalorder %s89, %s91
    %p95 = scmp.eq.s32.totalorder %s13, 0
    %p96 = por %p94, %p95
    %p97 = scmp.ne.s32.totalorder %s89, %s91
    %p98 = scmp.eq.s32.totalorder %s18, 1
    %p99 = por %p97, %p98
    %p100 = scmp.ne.s32.totalorder %s91, %s92
    %p101 = scmp.eq.s32.totalorder %s18, 0
    %p102 = por %p100, %p101
    %p103 = scmp.ne.s32.totalorder %s91, %s92
    %p104 = scmp.eq.s32.totalorder %s19, 1
    %p105 = por %p103, %p104
    %p107 = scmp.ne.s32.totalorder %s92, %s106
    %p108 = scmp.eq.s32.totalorder %s19, 0
    %p109 = por %p107, %p108
    %s111 = sadd.s32 %s110, 1
    %p114 = scmp.eq.s32.totalorder %s13, 1
    %p115 = scmp.ne.s32.totalorder %s110, %s112
    %p116 = scmp.eq.s32.totalorder %s13, 0
    %p117 = por %p115, %p116
    %p118 = scmp.ne.s32.totalorder %s110, %s112
    %p119 = scmp.eq.s32.totalorder %s18, 1
    %p120 = por %p118, %p119
    %p121 = scmp.ne.s32.totalorder %s112, %s113
    %p122 = scmp.eq.s32.totalorder %s18, 0
    %p123 = por %p121, %p122
    %p124 = scmp.ne.s32.totalorder %s112, %s113
    %p125 = scmp.eq.s32.totalorder %s19, 1
    %p126 = por %p124, %p125
    %p128 = scmp.ne.s32.totalorder %s113, %s127
    %p129 = scmp.eq.s32.totalorder %s19, 0
    %p130 = por %p128, %p129
    %s132 = sadd.s32 %s131, 1
    %p135 = scmp.eq.s32.totalorder %s13, 1
    %p136 = scmp.ne.s32.totalorder %s131, %s133
    %p137 = scmp.eq.s32.totalorder %s13, 0
    %p138 = por %p136, %p137
    %p139 = scmp.ne.s32.totalorder %s131, %s133
    %p140 = scmp.eq.s32.totalorder %s18, 1
    %p141 = por %p139, %p140
    %p142 = scmp.ne.s32.totalorder %s133, %s134
    %p143 = scmp.eq.s32.totalorder %s18, 0
    %p144 = por %p142, %p143
    %p145 = scmp.ne.s32.totalorder %s133, %s134
    %p146 = scmp.eq.s32.totalorder %s19, 1
    %p147 = por %p145, %p146
    %p149 = scmp.ne.s32.totalorder %s134, %s148
    %p150 = scmp.eq.s32.totalorder %s19, 0
    %p151 = por %p149, %p150
    %s153 = sadd.s32 %s152, 1
    %p156 = scmp.eq.s32.totalorder %s13, 1
    %p157 = scmp.ne.s32.totalorder %s152, %s154
    %p158 = scmp.eq.s32.totalorder %s13, 0
    %p159 = por %p157, %p158
    %p160 = scmp.ne.s32.totalorder %s152, %s154
    %p161 = scmp.eq.s32.totalorder %s18, 1
    %p162 = por %p160, %p161
    %p163 = scmp.ne.s32.totalorder %s154, %s155
    %p164 = scmp.eq.s32.totalorder %s18, 0
    %p165 = por %p163, %p164
    %p166 = scmp.ne.s32.totalorder %s154, %s155
    %p167 = scmp.eq.s32.totalorder %s19, 1
    %p168 = por %p166, %p167
    %p170 = scmp.ne.s32.totalorder %s155, %s169
    %p171 = scmp.eq.s32.totalorder %s19, 0
    %p172 = por %p170, %p171
    %s173 = ssub.s32 %s13, %s20
    %p174 = scmp.eq.s32.totalorder %s173, 0
    %s176 = sadd.s32 %s175, 1
    %s177 = scalar_select %p174, %s175, %s176
    %p180 = pneg %p174
    %p181 = scmp.eq.s32.totalorder %s13, 1
    %p182 = por %p180, %p181
    %p183 = scmp.ne.s32.totalorder %s175, %s178
    %p184 = scmp.eq.s32.totalorder %s13, 0
    %p185 = por %p183, %p184
    %p186 = scmp.ne.s32.totalorder %s175, %s178
    %p187 = scmp.eq.s32.totalorder %s18, 1
    %p188 = por %p186, %p187
    %p189 = scmp.ne.s32.totalorder %s178, %s179
    %p190 = scmp.eq.s32.totalorder %s18, 0
    %p191 = por %p189, %p190
    %p192 = scmp.ne.s32.totalorder %s178, %s179
    %p193 = scmp.eq.s32.totalorder %s19, 1
    %p194 = por %p192, %p193
    %p196 = scmp.ne.s32.totalorder %s179, %s195
    %p197 = scmp.eq.s32.totalorder %s19, 0
    %p198 = por %p196, %p197
    %p199 = scmp.le.s32.totalorder 1, %s13
    %p200 = scmp.lt.s32.totalorder %s13, 3
    %p201 = pnand %p199, %p200
    %p202 = pneg %p201
    // Predicated region
    $region9: #{conv_network_forward.2} parent=5 // pred_check
      _
    $region10: #{conv_network_forward.2} parent=5 // pred_check_branch
      %204 = sbr.rel (%p201) target = $region12
    $region11: #{conv_network_forward.2} parent=5 // pred_region
      %s205 = ssub.s32 %s13, 1
      // Predicated region
      $region13: #{conv_network_forward.2} parent=11 // pred_check
        %p206 = pneg %p60
      $region14: #{conv_network_forward.2} parent=11 // pred_check_branch
        %208 = sbr.rel (%p206) target = $region16
      $region15: #{conv_network_forward.2} parent=11 // pred_region
        _
      $region16: #{conv_network_forward.2} parent=11 // pred_fallthru
        _
      // Predicated region
      $region17: #{conv_network_forward.2} parent=11 // pred_check
        %p209 = pneg %p81
      $region18: #{conv_network_forward.2} parent=11 // pred_check_branch
        %211 = sbr.rel (%p209) target = $region20
      $region19: #{conv_network_forward.2} parent=11 // pred_region
        _
      $region20: #{conv_network_forward.2} parent=11 // pred_fallthru
        _
      // Predicated region
      $region21: #{conv_network_forward.2} parent=11 // pred_check
        %p212 = pneg %p102
      $region22: #{conv_network_forward.2} parent=11 // pred_check_branch
        %214 = sbr.rel (%p212) target = $region24
      $region23: #{conv_network_forward.2} parent=11 // pred_region
        _
      $region24: #{conv_network_forward.2} parent=11 // pred_fallthru
        _
      // Predicated region
      $region25: #{conv_network_forward.2} parent=11 // pred_check
        %p215 = pneg %p123
      $region26: #{conv_network_forward.2} parent=11 // pred_check_branch
        %217 = sbr.rel (%p215) target = $region28
      $region27: #{conv_network_forward.2} parent=11 // pred_region
        _
      $region28: #{conv_network_forward.2} parent=11 // pred_fallthru
        _
      // Predicated region
      $region29: #{conv_network_forward.2} parent=11 // pred_check
        %p218 = pneg %p144
      $region30: #{conv_network_forward.2} parent=11 // pred_check_branch
        %220 = sbr.rel (%p218) target = $region32
      $region31: #{conv_network_forward.2} parent=11 // pred_region
        _
      $region32: #{conv_network_forward.2} parent=11 // pred_fallthru
        _
      // Predicated region
      $region33: #{conv_network_forward.2} parent=11 // pred_check
        %p221 = pneg %p165
      $region34: #{conv_network_forward.2} parent=11 // pred_check_branch
        %223 = sbr.rel (%p221) target = $region36
      $region35: #{conv_network_forward.2} parent=11 // pred_region
        _
      $region36: #{conv_network_forward.2} parent=11 // pred_fallthru
        _
    $region12: #{conv_network_forward.2} parent=5 // pred_fallthru
      _
    %p224 = scmp.lt.s32.totalorder %s13, 2
    // Predicated region
    $region37: #{conv_network_forward.2} parent=5 // pred_check
      %p225 = pneg %p224
    $region38: #{conv_network_forward.2} parent=5 // pred_check_branch
      %227 = sbr.rel (%p225) target = $region40
    $region39: #{conv_network_forward.2} parent=5 // pred_region
      // Predicated region
      $region41: #{conv_network_forward.2} parent=39 // pred_check
        %p228 = pneg %p33
      $region42: #{conv_network_forward.2} parent=39 // pred_check_branch
        %230 = sbr.rel (%p228) target = $region44
      $region43: #{conv_network_forward.2} parent=39 // pred_region
        %p231 = scmp.lt.s32.totalorder %s13, 1
        %s232 = scalar_select %p231, %s13, 1
        %s233 = smul.addr %s232, 2
        %s234 = smul.addr %s233, 4
        %s235 = scalar_lea.vmem %s0, %s234
      $region44: #{conv_network_forward.2} parent=39 // pred_fallthru
        _
    $region40: #{conv_network_forward.2} parent=5 // pred_fallthru
      _
    %p236 = scmp.le.s32.totalorder 1, %s13
    %p237 = scmp.lt.s32.totalorder %s13, 3
    %p238 = pnand %p236, %p237
    %p239 = pneg %p238
    // Predicated region
    $region45: #{conv_network_forward.2} parent=5 // pred_check
      _
    $region46: #{conv_network_forward.2} parent=5 // pred_check_branch
      %241 = sbr.rel (%p238) target = $region48
    $region47: #{conv_network_forward.2} parent=5 // pred_region
      %s242 = ssub.s32 %s13, 1
      %p243 = scmp.lt.s32.totalorder %s18, 1
      %s244 = scalar_select %p243, %s18, 1
      %s245 = smul.addr %s244, 2
      %s246 = smul.addr %s245, 4
      %s247 = scalar_lea.vmem %s0, %s246
      %p248 = pneg %p39
      %p249 = pneg %p36
      %p250 = pneg %p60
      %p251 = pneg %p57
      %p252 = pneg %p81
      %p253 = pneg %p78
      %p254 = pneg %p102
      %p255 = pneg %p99
      %p256 = pneg %p123
      %p257 = pneg %p120
      %p258 = pneg %p144
      %p259 = pneg %p141
      %p260 = pneg %p165
      %p261 = pneg %p162
      %p262 = pneg %p191
      %p263 = pneg %p188
      %p264 = scmp.lt.s32.totalorder %s18, 1
      %s265 = scalar_select %p264, %s18, 1
      %s266 = smul.addr %s265, 8
      %s267 = smul.addr %s266, 8
      %s268 = scalar_lea.vmem %s7, %s267
      %p269 = scmp.lt.s32.totalorder %s18, 1
      %s270 = scalar_select %p269, %s18, 1
      %s271 = smul.addr %s270, 2
      %s272 = smul.addr %s271, 4
      %s273 = scalar_lea.vmem %s0, %s272
      %p274 = scmp.lt.s32.totalorder %s18, 1
      %s275 = scalar_select %p274, %s18, 1
      %s276 = smul.addr %s275, 8
      %s277 = smul.addr %s276, 8
      %s278 = scalar_lea.vmem %s7, %s277
      %v280 = vld [vmem:[%s1] sm:$0xf]
      %v281 = vld [vmem:[%s1 + $0x4] sm:$0xf]
      %v282 = vld [vmem:[%s273] sm:$0xff]
      %v284 = vcombine.high %v282, %v282
      %v286 = vpack.c.bf16 %v282, %v282
      %v287 = vpack.c.bf16 %v284, %v284
      %s288 = scalar_lea.vmem %s1, 8
      %v289 = vld [vmem:[%s288] sm:$0xf]
      %v290 = vld [vmem:[%s288 + $0x4] sm:$0xf]
      %v293 = vunpack.c.l.b16 %v289
      %v294 = vunpack.c.l.b16 %v290
      %v295 = vpack.c.b16 %v294, %v293
      %298 = vrot.lane.b32.xlu0 %v286, 127
      %v299 = vpop.permute.xlu0 %298
      %300 = vrot.lane.b32.xlu0 %v287, 127
      %v301 = vpop.permute.xlu0 %300
      %vm302 = vcmask 1039360
      %v303 = vsel %vm302, %v299, %v301
      %vm304 = vcmask 31744
      %v306 = vsel %vm304, %v295, 0
      %vm308 = vcmask 1041408
      %v310 = vsel %vm308, %v303, 0
      %v313 = vsel %vm308, %v301, 0
      %315 = vmatprep.subr.bf16.mxu0 %v313
      %316 = vmatpush1.bf16.msra.mxu0 %v310
      %317 = vmatprep.subr.bf16.mxu0 0
      %318 = vmatpush1.bf16.msra.mxu0 0
      %319 = vmatprep.subr.bf16.mxu0 0
      %320 = vmatpush1.bf16.msra.mxu0 0
      %321 = vmatprep.subr.bf16.mxu0 0
      %322 = vmatpush1.bf16.msra.mxu0 0
      %323 = vmatprep.subr.bf16.mxu0 0
      %324 = vmatpush1.bf16.msra.mxu0 0
      %325 = vmatprep.subr.bf16.mxu0 0
      %326 = vmatpush1.bf16.msra.mxu0 0
      %327 = vmatprep.subr.bf16.mxu0 0
      %328 = vmatpush1.bf16.msra.mxu0 0
      %329 = vmatprep.subr.bf16.mxu0 0
      %330 = vmatpush1.bf16.msra.mxu0 0
      %331 = vmatprep.subr.bf16.mxu0 0
      %332 = vmatpush1.bf16.msra.mxu0 0
      %333 = vmatprep.subr.bf16.mxu0 0
      %334 = vmatpush1.bf16.msra.mxu0 0
      %335 = vmatprep.subr.bf16.mxu0 0
      %336 = vmatpush1.bf16.msra.mxu0 0
      %337 = vmatprep.subr.bf16.mxu0 0
      %338 = vmatpush1.bf16.msra.mxu0 0
      %339 = vmatprep.subr.bf16.mxu0 0
      %340 = vmatpush1.bf16.msra.mxu0 0
      %341 = vmatprep.subr.bf16.mxu0 0
      %342 = vmatpush1.bf16.msra.mxu0 0
      %343 = vmatprep.subr.bf16.mxu0 0
      %344 = vmatpush1.bf16.msra.mxu0 0
      %345 = vmatprep.subr.bf16.mxu0 0
      %346 = vmatpush1.bf16.msra.mxu0 0
      %347 = vmatprep.mubr.bf16.mxu0 0
      %348 = vmatmul.mubr.bf16.gmra.mrb[0].mxu0 %v306
      %v349 = vpop.f32.mrb[0].mxu0
      %v350 = vadd.f32 0.0, %v349
      %v351 = vpop.f32.mrb[0].mxu0
      %v352 = vadd.f32 0.0, %v351
      %v353 = vpop.f32.mrb[0].mxu0
      %v354 = vadd.f32 0.0, %v353
      %v355 = vpop.f32.mrb[0].mxu0
      %v356 = vadd.f32 0.0, %v355
      %357 = vdwg.mxu0
      %v360 = vunpack.c.l.b16 %v280
      %v361 = vunpack.c.l.b16 %v281
      %v362 = vpack.c.b16 %v361, %v360
      %v364 = vsel %vm304, %v362, 0
      %v367 = vsel %vm308, %v286, 0
      %v370 = vsel %vm308, %v287, 0
      %372 = vmatprep.subr.bf16.mxu0 %v370
      %373 = vmatpush1.bf16.msra.mxu0 %v367
      %374 = vmatprep.subr.bf16.mxu0 0
      %375 = vmatpush1.bf16.msra.mxu0 0
      %376 = vmatprep.subr.bf16.mxu0 0
      %377 = vmatpush1.bf16.msra.mxu0 0
      %378 = vmatprep.subr.bf16.mxu0 0
      %379 = vmatpush1.bf16.msra.mxu0 0
      %380 = vmatprep.subr.bf16.mxu0 0
      %381 = vmatpush1.bf16.msra.mxu0 0
      %382 = vmatprep.subr.bf16.mxu0 0
      %383 = vmatpush1.bf16.msra.mxu0 0
      %384 = vmatprep.subr.bf16.mxu0 0
      %385 = vmatpush1.bf16.msra.mxu0 0
      %386 = vmatprep.subr.bf16.mxu0 0
      %387 = vmatpush1.bf16.msra.mxu0 0
      %388 = vmatprep.subr.bf16.mxu0 0
      %389 = vmatpush1.bf16.msra.mxu0 0
      %390 = vmatprep.subr.bf16.mxu0 0
      %391 = vmatpush1.bf16.msra.mxu0 0
      %392 = vmatprep.subr.bf16.mxu0 0
      %393 = vmatpush1.bf16.msra.mxu0 0
      %394 = vmatprep.subr.bf16.mxu0 0
      %395 = vmatpush1.bf16.msra.mxu0 0
      %396 = vmatprep.subr.bf16.mxu0 0
      %397 = vmatpush1.bf16.msra.mxu0 0
      %398 = vmatprep.subr.bf16.mxu0 0
      %399 = vmatpush1.bf16.msra.mxu0 0
      %400 = vmatprep.subr.bf16.mxu0 0
      %401 = vmatpush1.bf16.msra.mxu0 0
      %402 = vmatprep.subr.bf16.mxu0 0
      %403 = vmatpush1.bf16.msra.mxu0 0
      %404 = vmatprep.mubr.bf16.mxu0 0
      %405 = vmatmul.mubr.bf16.gmra.mrb[0].mxu0 %v364
      %v406 = vpop.f32.mrb[0].mxu0
      %v407 = vadd.f32 %v350, %v406
      %v408 = vpop.f32.mrb[0].mxu0
      %v409 = vadd.f32 %v352, %v408
      %v410 = vpop.f32.mrb[0].mxu0
      %v411 = vadd.f32 %v354, %v410
      %v412 = vpop.f32.mrb[0].mxu0
      %v413 = vadd.f32 %v356, %v412
      %414 = vdwg.mxu0
      %s415 = scalar_lea.vmem %s1, 16
      %v416 = vld [vmem:[%s415] sm:$0xf]
      %v417 = vld [vmem:[%s415 + $0x4] sm:$0xf]
      %v418 = vld [vmem:[%s273] sm:$0xff]
      %v420 = vcombine.high %v418, %v418
      %v422 = vpack.c.bf16 %v418, %v418
      %v423 = vpack.c.bf16 %v420, %v420
      %v426 = vunpack.c.l.b16 %v416
      %v427 = vunpack.c.l.b16 %v417
      %v428 = vpack.c.b16 %v427, %v426
      %431 = vrot.lane.b32.xlu0 %v422, 126
      %v432 = vpop.permute.xlu0 %431
      %433 = vrot.lane.b32.xlu0 %v423, 126
      %v434 = vpop.permute.xlu0 %433
      %vm435 = vcmask 1031168
      %v436 = vsel %vm435, %v432, %v434
      %v438 = vsel %vm304, %v428, 0
      %v441 = vsel %vm308, %v436, 0
      %v444 = vsel %vm308, %v434, 0
      %446 = vmatprep.subr.bf16.mxu0 %v444
      %447 = vmatpush1.bf16.msra.mxu0 %v441
      %448 = vmatprep.subr.bf16.mxu0 0
      %449 = vmatpush1.bf16.msra.mxu0 0
      %450 = vmatprep.subr.bf16.mxu0 0
      %451 = vmatpush1.bf16.msra.mxu0 0
      %452 = vmatprep.subr.bf16.mxu0 0
      %453 = vmatpush1.bf16.msra.mxu0 0
      %454 = vmatprep.subr.bf16.mxu0 0
      %455 = vmatpush1.bf16.msra.mxu0 0
      %456 = vmatprep.subr.bf16.mxu0 0
      %457 = vmatpush1.bf16.msra.mxu0 0
      %458 = vmatprep.subr.bf16.mxu0 0
      %459 = vmatpush1.bf16.msra.mxu0 0
      %460 = vmatprep.subr.bf16.mxu0 0
      %461 = vmatpush1.bf16.msra.mxu0 0
      %462 = vmatprep.subr.bf16.mxu0 0
      %463 = vmatpush1.bf16.msra.mxu0 0
      %464 = vmatprep.subr.bf16.mxu0 0
      %465 = vmatpush1.bf16.msra.mxu0 0
      %466 = vmatprep.subr.bf16.mxu0 0
      %467 = vmatpush1.bf16.msra.mxu0 0
      %468 = vmatprep.subr.bf16.mxu0 0
      %469 = vmatpush1.bf16.msra.mxu0 0
      %470 = vmatprep.subr.bf16.mxu0 0
      %471 = vmatpush1.bf16.msra.mxu0 0
      %472 = vmatprep.subr.bf16.mxu0 0
      %473 = vmatpush1.bf16.msra.mxu0 0
      %474 = vmatprep.subr.bf16.mxu0 0
      %475 = vmatpush1.bf16.msra.mxu0 0
      %476 = vmatprep.subr.bf16.mxu0 0
      %477 = vmatpush1.bf16.msra.mxu0 0
      %478 = vmatprep.mubr.bf16.mxu0 0
      %479 = vmatmul.mubr.bf16.gmra.mrb[0].mxu0 %v438
      %v480 = vpop.f32.mrb[0].mxu0
      %v481 = vadd.f32 0.0, %v480
      %v482 = vpop.f32.mrb[0].mxu0
      %v483 = vadd.f32 0.0, %v482
      %v484 = vpop.f32.mrb[0].mxu0
      %v485 = vadd.f32 0.0, %v484
      %v486 = vpop.f32.mrb[0].mxu0
      %v487 = vadd.f32 0.0, %v486
      %488 = vdwg.mxu0
      %v489 = vadd.f32 %v407, %v481
      %v490 = vadd.f32 %v409, %v483
      %v491 = vadd.f32 %v411, %v485
      %v492 = vadd.f32 %v413, %v487
      %s493 = scalar_lea.vmem %s1, 24
      %v494 = vld [vmem:[%s493] sm:$0xf]
      %v495 = vld [vmem:[%s493 + $0x4] sm:$0xf]
      %v496 = vld [vmem:[%s273] sm:$0xff]
      %v498 = vcombine.high %v496, %v496
      %v500 = vpack.c.bf16 %v496, %v496
      %v501 = vpack.c.bf16 %v498, %v498
      %v504 = vunpack.c.l.b16 %v494
      %v505 = vunpack.c.l.b16 %v495
      %v506 = vpack.c.b16 %v505, %v504
      %509 = vrot.lane.b32.xlu0 %v500, 112
      %v510 = vpop.permute.xlu0 %509
      %511 = vrot.lane.b32.xlu0 %v501, 112
      %v512 = vpop.permute.xlu0 %511
      %vm513 = vcmask 916480
      %v514 = vsel %vm513, %v510, %v512
      %v516 = vsel %vm304, %v506, 0
      %v519 = vsel %vm308, %v514, 0
      %v522 = vsel %vm308, %v512, 0
      %524 = vmatprep.subr.bf16.mxu0 %v522
      %525 = vmatpush1.bf16.msra.mxu0 %v519
      %526 = vmatprep.subr.bf16.mxu0 0
      %527 = vmatpush1.bf16.msra.mxu0 0
      %528 = vmatprep.subr.bf16.mxu0 0
      %529 = vmatpush1.bf16.msra.mxu0 0
      %530 = vmatprep.subr.bf16.mxu0 0
      %531 = vmatpush1.bf16.msra.mxu0 0
      %532 = vmatprep.subr.bf16.mxu0 0
      %533 = vmatpush1.bf16.msra.mxu0 0
      %534 = vmatprep.subr.bf16.mxu0 0
      %535 = vmatpush1.bf16.msra.mxu0 0
      %536 = vmatprep.subr.bf16.mxu0 0
      %537 = vmatpush1.bf16.msra.mxu0 0
      %538 = vmatprep.subr.bf16.mxu0 0
      %539 = vmatpush1.bf16.msra.mxu0 0
      %540 = vmatprep.subr.bf16.mxu0 0
      %541 = vmatpush1.bf16.msra.mxu0 0
      %542 = vmatprep.subr.bf16.mxu0 0
      %543 = vmatpush1.bf16.msra.mxu0 0
      %544 = vmatprep.subr.bf16.mxu0 0
      %545 = vmatpush1.bf16.msra.mxu0 0
      %546 = vmatprep.subr.bf16.mxu0 0
      %547 = vmatpush1.bf16.msra.mxu0 0
      %548 = vmatprep.subr.bf16.mxu0 0
      %549 = vmatpush1.bf16.msra.mxu0 0
      %550 = vmatprep.subr.bf16.mxu0 0
      %551 = vmatpush1.bf16.msra.mxu0 0
      %552 = vmatprep.subr.bf16.mxu0 0
      %553 = vmatpush1.bf16.msra.mxu0 0
      %554 = vmatprep.subr.bf16.mxu0 0
      %555 = vmatpush1.bf16.msra.mxu0 0
      %556 = vmatprep.mubr.bf16.mxu0 0
      %557 = vmatmul.mubr.bf16.gmra.mrb[0].mxu0 %v516
      %v558 = vpop.f32.mrb[0].mxu0
      %v559 = vadd.f32 0.0, %v558
      %v560 = vpop.f32.mrb[0].mxu0
      %v561 = vadd.f32 0.0, %v560
      %v562 = vpop.f32.mrb[0].mxu0
      %v563 = vadd.f32 0.0, %v562
      %v564 = vpop.f32.mrb[0].mxu0
      %v565 = vadd.f32 0.0, %v564
      %566 = vdwg.mxu0
      %v567 = vadd.f32 %v489, %v559
      %v568 = vadd.f32 %v490, %v561
      %v569 = vadd.f32 %v491, %v563
      %v570 = vadd.f32 %v492, %v565
      %s571 = scalar_lea.vmem %s1, 32
      %v572 = vld [vmem:[%s571] sm:$0xf]
      %v573 = vld [vmem:[%s571 + $0x4] sm:$0xf]
      %v574 = vld [vmem:[%s273] sm:$0xff]
      %v576 = vcombine.high %v574, %v574
      %v578 = vpack.c.bf16 %v574, %v574
      %v579 = vpack.c.bf16 %v576, %v576
      %v582 = vunpack.c.l.b16 %v572
      %v583 = vunpack.c.l.b16 %v573
      %v584 = vpack.c.b16 %v583, %v582
      %587 = vrot.lane.b32.xlu0 %v578, 111
      %v588 = vpop.permute.xlu0 %587
      %589 = vrot.lane.b32.xlu0 %v579, 111
      %v590 = vpop.permute.xlu0 %589
      %vm591 = vcmask 908288
      %v592 = vsel %vm591, %v588, %v590
      %v594 = vsel %vm304, %v584, 0
      %v597 = vsel %vm308, %v592, 0
      %v600 = vsel %vm308, %v590, 0
      %602 = vmatprep.subr.bf16.mxu0 %v600
      %603 = vmatpush1.bf16.msra.mxu0 %v597
      %604 = vmatprep.subr.bf16.mxu0 0
      %605 = vmatpush1.bf16.msra.mxu0 0
      %606 = vmatprep.subr.bf16.mxu0 0
      %607 = vmatpush1.bf16.msra.mxu0 0
      %608 = vmatprep.subr.bf16.mxu0 0
      %609 = vmatpush1.bf16.msra.mxu0 0
      %610 = vmatprep.subr.bf16.mxu0 0
      %611 = vmatpush1.bf16.msra.mxu0 0
      %612 = vmatprep.subr.bf16.mxu0 0
      %613 = vmatpush1.bf16.msra.mxu0 0
      %614 = vmatprep.subr.bf16.mxu0 0
      %615 = vmatpush1.bf16.msra.mxu0 0
      %616 = vmatprep.subr.bf16.mxu0 0
      %617 = vmatpush1.bf16.msra.mxu0 0
      %618 = vmatprep.subr.bf16.mxu0 0
      %619 = vmatpush1.bf16.msra.mxu0 0
      %620 = vmatprep.subr.bf16.mxu0 0
      %621 = vmatpush1.bf16.msra.mxu0 0
      %622 = vmatprep.subr.bf16.mxu0 0
      %623 = vmatpush1.bf16.msra.mxu0 0
      %624 = vmatprep.subr.bf16.mxu0 0
      %625 = vmatpush1.bf16.msra.mxu0 0
      %626 = vmatprep.subr.bf16.mxu0 0
      %627 = vmatpush1.bf16.msra.mxu0 0
      %628 = vmatprep.subr.bf16.mxu0 0
      %629 = vmatpush1.bf16.msra.mxu0 0
      %630 = vmatprep.subr.bf16.mxu0 0
      %631 = vmatpush1.bf16.msra.mxu0 0
      %632 = vmatprep.subr.bf16.mxu0 0
      %633 = vmatpush1.bf16.msra.mxu0 0
      %634 = vmatprep.mubr.bf16.mxu0 0
      %635 = vmatmul.mubr.bf16.gmra.mrb[0].mxu0 %v594
      %v636 = vpop.f32.mrb[0].mxu0
      %v637 = vadd.f32 0.0, %v636
      %v638 = vpop.f32.mrb[0].mxu0
      %v639 = vadd.f32 0.0, %v638
      %v640 = vpop.f32.mrb[0].mxu0
      %v641 = vadd.f32 0.0, %v640
      %v642 = vpop.f32.mrb[0].mxu0
      %v643 = vadd.f32 0.0, %v642
      %644 = vdwg.mxu0
      %v645 = vadd.f32 %v567, %v637
      %v646 = vadd.f32 %v568, %v639
      %v647 = vadd.f32 %v569, %v641
      %v648 = vadd.f32 %v570, %v643
      %s649 = scalar_lea.vmem %s1, 40
      %v650 = vld [vmem:[%s649] sm:$0xf]
      %v651 = vld [vmem:[%s649 + $0x4] sm:$0xf]
      %v652 = vld [vmem:[%s273] sm:$0xff]
      %v654 = vcombine.high %v652, %v652
      %v656 = vpack.c.bf16 %v652, %v652
      %v657 = vpack.c.bf16 %v654, %v654
      %v660 = vunpack.c.l.b16 %v650
      %v661 = vunpack.c.l.b16 %v651
      %v662 = vpack.c.b16 %v661, %v660
      %665 = vrot.lane.b32.xlu0 %v656, 110
      %v666 = vpop.permute.xlu0 %665
      %667 = vrot.lane.b32.xlu0 %v657, 110
      %v668 = vpop.permute.xlu0 %667
      %vm669 = vcmask 900096
      %v670 = vsel %vm669, %v666, %v668
      %v672 = vsel %vm304, %v662, 0
      %v675 = vsel %vm308, %v670, 0
      %v678 = vsel %vm308, %v668, 0
      %680 = vmatprep.subr.bf16.mxu0 %v678
      %681 = vmatpush1.bf16.msra.mxu0 %v675
      %682 = vmatprep.subr.bf16.mxu0 0
      %683 = vmatpush1.bf16.msra.mxu0 0
      %684 = vmatprep.subr.bf16.mxu0 0
      %685 = vmatpush1.bf16.msra.mxu0 0
      %686 = vmatprep.subr.bf16.mxu0 0
      %687 = vmatpush1.bf16.msra.mxu0 0
      %688 = vmatprep.subr.bf16.mxu0 0
      %689 = vmatpush1.bf16.msra.mxu0 0
      %690 = vmatprep.subr.bf16.mxu0 0
      %691 = vmatpush1.bf16.msra.mxu0 0
      %692 = vmatprep.subr.bf16.mxu0 0
      %693 = vmatpush1.bf16.msra.mxu0 0
      %694 = vmatprep.subr.bf16.mxu0 0
      %695 = vmatpush1.bf16.msra.mxu0 0
      %696 = vmatprep.subr.bf16.mxu0 0
      %697 = vmatpush1.bf16.msra.mxu0 0
      %698 = vmatprep.subr.bf16.mxu0 0
      %699 = vmatpush1.bf16.msra.mxu0 0
      %700 = vmatprep.subr.bf16.mxu0 0
      %701 = vmatpush1.bf16.msra.mxu0 0
      %702 = vmatprep.subr.bf16.mxu0 0
      %703 = vmatpush1.bf16.msra.mxu0 0
      %704 = vmatprep.subr.bf16.mxu0 0
      %705 = vmatpush1.bf16.msra.mxu0 0
      %706 = vmatprep.subr.bf16.mxu0 0
      %707 = vmatpush1.bf16.msra.mxu0 0
      %708 = vmatprep.subr.bf16.mxu0 0
      %709 = vmatpush1.bf16.msra.mxu0 0
      %710 = vmatprep.subr.bf16.mxu0 0
      %711 = vmatpush1.bf16.msra.mxu0 0
      %712 = vmatprep.mubr.bf16.mxu0 0
      %713 = vmatmul.mubr.bf16.gmra.mrb[0].mxu0 %v672
      %v714 = vpop.f32.mrb[0].mxu0
      %v715 = vadd.f32 0.0, %v714
      %v716 = vpop.f32.mrb[0].mxu0
      %v717 = vadd.f32 0.0, %v716
      %v718 = vpop.f32.mrb[0].mxu0
      %v719 = vadd.f32 0.0, %v718
      %v720 = vpop.f32.mrb[0].mxu0
      %v721 = vadd.f32 0.0, %v720
      %722 = vdwg.mxu0
      %v723 = vadd.f32 %v645, %v715
      %v724 = vadd.f32 %v646, %v717
      %v725 = vadd.f32 %v647, %v719
      %v726 = vadd.f32 %v648, %v721
      %s727 = scalar_lea.vmem %s1, 48
      %v728 = vld [vmem:[%s727] sm:$0xf]
      %v729 = vld [vmem:[%s727 + $0x4] sm:$0xf]
      %v730 = vld [vmem:[%s273] sm:$0xff]
      %v732 = vcombine.high %v730, %v730
      %v734 = vpack.c.bf16 %v730, %v730
      %v735 = vpack.c.bf16 %v732, %v732
      %v738 = vunpack.c.l.b16 %v728
      %v739 = vunpack.c.l.b16 %v729
      %v740 = vpack.c.b16 %v739, %v738
      %743 = vrot.lane.b32.xlu0 %v734, 96
      %v744 = vpop.permute.xlu0 %743
      %745 = vrot.lane.b32.xlu0 %v735, 96
      %v746 = vpop.permute.xlu0 %745
      %vm747 = vcmask 785408
      %v748 = vsel %vm747, %v744, %v746
      %v750 = vsel %vm304, %v740, 0
      %v753 = vsel %vm308, %v748, 0
      %v756 = vsel %vm308, %v746, 0
      %758 = vmatprep.subr.bf16.mxu0 %v756
      %759 = vmatpush1.bf16.msra.mxu0 %v753
      %760 = vmatprep.subr.bf16.mxu0 0
      %761 = vmatpush1.bf16.msra.mxu0 0
      %762 = vmatprep.subr.bf16.mxu0 0
      %763 = vmatpush1.bf16.msra.mxu0 0
      %764 = vmatprep.subr.bf16.mxu0 0
      %765 = vmatpush1.bf16.msra.mxu0 0
      %766 = vmatprep.subr.bf16.mxu0 0
      %767 = vmatpush1.bf16.msra.mxu0 0
      %768 = vmatprep.subr.bf16.mxu0 0
      %769 = vmatpush1.bf16.msra.mxu0 0
      %770 = vmatprep.subr.bf16.mxu0 0
      %771 = vmatpush1.bf16.msra.mxu0 0
      %772 = vmatprep.subr.bf16.mxu0 0
      %773 = vmatpush1.bf16.msra.mxu0 0
      %774 = vmatprep.subr.bf16.mxu0 0
      %775 = vmatpush1.bf16.msra.mxu0 0
      %776 = vmatprep.subr.bf16.mxu0 0
      %777 = vmatpush1.bf16.msra.mxu0 0
      %778 = vmatprep.subr.bf16.mxu0 0
      %779 = vmatpush1.bf16.msra.mxu0 0
      %780 = vmatprep.subr.bf16.mxu0 0
      %781 = vmatpush1.bf16.msra.mxu0 0
      %782 = vmatprep.subr.bf16.mxu0 0
      %783 = vmatpush1.bf16.msra.mxu0 0
      %784 = vmatprep.subr.bf16.mxu0 0
      %785 = vmatpush1.bf16.msra.mxu0 0
      %786 = vmatprep.subr.bf16.mxu0 0
      %787 = vmatpush1.bf16.msra.mxu0 0
      %788 = vmatprep.subr.bf16.mxu0 0
      %789 = vmatpush1.bf16.msra.mxu0 0
      %790 = vmatprep.mubr.bf16.mxu0 0
      %791 = vmatmul.mubr.bf16.gmra.mrb[0].mxu0 %v750
      %v792 = vpop.f32.mrb[0].mxu0
      %v793 = vadd.f32 0.0, %v792
      %v794 = vpop.f32.mrb[0].mxu0
      %v795 = vadd.f32 0.0, %v794
      %v796 = vpop.f32.mrb[0].mxu0
      %v797 = vadd.f32 0.0, %v796
      %v798 = vpop.f32.mrb[0].mxu0
      %v799 = vadd.f32 0.0, %v798
      %800 = vdwg.mxu0
      %v801 = vadd.f32 %v723, %v793
      %v802 = vadd.f32 %v724, %v795
      %v803 = vadd.f32 %v725, %v797
      %v804 = vadd.f32 %v726, %v799
      %s805 = scalar_lea.vmem %s1, 56
      %v806 = vld [vmem:[%s805] sm:$0xf]
      %v807 = vld [vmem:[%s805 + $0x4] sm:$0xf]
      %v808 = vld [vmem:[%s273] sm:$0xff]
      %v810 = vcombine.high %v808, %v808
      %v812 = vpack.c.bf16 %v808, %v808
      %v813 = vpack.c.bf16 %v810, %v810
      %v816 = vunpack.c.l.b16 %v806
      %v817 = vunpack.c.l.b16 %v807
      %v818 = vpack.c.b16 %v817, %v816
      %821 = vrot.lane.b32.xlu0 %v812, 95
      %v822 = vpop.permute.xlu0 %821
      %823 = vrot.lane.b32.xlu0 %v813, 95
      %v824 = vpop.permute.xlu0 %823
      %vm825 = vcmask 777216
      %v826 = vsel %vm825, %v822, %v824
      %v828 = vsel %vm304, %v818, 0
      %v831 = vsel %vm308, %v826, 0
      %v834 = vsel %vm308, %v824, 0
      %836 = vmatprep.subr.bf16.mxu0 %v834
      %837 = vmatpush1.bf16.msra.mxu0 %v831
      %838 = vmatprep.subr.bf16.mxu0 0
      %839 = vmatpush1.bf16.msra.mxu0 0
      %840 = vmatprep.subr.bf16.mxu0 0
      %841 = vmatpush1.bf16.msra.mxu0 0
      %842 = vmatprep.subr.bf16.mxu0 0
      %843 = vmatpush1.bf16.msra.mxu0 0
      %844 = vmatprep.subr.bf16.mxu0 0
      %845 = vmatpush1.bf16.msra.mxu0 0
      %846 = vmatprep.subr.bf16.mxu0 0
      %847 = vmatpush1.bf16.msra.mxu0 0
      %848 = vmatprep.subr.bf16.mxu0 0
      %849 = vmatpush1.bf16.msra.mxu0 0
      %850 = vmatprep.subr.bf16.mxu0 0
      %851 = vmatpush1.bf16.msra.mxu0 0
      %852 = vmatprep.subr.bf16.mxu0 0
      %853 = vmatpush1.bf16.msra.mxu0 0
      %854 = vmatprep.subr.bf16.mxu0 0
      %855 = vmatpush1.bf16.msra.mxu0 0
      %856 = vmatprep.subr.bf16.mxu0 0
      %857 = vmatpush1.bf16.msra.mxu0 0
      %858 = vmatprep.subr.bf16.mxu0 0
      %859 = vmatpush1.bf16.msra.mxu0 0
      %860 = vmatprep.subr.bf16.mxu0 0
      %861 = vmatpush1.bf16.msra.mxu0 0
      %862 = vmatprep.subr.bf16.mxu0 0
      %863 = vmatpush1.bf16.msra.mxu0 0
      %864 = vmatprep.subr.bf16.mxu0 0
      %865 = vmatpush1.bf16.msra.mxu0 0
      %866 = vmatprep.subr.bf16.mxu0 0
      %867 = vmatpush1.bf16.msra.mxu0 0
      %868 = vmatprep.mubr.bf16.mxu0 0
      %869 = vmatmul.mubr.bf16.gmra.mrb[0].mxu0 %v828
      %v870 = vpop.f32.mrb[0].mxu0
      %v871 = vadd.f32 0.0, %v870
      %v872 = vpop.f32.mrb[0].mxu0
      %v873 = vadd.f32 0.0, %v872
      %v874 = vpop.f32.mrb[0].mxu0
      %v875 = vadd.f32 0.0, %v874
      %v876 = vpop.f32.mrb[0].mxu0
      %v877 = vadd.f32 0.0, %v876
      %878 = vdwg.mxu0
      %v879 = vadd.f32 %v801, %v871
      %v880 = vadd.f32 %v802, %v873
      %v881 = vadd.f32 %v803, %v875
      %v882 = vadd.f32 %v804, %v877
      %s883 = scalar_lea.vmem %s1, 64
      %v884 = vld [vmem:[%s883] sm:$0xf]
      %v885 = vld [vmem:[%s883 + $0x4] sm:$0xf]
      %v886 = vld [vmem:[%s273] sm:$0xff]
      %v888 = vcombine.high %v886, %v886
      %v890 = vpack.c.bf16 %v886, %v886
      %v891 = vpack.c.bf16 %v888, %v888
      %v894 = vunpack.c.l.b16 %v884
      %v895 = vunpack.c.l.b16 %v885
      %v896 = vpack.c.b16 %v895, %v894
      %899 = vrot.lane.b32.xlu0 %v890, 94
      %v900 = vpop.permute.xlu0 %899
      %901 = vrot.lane.b32.xlu0 %v891, 94
      %v902 = vpop.permute.xlu0 %901
      %vm903 = vcmask 769024
      %v904 = vsel %vm903, %v900, %v902
      %v906 = vsel %vm304, %v896, 0
      %v909 = vsel %vm308, %v904, 0
      %v912 = vsel %vm308, %v902, 0
      %914 = vmatprep.subr.bf16.mxu0 %v912
      %915 = vmatpush1.bf16.msra.mxu0 %v909
      %916 = vmatprep.subr.bf16.mxu0 0
      %917 = vmatpush1.bf16.msra.mxu0 0
      %918 = vmatprep.subr.bf16.mxu0 0
      %919 = vmatpush1.bf16.msra.mxu0 0
      %920 = vmatprep.subr.bf16.mxu0 0
      %921 = vmatpush1.bf16.msra.mxu0 0
      %922 = vmatprep.subr.bf16.mxu0 0
      %923 = vmatpush1.bf16.msra.mxu0 0
      %924 = vmatprep.subr.bf16.mxu0 0
      %925 = vmatpush1.bf16.msra.mxu0 0
      %926 = vmatprep.subr.bf16.mxu0 0
      %927 = vmatpush1.bf16.msra.mxu0 0
      %928 = vmatprep.subr.bf16.mxu0 0
      %929 = vmatpush1.bf16.msra.mxu0 0
      %930 = vmatprep.subr.bf16.mxu0 0
      %931 = vmatpush1.bf16.msra.mxu0 0
      %932 = vmatprep.subr.bf16.mxu0 0
      %933 = vmatpush1.bf16.msra.mxu0 0
      %934 = vmatprep.subr.bf16.mxu0 0
      %935 = vmatpush1.bf16.msra.mxu0 0
      %936 = vmatprep.subr.bf16.mxu0 0
      %937 = vmatpush1.bf16.msra.mxu0 0
      %938 = vmatprep.subr.bf16.mxu0 0
      %939 = vmatpush1.bf16.msra.mxu0 0
      %940 = vmatprep.subr.bf16.mxu0 0
      %941 = vmatpush1.bf16.msra.mxu0 0
      %942 = vmatprep.subr.bf16.mxu0 0
      %943 = vmatpush1.bf16.msra.mxu0 0
      %944 = vmatprep.subr.bf16.mxu0 0
      %945 = vmatpush1.bf16.msra.mxu0 0
      %946 = vmatprep.mubr.bf16.mxu0 0
      %947 = vmatmul.mubr.bf16.gmra.mrb[0].mxu0 %v906
      %v948 = vpop.f32.mrb[0].mxu0
      %v949 = vadd.f32 0.0, %v948
      %v950 = vpop.f32.mrb[0].mxu0
      %v951 = vadd.f32 0.0, %v950
      %v952 = vpop.f32.mrb[0].mxu0
      %v953 = vadd.f32 0.0, %v952
      %v954 = vpop.f32.mrb[0].mxu0
      %v955 = vadd.f32 0.0, %v954
      %956 = vdwg.mxu0
      %v957 = vadd.f32 %v879, %v949
      %v958 = vadd.f32 %v880, %v951
      %v959 = vadd.f32 %v881, %v953
      %v960 = vadd.f32 %v882, %v955
      %v961 = vld [vmem:[%s2] sm:$0xff]
      %v962 = vld [vmem:[%s2 + $0x8] sm:$0xff]
      %964 = vset.pattern.permute.xlu0 0
      %965 = vperm.xlu0 %964, %v961
      %v966 = vpop.permute.xlu0 %965
      %969 = vset.pattern.permute.xlu0 0
      %970 = vperm.xlu0 %969, %v962
      %v971 = vpop.permute.xlu0 %970
      %v973 = vadd.f32 %v957, %v966
      %v974 = vadd.f32 %v958, %v966
      %v975 = vadd.f32 %v959, %v971
      %v976 = vadd.f32 %v960, %v971
      %v977 = vmax.f32 %v973, 0.0
      %v978 = vmax.f32 %v974, 0.0
      %v979 = vmax.f32 %v975, 0.0
      %v980 = vmax.f32 %v976, 0.0
      %981 = vst [vmem:[#allocation2] sm:$0xff] %v977
      %vm982 = vcmask 769024
      %983 = vst.msk [vmem:[#allocation2 + $0x8] sm:$0xff] %vm982, %v978
      %984 = vst [vmem:[#allocation2 + $0x10] sm:$0xff] %v979
      %985 = vst.msk [vmem:[#allocation2 + $0x18] sm:$0xff] %vm982, %v980
      %v986 = vld [vmem:[%s3] sm:$0xf]
      %v987 = vld [vmem:[%s3 + $0x4] sm:$0xf]
      %v988 = vld [vmem:[%s3 + $0x8] sm:$0xf]
      %v989 = vld [vmem:[%s3 + $0xc] sm:$0xf]
      %v990 = vld [vmem:[#allocation2] sm:$0xff]
      %v991 = vld [vmem:[#allocation2 + $0x8] sm:$0xff]
      %v992 = vld [vmem:[#allocation2 + $0x10] sm:$0xff]
      %v993 = vld [vmem:[#allocation2 + $0x18] sm:$0xff]
      %v994 = vpack.c.bf16 %v992, %v990
      %v995 = vpack.c.bf16 %v993, %v991
      %s996 = scalar_lea.vmem %s3, 16
      %v997 = vld [vmem:[%s996] sm:$0xf]
      %v998 = vld [vmem:[%s996 + $0x4] sm:$0xf]
      %v999 = vld [vmem:[%s996 + $0x8] sm:$0xf]
      %v1000 = vld [vmem:[%s996 + $0xc] sm:$0xf]
      %v1005 = vunpack.c.l.b16 %v997
      %v1006 = vunpack.c.l.b16 %v998
      %v1007 = vunpack.c.l.b16 %v999
      %v1008 = vunpack.c.l.b16 %v1000
      %v1009 = vpack.c.b16 %v1006, %v1005
      %v1010 = vpack.c.b16 %v1008, %v1007
      %1013 = vrot.lane.b32.xlu0 %v994, 127
      %v1014 = vpop.permute.xlu0 %1013
      %1015 = vrot.lane.b32.xlu0 %v995, 127
      %v1016 = vpop.permute.xlu0 %1015
      %v1017 = vsel %vm302, %v1014, %v1016
      %vm1020 = vcmask 130048
      %v1022 = vsel %vm1020, %v1009, 0
      %v1025 = vsel %vm1020, %v1010, 0
      %1027 = vmatprep.subr.bf16.mxu0 %v1016
      %1028 = vmatpush1.bf16.msra.mxu0 %v1017
      %1029 = vmatprep.subr.bf16.mxu0 0
      %1030 = vmatpush1.bf16.msra.mxu0 0
      %1031 = vmatprep.subr.bf16.mxu0 0
      %1032 = vmatpush1.bf16.msra.mxu0 0
      %1033 = vmatprep.subr.bf16.mxu0 0
      %1034 = vmatpush1.bf16.msra.mxu0 0
      %1035 = vmatprep.subr.bf16.mxu0 0
      %1036 = vmatpush1.bf16.msra.mxu0 0
      %1037 = vmatprep.subr.bf16.mxu0 0
      %1038 = vmatpush1.bf16.msra.mxu0 0
      %1039 = vmatprep.subr.bf16.mxu0 0
      %1040 = vmatpush1.bf16.msra.mxu0 0
      %1041 = vmatprep.subr.bf16.mxu0 0
      %1042 = vmatpush1.bf16.msra.mxu0 0
      %1043 = vmatprep.subr.bf16.mxu0 0
      %1044 = vmatpush1.bf16.msra.mxu0 0
      %1045 = vmatprep.subr.bf16.mxu0 0
      %1046 = vmatpush1.bf16.msra.mxu0 0
      %1047 = vmatprep.subr.bf16.mxu0 0
      %1048 = vmatpush1.bf16.msra.mxu0 0
      %1049 = vmatprep.subr.bf16.mxu0 0
      %1050 = vmatpush1.bf16.msra.mxu0 0
      %1051 = vmatprep.subr.bf16.mxu0 0
      %1052 = vmatpush1.bf16.msra.mxu0 0
      %1053 = vmatprep.subr.bf16.mxu0 0
      %1054 = vmatpush1.bf16.msra.mxu0 0
      %1055 = vmatprep.subr.bf16.mxu0 0
      %1056 = vmatpush1.bf16.msra.mxu0 0
      %1057 = vmatprep.subr.bf16.mxu0 0
      %1058 = vmatpush1.bf16.msra.mxu0 0
      %1059 = vmatprep.mubr.bf16.mxu0 0
      %1060 = vmatmul.mubr.bf16.gmra.mrb[0].mxu0 %v1022
      %v1061 = vpop.f32.mrb[0].mxu0
      %v1062 = vadd.f32 0.0, %v1061
      %v1063 = vpop.f32.mrb[0].mxu0
      %v1064 = vadd.f32 0.0, %v1063
      %v1065 = vpop.f32.mrb[0].mxu0
      %v1066 = vadd.f32 0.0, %v1065
      %v1067 = vpop.f32.mrb[0].mxu0
      %v1068 = vadd.f32 0.0, %v1067
      %1069 = vmatprep.mubr.bf16.mxu0 0
      %1070 = vmatmul.mubr.bf16.gmra.mrb[0].mxu0 %v1025
      %v1071 = vpop.f32.mrb[0].mxu0
      %v1072 = vadd.f32 0.0, %v1071
      %v1073 = vpop.f32.mrb[0].mxu0
      %v1074 = vadd.f32 0.0, %v1073
      %v1075 = vpop.f32.mrb[0].mxu0
      %v1076 = vadd.f32 0.0, %v1075
      %v1077 = vpop.f32.mrb[0].mxu0
      %v1078 = vadd.f32 0.0, %v1077
      %1079 = vdwg.mxu0
      %v1084 = vunpack.c.l.b16 %v986
      %v1085 = vunpack.c.l.b16 %v987
      %v1086 = vunpack.c.l.b16 %v988
      %v1087 = vunpack.c.l.b16 %v989
      %v1088 = vpack.c.b16 %v1085, %v1084
      %v1089 = vpack.c.b16 %v1087, %v1086
      %v1091 = vsel %vm1020, %v1088, 0
      %v1094 = vsel %vm1020, %v1089, 0
      %1096 = vmatprep.subr.bf16.mxu0 %v995
      %1097 = vmatpush1.bf16.msra.mxu0 %v994
      %1098 = vmatprep.subr.bf16.mxu0 0
      %1099 = vmatpush1.bf16.msra.mxu0 0
      %1100 = vmatprep.subr.bf16.mxu0 0
      %1101 = vmatpush1.bf16.msra.mxu0 0
      %1102 = vmatprep.subr.bf16.mxu0 0
      %1103 = vmatpush1.bf16.msra.mxu0 0
      %1104 = vmatprep.subr.bf16.mxu0 0
      %1105 = vmatpush1.bf16.msra.mxu0 0
      %1106 = vmatprep.subr.bf16.mxu0 0
      %1107 = vmatpush1.bf16.msra.mxu0 0
      %1108 = vmatprep.subr.bf16.mxu0 0
      %1109 = vmatpush1.bf16.msra.mxu0 0
      %1110 = vmatprep.subr.bf16.mxu0 0
      %1111 = vmatpush1.bf16.msra.mxu0 0
      %1112 = vmatprep.subr.bf16.mxu0 0
      %1113 = vmatpush1.bf16.msra.mxu0 0
      %1114 = vmatprep.subr.bf16.mxu0 0
      %1115 = vmatpush1.bf16.msra.mxu0 0
      %1116 = vmatprep.subr.bf16.mxu0 0
      %1117 = vmatpush1.bf16.msra.mxu0 0
      %1118 = vmatprep.subr.bf16.mxu0 0
      %1119 = vmatpush1.bf16.msra.mxu0 0
      %1120 = vmatprep.subr.bf16.mxu0 0
      %1121 = vmatpush1.bf16.msra.mxu0 0
      %1122 = vmatprep.subr.bf16.mxu0 0
      %1123 = vmatpush1.bf16.msra.mxu0 0
      %1124 = vmatprep.subr.bf16.mxu0 0
      %1125 = vmatpush1.bf16.msra.mxu0 0
      %1126 = vmatprep.subr.bf16.mxu0 0
      %1127 = vmatpush1.bf16.msra.mxu0 0
      %1128 = vmatprep.mubr.bf16.mxu0 0
      %1129 = vmatmul.mubr.bf16.gmra.mrb[0].mxu0 %v1091
      %v1130 = vpop.f32.mrb[0].mxu0
      %v1131 = vadd.f32 %v1062, %v1130
      %v1132 = vpop.f32.mrb[0].mxu0
      %v1133 = vadd.f32 %v1064, %v1132
      %v1134 = vpop.f32.mrb[0].mxu0
      %v1135 = vadd.f32 %v1066, %v1134
      %v1136 = vpop.f32.mrb[0].mxu0
      %v1137 = vadd.f32 %v1068, %v1136
      %1138 = vmatprep.mubr.bf16.mxu0 0
      %1139 = vmatmul.mubr.bf16.gmra.mrb[0].mxu0 %v1094
      %v1140 = vpop.f32.mrb[0].mxu0
      %v1141 = vadd.f32 %v1072, %v1140
      %v1142 = vpop.f32.mrb[0].mxu0
      %v1143 = vadd.f32 %v1074, %v1142
      %v1144 = vpop.f32.mrb[0].mxu0
      %v1145 = vadd.f32 %v1076, %v1144
      %v1146 = vpop.f32.mrb[0].mxu0
      %v1147 = vadd.f32 %v1078, %v1146
      %1148 = vdwg.mxu0
      %s1149 = scalar_lea.vmem %s3, 32
      %v1150 = vld [vmem:[%s1149] sm:$0xf]
      %v1151 = vld [vmem:[%s1149 + $0x4] sm:$0xf]
      %v1152 = vld [vmem:[%s1149 + $0x8] sm:$0xf]
      %v1153 = vld [vmem:[%s1149 + $0xc] sm:$0xf]
      %v1158 = vunpack.c.l.b16 %v1150
      %v1159 = vunpack.c.l.b16 %v1151
      %v1160 = vunpack.c.l.b16 %v1152
      %v1161 = vunpack.c.l.b16 %v1153
      %v1162 = vpack.c.b16 %v1159, %v1158
      %v1163 = vpack.c.b16 %v1161, %v1160
      %1164 = vrot.lane.b32.xlu0 %v994, 126
      %v1165 = vpop.permute.xlu0 %1164
      %1166 = vrot.lane.b32.xlu0 %v995, 126
      %v1167 = vpop.permute.xlu0 %1166
      %v1168 = vsel %vm435, %v1165, %v1167
      %v1172 = vsel %vm1020, %v1162, 0
      %v1175 = vsel %vm1020, %v1163, 0
      %1177 = vmatprep.subr.bf16.mxu0 %v1167
      %1178 = vmatpush1.bf16.msra.mxu0 %v1168
      %1179 = vmatprep.subr.bf16.mxu0 0
      %1180 = vmatpush1.bf16.msra.mxu0 0
      %1181 = vmatprep.subr.bf16.mxu0 0
      %1182 = vmatpush1.bf16.msra.mxu0 0
      %1183 = vmatprep.subr.bf16.mxu0 0
      %1184 = vmatpush1.bf16.msra.mxu0 0
      %1185 = vmatprep.subr.bf16.mxu0 0
      %1186 = vmatpush1.bf16.msra.mxu0 0
      %1187 = vmatprep.subr.bf16.mxu0 0
      %1188 = vmatpush1.bf16.msra.mxu0 0
      %1189 = vmatprep.subr.bf16.mxu0 0
      %1190 = vmatpush1.bf16.msra.mxu0 0
      %1191 = vmatprep.subr.bf16.mxu0 0
      %1192 = vmatpush1.bf16.msra.mxu0 0
      %1193 = vmatprep.subr.bf16.mxu0 0
      %1194 = vmatpush1.bf16.msra.mxu0 0
      %1195 = vmatprep.subr.bf16.mxu0 0
      %1196 = vmatpush1.bf16.msra.mxu0 0
      %1197 = vmatprep.subr.bf16.mxu0 0
      %1198 = vmatpush1.bf16.msra.mxu0 0
      %1199 = vmatprep.subr.bf16.mxu0 0
      %1200 = vmatpush1.bf16.msra.mxu0 0
      %1201 = vmatprep.subr.bf16.mxu0 0
      %1202 = vmatpush1.bf16.msra.mxu0 0
      %1203 = vmatprep.subr.bf16.mxu0 0
      %1204 = vmatpush1.bf16.msra.mxu0 0
      %1205 = vmatprep.subr.bf16.mxu0 0
      %1206 = vmatpush1.bf16.msra.mxu0 0
      %1207 = vmatprep.subr.bf16.mxu0 0
      %1208 = vmatpush1.bf16.msra.mxu0 0
      %1209 = vmatprep.mubr.bf16.mxu0 0
      %1210 = vmatmul.mubr.bf16.gmra.mrb[0].mxu0 %v1172
      %v1211 = vpop.f32.mrb[0].mxu0
      %v1212 = vadd.f32 0.0, %v1211
      %v1213 = vpop.f32.mrb[0].mxu0
      %v1214 = vadd.f32 0.0, %v1213
      %v1215 = vpop.f32.mrb[0].mxu0
      %v1216 = vadd.f32 0.0, %v1215
      %v1217 = vpop.f32.mrb[0].mxu0
      %v1218 = vadd.f32 0.0, %v1217
      %1219 = vmatprep.mubr.bf16.mxu0 0
      %1220 = vmatmul.mubr.bf16.gmra.mrb[0].mxu0 %v1175
      %v1221 = vpop.f32.mrb[0].mxu0
      %v1222 = vadd.f32 0.0, %v1221
      %v1223 = vpop.f32.mrb[0].mxu0
      %v1224 = vadd.f32 0.0, %v1223
      %v1225 = vpop.f32.mrb[0].mxu0
      %v1226 = vadd.f32 0.0, %v1225
      %v1227 = vpop.f32.mrb[0].mxu0
      %v1228 = vadd.f32 0.0, %v1227
      %1229 = vdwg.mxu0
      %v1230 = vadd.f32 %v1131, %v1212
      %v1231 = vadd.f32 %v1133, %v1214
      %v1232 = vadd.f32 %v1135, %v1216
      %v1233 = vadd.f32 %v1137, %v1218
      %v1234 = vadd.f32 %v1141, %v1222
      %v1235 = vadd.f32 %v1143, %v1224
      %v1236 = vadd.f32 %v1145, %v1226
      %v1237 = vadd.f32 %v1147, %v1228
      %s1238 = scalar_lea.vmem %s3, 48
      %v1239 = vld [vmem:[%s1238] sm:$0xf]
      %v1240 = vld [vmem:[%s1238 + $0x4] sm:$0xf]
      %v1241 = vld [vmem:[%s1238 + $0x8] sm:$0xf]
      %v1242 = vld [vmem:[%s1238 + $0xc] sm:$0xf]
      %v1247 = vunpack.c.l.b16 %v1239
      %v1248 = vunpack.c.l.b16 %v1240
      %v1249 = vunpack.c.l.b16 %v1241
      %v1250 = vunpack.c.l.b16 %v1242
      %v1251 = vpack.c.b16 %v1248, %v1247
      %v1252 = vpack.c.b16 %v1250, %v1249
      %1253 = vrot.lane.b32.xlu0 %v994, 112
      %v1254 = vpop.permute.xlu0 %1253
      %1255 = vrot.lane.b32.xlu0 %v995, 112
      %v1256 = vpop.permute.xlu0 %1255
      %v1257 = vsel %vm513, %v1254, %v1256
      %v1261 = vsel %vm1020, %v1251, 0
      %v1264 = vsel %vm1020, %v1252, 0
      %1266 = vmatprep.subr.bf16.mxu0 %v1256
      %1267 = vmatpush1.bf16.msra.mxu0 %v1257
      %1268 = vmatprep.subr.bf16.mxu0 0
      %1269 = vmatpush1.bf16.msra.mxu0 0
      %1270 = vmatprep.subr.bf16.mxu0 0
      %1271 = vmatpush1.bf16.msra.mxu0 0
      %1272 = vmatprep.subr.bf16.mxu0 0
      %1273 = vmatpush1.bf16.msra.mxu0 0
      %1274 = vmatprep.subr.bf16.mxu0 0
      %1275 = vmatpush1.bf16.msra.mxu0 0
      %1276 = vmatprep.subr.bf16.mxu0 0
      %1277 = vmatpush1.bf16.msra.mxu0 0
      %1278 = vmatprep.subr.bf16.mxu0 0
      %1279 = vmatpush1.bf16.msra.mxu0 0
      %1280 = vmatprep.subr.bf16.mxu0 0
      %1281 = vmatpush1.bf16.msra.mxu0 0
      %1282 = vmatprep.subr.bf16.mxu0 0
      %1283 = vmatpush1.bf16.msra.mxu0 0
      %1284 = vmatprep.subr.bf16.mxu0 0
      %1285 = vmatpush1.bf16.msra.mxu0 0
      %1286 = vmatprep.subr.bf16.mxu0 0
      %1287 = vmatpush1.bf16.msra.mxu0 0
      %1288 = vmatprep.subr.bf16.mxu0 0
      %1289 = vmatpush1.bf16.msra.mxu0 0
      %1290 = vmatprep.subr.bf16.mxu0 0
      %1291 = vmatpush1.bf16.msra.mxu0 0
      %1292 = vmatprep.subr.bf16.mxu0 0
      %1293 = vmatpush1.bf16.msra.mxu0 0
      %1294 = vmatprep.subr.bf16.mxu0 0
      %1295 = vmatpush1.bf16.msra.mxu0 0
      %1296 = vmatprep.subr.bf16.mxu0 0
      %1297 = vmatpush1.bf16.msra.mxu0 0
      %1298 = vmatprep.mubr.bf16.mxu0 0
      %1299 = vmatmul.mubr.bf16.gmra.mrb[0].mxu0 %v1261
      %v1300 = vpop.f32.mrb[0].mxu0
      %v1301 = vadd.f32 0.0, %v1300
      %v1302 = vpop.f32.mrb[0].mxu0
      %v1303 = vadd.f32 0.0, %v1302
      %v1304 = vpop.f32.mrb[0].mxu0
      %v1305 = vadd.f32 0.0, %v1304
      %v1306 = vpop.f32.mrb[0].mxu0
      %v1307 = vadd.f32 0.0, %v1306
      %1308 = vmatprep.mubr.bf16.mxu0 0
      %1309 = vmatmul.mubr.bf16.gmra.mrb[0].mxu0 %v1264
      %v1310 = vpop.f32.mrb[0].mxu0
      %v1311 = vadd.f32 0.0, %v1310
      %v1312 = vpop.f32.mrb[0].mxu0
      %v1313 = vadd.f32 0.0, %v1312
      %v1314 = vpop.f32.mrb[0].mxu0
      %v1315 = vadd.f32 0.0, %v1314
      %v1316 = vpop.f32.mrb[0].mxu0
      %v1317 = vadd.f32 0.0, %v1316
      %1318 = vdwg.mxu0
      %v1319 = vadd.f32 %v1230, %v1301
      %v1320 = vadd.f32 %v1231, %v1303
      %v1321 = vadd.f32 %v1232, %v1305
      %v1322 = vadd.f32 %v1233, %v1307
      %v1323 = vadd.f32 %v1234, %v1311
      %v1324 = vadd.f32 %v1235, %v1313
      %v1325 = vadd.f32 %v1236, %v1315
      %v1326 = vadd.f32 %v1237, %v1317
      %s1327 = scalar_lea.vmem %s3, 64
      %v1328 = vld [vmem:[%s1327] sm:$0xf]
      %v1329 = vld [vmem:[%s1327 + $0x4] sm:$0xf]
      %v1330 = vld [vmem:[%s1327 + $0x8] sm:$0xf]
      %v1331 = vld [vmem:[%s1327 + $0xc] sm:$0xf]
      %v1336 = vunpack.c.l.b16 %v1328
      %v1337 = vunpack.c.l.b16 %v1329
      %v1338 = vunpack.c.l.b16 %v1330
      %v1339 = vunpack.c.l.b16 %v1331
      %v1340 = vpack.c.b16 %v1337, %v1336
      %v1341 = vpack.c.b16 %v1339, %v1338
      %1342 = vrot.lane.b32.xlu0 %v994, 111
      %v1343 = vpop.permute.xlu0 %1342
      %1344 = vrot.lane.b32.xlu0 %v995, 111
      %v1345 = vpop.permute.xlu0 %1344
      %v1346 = vsel %vm591, %v1343, %v1345
      %v1350 = vsel %vm1020, %v1340, 0
      %v1353 = vsel %vm1020, %v1341, 0
      %1355 = vmatprep.subr.bf16.mxu0 %v1345
      %1356 = vmatpush1.bf16.msra.mxu0 %v1346
      %1357 = vmatprep.subr.bf16.mxu0 0
      %1358 = vmatpush1.bf16.msra.mxu0 0
      %1359 = vmatprep.subr.bf16.mxu0 0
      %1360 = vmatpush1.bf16.msra.mxu0 0
      %1361 = vmatprep.subr.bf16.mxu0 0
      %1362 = vmatpush1.bf16.msra.mxu0 0
      %1363 = vmatprep.subr.bf16.mxu0 0
      %1364 = vmatpush1.bf16.msra.mxu0 0
      %1365 = vmatprep.subr.bf16.mxu0 0
      %1366 = vmatpush1.bf16.msra.mxu0 0
      %1367 = vmatprep.subr.bf16.mxu0 0
      %1368 = vmatpush1.bf16.msra.mxu0 0
      %1369 = vmatprep.subr.bf16.mxu0 0
      %1370 = vmatpush1.bf16.msra.mxu0 0
      %1371 = vmatprep.subr.bf16.mxu0 0
      %1372 = vmatpush1.bf16.msra.mxu0 0
      %1373 = vmatprep.subr.bf16.mxu0 0
      %1374 = vmatpush1.bf16.msra.mxu0 0
      %1375 = vmatprep.subr.bf16.mxu0 0
      %1376 = vmatpush1.bf16.msra.mxu0 0
      %1377 = vmatprep.subr.bf16.mxu0 0
      %1378 = vmatpush1.bf16.msra.mxu0 0
      %1379 = vmatprep.subr.bf16.mxu0 0
      %1380 = vmatpush1.bf16.msra.mxu0 0
      %1381 = vmatprep.subr.bf16.mxu0 0
      %1382 = vmatpush1.bf16.msra.mxu0 0
      %1383 = vmatprep.subr.bf16.mxu0 0
      %1384 = vmatpush1.bf16.msra.mxu0 0
      %1385 = vmatprep.subr.bf16.mxu0 0
      %1386 = vmatpush1.bf16.msra.mxu0 0
      %1387 = vmatprep.mubr.bf16.mxu0 0
      %1388 = vmatmul.mubr.bf16.gmra.mrb[0].mxu0 %v1350
      %v1389 = vpop.f32.mrb[0].mxu0
      %v1390 = vadd.f32 0.0, %v1389
      %v1391 = vpop.f32.mrb[0].mxu0
      %v1392 = vadd.f32 0.0, %v1391
      %v1393 = vpop.f32.mrb[0].mxu0
      %v1394 = vadd.f32 0.0, %v1393
      %v1395 = vpop.f32.mrb[0].mxu0
      %v1396 = vadd.f32 0.0, %v1395
      %1397 = vmatprep.mubr.bf16.mxu0 0
      %1398 = vmatmul.mubr.bf16.gmra.mrb[0].mxu0 %v1353
      %v1399 = vpop.f32.mrb[0].mxu0
      %v1400 = vadd.f32 0.0, %v1399
      %v1401 = vpop.f32.mrb[0].mxu0
      %v1402 = vadd.f32 0.0, %v1401
      %v1403 = vpop.f32.mrb[0].mxu0
      %v1404 = vadd.f32 0.0, %v1403
      %v1405 = vpop.f32.mrb[0].mxu0
      %v1406 = vadd.f32 0.0, %v1405
      %1407 = vdwg.mxu0
      %v1408 = vadd.f32 %v1319, %v1390
      %v1409 = vadd.f32 %v1320, %v1392
      %v1410 = vadd.f32 %v1321, %v1394
      %v1411 = vadd.f32 %v1322, %v1396
      %v1412 = vadd.f32 %v1323, %v1400
      %v1413 = vadd.f32 %v1324, %v1402
      %v1414 = vadd.f32 %v1325, %v1404
      %v1415 = vadd.f32 %v1326, %v1406
      %s1416 = scalar_lea.vmem %s3, 80
      %v1417 = vld [vmem:[%s1416] sm:$0xf]
      %v1418 = vld [vmem:[%s1416 + $0x4] sm:$0xf]
      %v1419 = vld [vmem:[%s1416 + $0x8] sm:$0xf]
      %v1420 = vld [vmem:[%s1416 + $0xc] sm:$0xf]
      %v1425 = vunpack.c.l.b16 %v1417
      %v1426 = vunpack.c.l.b16 %v1418
      %v1427 = vunpack.c.l.b16 %v1419
      %v1428 = vunpack.c.l.b16 %v1420
      %v1429 = vpack.c.b16 %v1426, %v1425
      %v1430 = vpack.c.b16 %v1428, %v1427
      %1431 = vrot.lane.b32.xlu0 %v994, 110
      %v1432 = vpop.permute.xlu0 %1431
      %1433 = vrot.lane.b32.xlu0 %v995, 110
      %v1434 = vpop.permute.xlu0 %1433
      %v1435 = vsel %vm669, %v1432, %v1434
      %v1439 = vsel %vm1020, %v1429, 0
      %v1442 = vsel %vm1020, %v1430, 0
      %1444 = vmatprep.subr.bf16.mxu0 %v1434
      %1445 = vmatpush1.bf16.msra.mxu0 %v1435
      %1446 = vmatprep.subr.bf16.mxu0 0
      %1447 = vmatpush1.bf16.msra.mxu0 0
      %1448 = vmatprep.subr.bf16.mxu0 0
      %1449 = vmatpush1.bf16.msra.mxu0 0
      %1450 = vmatprep.subr.bf16.mxu0 0
      %1451 = vmatpush1.bf16.msra.mxu0 0
      %1452 = vmatprep.subr.bf16.mxu0 0
      %1453 = vmatpush1.bf16.msra.mxu0 0
      %1454 = vmatprep.subr.bf16.mxu0 0
      %1455 = vmatpush1.bf16.msra.mxu0 0
      %1456 = vmatprep.subr.bf16.mxu0 0
      %1457 = vmatpush1.bf16.msra.mxu0 0
      %1458 = vmatprep.subr.bf16.mxu0 0
      %1459 = vmatpush1.bf16.msra.mxu0 0
      %1460 = vmatprep.subr.bf16.mxu0 0
      %1461 = vmatpush1.bf16.msra.mxu0 0
      %1462 = vmatprep.subr.bf16.mxu0 0
      %1463 = vmatpush1.bf16.msra.mxu0 0
      %1464 = vmatprep.subr.bf16.mxu0 0
      %1465 = vmatpush1.bf16.msra.mxu0 0
      %1466 = vmatprep.subr.bf16.mxu0 0
      %1467 = vmatpush1.bf16.msra.mxu0 0
      %1468 = vmatprep.subr.bf16.mxu0 0
      %1469 = vmatpush1.bf16.msra.mxu0 0
      %1470 = vmatprep.subr.bf16.mxu0 0
      %1471 = vmatpush1.bf16.msra.mxu0 0
      %1472 = vmatprep.subr.bf16.mxu0 0
      %1473 = vmatpush1.bf16.msra.mxu0 0
      %1474 = vmatprep.subr.bf16.mxu0 0
      %1475 = vmatpush1.bf16.msra.mxu0 0
      %1476 = vmatprep.mubr.bf16.mxu0 0
      %1477 = vmatmul.mubr.bf16.gmra.mrb[0].mxu0 %v1439
      %v1478 = vpop.f32.mrb[0].mxu0
      %v1479 = vadd.f32 0.0, %v1478
      %v1480 = vpop.f32.mrb[0].mxu0
      %v1481 = vadd.f32 0.0, %v1480
      %v1482 = vpop.f32.mrb[0].mxu0
      %v1483 = vadd.f32 0.0, %v1482
      %v1484 = vpop.f32.mrb[0].mxu0
      %v1485 = vadd.f32 0.0, %v1484
      %1486 = vmatprep.mubr.bf16.mxu0 0
      %1487 = vmatmul.mubr.bf16.gmra.mrb[0].mxu0 %v1442
      %v1488 = vpop.f32.mrb[0].mxu0
      %v1489 = vadd.f32 0.0, %v1488
      %v1490 = vpop.f32.mrb[0].mxu0
      %v1491 = vadd.f32 0.0, %v1490
      %v1492 = vpop.f32.mrb[0].mxu0
      %v1493 = vadd.f32 0.0, %v1492
      %v1494 = vpop.f32.mrb[0].mxu0
      %v1495 = vadd.f32 0.0, %v1494
      %1496 = vdwg.mxu0
      %v1497 = vadd.f32 %v1408, %v1479
      %v1498 = vadd.f32 %v1409, %v1481
      %v1499 = vadd.f32 %v1410, %v1483
      %v1500 = vadd.f32 %v1411, %v1485
      %v1501 = vadd.f32 %v1412, %v1489
      %v1502 = vadd.f32 %v1413, %v1491
      %v1503 = vadd.f32 %v1414, %v1493
      %v1504 = vadd.f32 %v1415, %v1495
      %s1505 = scalar_lea.vmem %s3, 96
      %v1506 = vld [vmem:[%s1505] sm:$0xf]
      %v1507 = vld [vmem:[%s1505 + $0x4] sm:$0xf]
      %v1508 = vld [vmem:[%s1505 + $0x8] sm:$0xf]
      %v1509 = vld [vmem:[%s1505 + $0xc] sm:$0xf]
      %v1514 = vunpack.c.l.b16 %v1506
      %v1515 = vunpack.c.l.b16 %v1507
      %v1516 = vunpack.c.l.b16 %v1508
      %v1517 = vunpack.c.l.b16 %v1509
      %v1518 = vpack.c.b16 %v1515, %v1514
      %v1519 = vpack.c.b16 %v1517, %v1516
      %1520 = vrot.lane.b32.xlu0 %v994, 96
      %v1521 = vpop.permute.xlu0 %1520
      %1522 = vrot.lane.b32.xlu0 %v995, 96
      %v1523 = vpop.permute.xlu0 %1522
      %v1524 = vsel %vm747, %v1521, %v1523
      %v1528 = vsel %vm1020, %v1518, 0
      %v1531 = vsel %vm1020, %v1519, 0
      %1533 = vmatprep.subr.bf16.mxu0 %v1523
      %1534 = vmatpush1.bf16.msra.mxu0 %v1524
      %1535 = vmatprep.subr.bf16.mxu0 0
      %1536 = vmatpush1.bf16.msra.mxu0 0
      %1537 = vmatprep.subr.bf16.mxu0 0
      %1538 = vmatpush1.bf16.msra.mxu0 0
      %1539 = vmatprep.subr.bf16.mxu0 0
      %1540 = vmatpush1.bf16.msra.mxu0 0
      %1541 = vmatprep.subr.bf16.mxu0 0
      %1542 = vmatpush1.bf16.msra.mxu0 0
      %1543 = vmatprep.subr.bf16.mxu0 0
      %1544 = vmatpush1.bf16.msra.mxu0 0
      %1545 = vmatprep.subr.bf16.mxu0 0
      %1546 = vmatpush1.bf16.msra.mxu0 0
      %1547 = vmatprep.subr.bf16.mxu0 0
      %1548 = vmatpush1.bf16.msra.mxu0 0
      %1549 = vmatprep.subr.bf16.mxu0 0
      %1550 = vmatpush1.bf16.msra.mxu0 0
      %1551 = vmatprep.subr.bf16.mxu0 0
      %1552 = vmatpush1.bf16.msra.mxu0 0
      %1553 = vmatprep.subr.bf16.mxu0 0
      %1554 = vmatpush1.bf16.msra.mxu0 0
      %1555 = vmatprep.subr.bf16.mxu0 0
      %1556 = vmatpush1.bf16.msra.mxu0 0
      %1557 = vmatprep.subr.bf16.mxu0 0
      %1558 = vmatpush1.bf16.msra.mxu0 0
      %1559 = vmatprep.subr.bf16.mxu0 0
      %1560 = vmatpush1.bf16.msra.mxu0 0
      %1561 = vmatprep.subr.bf16.mxu0 0
      %1562 = vmatpush1.bf16.msra.mxu0 0
      %1563 = vmatprep.subr.bf16.mxu0 0
      %1564 = vmatpush1.bf16.msra.mxu0 0
      %1565 = vmatprep.mubr.bf16.mxu0 0
      %1566 = vmatmul.mubr.bf16.gmra.mrb[0].mxu0 %v1528
      %v1567 = vpop.f32.mrb[0].mxu0
      %v1568 = vadd.f32 0.0, %v1567
      %v1569 = vpop.f32.mrb[0].mxu0
      %v1570 = vadd.f32 0.0, %v1569
      %v1571 = vpop.f32.mrb[0].mxu0
      %v1572 = vadd.f32 0.0, %v1571
      %v1573 = vpop.f32.mrb[0].mxu0
      %v1574 = vadd.f32 0.0, %v1573
      %1575 = vmatprep.mubr.bf16.mxu0 0
      %1576 = vmatmul.mubr.bf16.gmra.mrb[0].mxu0 %v1531
      %v1577 = vpop.f32.mrb[0].mxu0
      %v1578 = vadd.f32 0.0, %v1577
      %v1579 = vpop.f32.mrb[0].mxu0
      %v1580 = vadd.f32 0.0, %v1579
      %v1581 = vpop.f32.mrb[0].mxu0
      %v1582 = vadd.f32 0.0, %v1581
      %v1583 = vpop.f32.mrb[0].mxu0
      %v1584 = vadd.f32 0.0, %v1583
      %1585 = vdwg.mxu0
      %v1586 = vadd.f32 %v1497, %v1568
      %v1587 = vadd.f32 %v1498, %v1570
      %v1588 = vadd.f32 %v1499, %v1572
      %v1589 = vadd.f32 %v1500, %v1574
      %v1590 = vadd.f32 %v1501, %v1578
      %v1591 = vadd.f32 %v1502, %v1580
      %v1592 = vadd.f32 %v1503, %v1582
      %v1593 = vadd.f32 %v1504, %v1584
      %s1594 = scalar_lea.vmem %s3, 112
      %v1595 = vld [vmem:[%s1594] sm:$0xf]
      %v1596 = vld [vmem:[%s1594 + $0x4] sm:$0xf]
      %v1597 = vld [vmem:[%s1594 + $0x8] sm:$0xf]
      %v1598 = vld [vmem:[%s1594 + $0xc] sm:$0xf]
      %v1603 = vunpack.c.l.b16 %v1595
      %v1604 = vunpack.c.l.b16 %v1596
      %v1605 = vunpack.c.l.b16 %v1597
      %v1606 = vunpack.c.l.b16 %v1598
      %v1607 = vpack.c.b16 %v1604, %v1603
      %v1608 = vpack.c.b16 %v1606, %v1605
      %1609 = vrot.lane.b32.xlu0 %v994, 95
      %v1610 = vpop.permute.xlu0 %1609
      %1611 = vrot.lane.b32.xlu0 %v995, 95
      %v1612 = vpop.permute.xlu0 %1611
      %v1613 = vsel %vm825, %v1610, %v1612
      %v1617 = vsel %vm1020, %v1607, 0
      %v1620 = vsel %vm1020, %v1608, 0
      %1622 = vmatprep.subr.bf16.mxu0 %v1612
      %1623 = vmatpush1.bf16.msra.mxu0 %v1613
      %1624 = vmatprep.subr.bf16.mxu0 0
      %1625 = vmatpush1.bf16.msra.mxu0 0
      %1626 = vmatprep.subr.bf16.mxu0 0
      %1627 = vmatpush1.bf16.msra.mxu0 0
      %1628 = vmatprep.subr.bf16.mxu0 0
      %1629 = vmatpush1.bf16.msra.mxu0 0
      %1630 = vmatprep.subr.bf16.mxu0 0
      %1631 = vmatpush1.bf16.msra.mxu0 0
      %1632 = vmatprep.subr.bf16.mxu0 0
      %1633 = vmatpush1.bf16.msra.mxu0 0
      %1634 = vmatprep.subr.bf16.mxu0 0
      %1635 = vmatpush1.bf16.msra.mxu0 0
      %1636 = vmatprep.subr.bf16.mxu0 0
      %1637 = vmatpush1.bf16.msra.mxu0 0
      %1638 = vmatprep.subr.bf16.mxu0 0
      %1639 = vmatpush1.bf16.msra.mxu0 0
      %1640 = vmatprep.subr.bf16.mxu0 0
      %1641 = vmatpush1.bf16.msra.mxu0 0
      %1642 = vmatprep.subr.bf16.mxu0 0
      %1643 = vmatpush1.bf16.msra.mxu0 0
      %1644 = vmatprep.subr.bf16.mxu0 0
      %1645 = vmatpush1.bf16.msra.mxu0 0
      %1646 = vmatprep.subr.bf16.mxu0 0
      %1647 = vmatpush1.bf16.msra.mxu0 0
      %1648 = vmatprep.subr.bf16.mxu0 0
      %1649 = vmatpush1.bf16.msra.mxu0 0
      %1650 = vmatprep.subr.bf16.mxu0 0
      %1651 = vmatpush1.bf16.msra.mxu0 0
      %1652 = vmatprep.subr.bf16.mxu0 0
      %1653 = vmatpush1.bf16.msra.mxu0 0
      %1654 = vmatprep.mubr.bf16.mxu0 0
      %1655 = vmatmul.mubr.bf16.gmra.mrb[0].mxu0 %v1617
      %v1656 = vpop.f32.mrb[0].mxu0
      %v1657 = vadd.f32 0.0, %v1656
      %v1658 = vpop.f32.mrb[0].mxu0
      %v1659 = vadd.f32 0.0, %v1658
      %v1660 = vpop.f32.mrb[0].mxu0
      %v1661 = vadd.f32 0.0, %v1660
      %v1662 = vpop.f32.mrb[0].mxu0
      %v1663 = vadd.f32 0.0, %v1662
      %1664 = vmatprep.mubr.bf16.mxu0 0
      %1665 = vmatmul.mubr.bf16.gmra.mrb[0].mxu0 %v1620
      %v1666 = vpop.f32.mrb[0].mxu0
      %v1667 = vadd.f32 0.0, %v1666
      %v1668 = vpop.f32.mrb[0].mxu0
      %v1669 = vadd.f32 0.0, %v1668
      %v1670 = vpop.f32.mrb[0].mxu0
      %v1671 = vadd.f32 0.0, %v1670
      %v1672 = vpop.f32.mrb[0].mxu0
      %v1673 = vadd.f32 0.0, %v1672
      %1674 = vdwg.mxu0
      %v1675 = vadd.f32 %v1586, %v1657
      %v1676 = vadd.f32 %v1587, %v1659
      %v1677 = vadd.f32 %v1588, %v1661
      %v1678 = vadd.f32 %v1589, %v1663
      %v1679 = vadd.f32 %v1590, %v1667
      %v1680 = vadd.f32 %v1591, %v1669
      %v1681 = vadd.f32 %v1592, %v1671
      %v1682 = vadd.f32 %v1593, %v1673
      %s1683 = scalar_lea.vmem %s3, 128
      %v1684 = vld [vmem:[%s1683] sm:$0xf]
      %v1685 = vld [vmem:[%s1683 + $0x4] sm:$0xf]
      %v1686 = vld [vmem:[%s1683 + $0x8] sm:$0xf]
      %v1687 = vld [vmem:[%s1683 + $0xc] sm:$0xf]
      %v1692 = vunpack.c.l.b16 %v1684
      %v1693 = vunpack.c.l.b16 %v1685
      %v1694 = vunpack.c.l.b16 %v1686
      %v1695 = vunpack.c.l.b16 %v1687
      %v1696 = vpack.c.b16 %v1693, %v1692
      %v1697 = vpack.c.b16 %v1695, %v1694
      %1698 = vrot.lane.b32.xlu0 %v994, 94
      %v1699 = vpop.permute.xlu0 %1698
      %1700 = vrot.lane.b32.xlu0 %v995, 94
      %v1701 = vpop.permute.xlu0 %1700
      %v1702 = vsel %vm903, %v1699, %v1701
      %v1706 = vsel %vm1020, %v1696, 0
      %v1709 = vsel %vm1020, %v1697, 0
      %1711 = vmatprep.subr.bf16.mxu0 %v1701
      %1712 = vmatpush1.bf16.msra.mxu0 %v1702
      %1713 = vmatprep.subr.bf16.mxu0 0
      %1714 = vmatpush1.bf16.msra.mxu0 0
      %1715 = vmatprep.subr.bf16.mxu0 0
      %1716 = vmatpush1.bf16.msra.mxu0 0
      %1717 = vmatprep.subr.bf16.mxu0 0
      %1718 = vmatpush1.bf16.msra.mxu0 0
      %1719 = vmatprep.subr.bf16.mxu0 0
      %1720 = vmatpush1.bf16.msra.mxu0 0
      %1721 = vmatprep.subr.bf16.mxu0 0
      %1722 = vmatpush1.bf16.msra.mxu0 0
      %1723 = vmatprep.subr.bf16.mxu0 0
      %1724 = vmatpush1.bf16.msra.mxu0 0
      %1725 = vmatprep.subr.bf16.mxu0 0
      %1726 = vmatpush1.bf16.msra.mxu0 0
      %1727 = vmatprep.subr.bf16.mxu0 0
      %1728 = vmatpush1.bf16.msra.mxu0 0
      %1729 = vmatprep.subr.bf16.mxu0 0
      %1730 = vmatpush1.bf16.msra.mxu0 0
      %1731 = vmatprep.subr.bf16.mxu0 0
      %1732 = vmatpush1.bf16.msra.mxu0 0
      %1733 = vmatprep.subr.bf16.mxu0 0
      %1734 = vmatpush1.bf16.msra.mxu0 0
      %1735 = vmatprep.subr.bf16.mxu0 0
      %1736 = vmatpush1.bf16.msra.mxu0 0
      %1737 = vmatprep.subr.bf16.mxu0 0
      %1738 = vmatpush1.bf16.msra.mxu0 0
      %1739 = vmatprep.subr.bf16.mxu0 0
      %1740 = vmatpush1.bf16.msra.mxu0 0
      %1741 = vmatprep.subr.bf16.mxu0 0
      %1742 = vmatpush1.bf16.msra.mxu0 0
      %1743 = vmatprep.mubr.bf16.mxu0 0
      %1744 = vmatmul.mubr.bf16.gmra.mrb[0].mxu0 %v1706
      %v1745 = vpop.f32.mrb[0].mxu0
      %v1746 = vadd.f32 0.0, %v1745
      %v1747 = vpop.f32.mrb[0].mxu0
      %v1748 = vadd.f32 0.0, %v1747
      %v1749 = vpop.f32.mrb[0].mxu0
      %v1750 = vadd.f32 0.0, %v1749
      %v1751 = vpop.f32.mrb[0].mxu0
      %v1752 = vadd.f32 0.0, %v1751
      %1753 = vmatprep.mubr.bf16.mxu0 0
      %1754 = vmatmul.mubr.bf16.gmra.mrb[0].mxu0 %v1709
      %v1755 = vpop.f32.mrb[0].mxu0
      %v1756 = vadd.f32 0.0, %v1755
      %v1757 = vpop.f32.mrb[0].mxu0
      %v1758 = vadd.f32 0.0, %v1757
      %v1759 = vpop.f32.mrb[0].mxu0
      %v1760 = vadd.f32 0.0, %v1759
      %v1761 = vpop.f32.mrb[0].mxu0
      %v1762 = vadd.f32 0.0, %v1761
      %1763 = vdwg.mxu0
      %v1764 = vadd.f32 %v1675, %v1746
      %v1765 = vadd.f32 %v1676, %v1748
      %v1766 = vadd.f32 %v1677, %v1750
      %v1767 = vadd.f32 %v1678, %v1752
      %v1768 = vadd.f32 %v1679, %v1756
      %v1769 = vadd.f32 %v1680, %v1758
      %v1770 = vadd.f32 %v1681, %v1760
      %v1771 = vadd.f32 %v1682, %v1762
      %v1772 = vld [vmem:[%s4] sm:$0xff]
      %v1773 = vld [vmem:[%s4 + $0x8] sm:$0xff]
      %v1774 = vld [vmem:[%s4 + $0x10] sm:$0xff]
      %v1775 = vld [vmem:[%s4 + $0x18] sm:$0xff]
      %1777 = vset.pattern.permute.xlu0 0
      %1778 = vperm.xlu0 %1777, %v1772
      %v1779 = vpop.permute.xlu0 %1778
      %1782 = vset.pattern.permute.xlu0 0
      %1783 = vperm.xlu0 %1782, %v1773
      %v1784 = vpop.permute.xlu0 %1783
      %1787 = vset.pattern.permute.xlu0 0
      %1788 = vperm.xlu0 %1787, %v1774
      %v1789 = vpop.permute.xlu0 %1788
      %1792 = vset.pattern.permute.xlu0 0
      %1793 = vperm.xlu0 %1792, %v1775
      %v1794 = vpop.permute.xlu0 %1793
      %v1796 = vadd.f32 %v1764, %v1779
      %v1797 = vadd.f32 %v1765, %v1779
      %v1798 = vadd.f32 %v1766, %v1784
      %v1799 = vadd.f32 %v1767, %v1784
      %v1800 = vadd.f32 %v1768, %v1789
      %v1801 = vadd.f32 %v1769, %v1789
      %v1802 = vadd.f32 %v1770, %v1794
      %v1803 = vadd.f32 %v1771, %v1794
      %v1804 = vmax.f32 %v1796, 0.0
      %v1805 = vmax.f32 %v1797, 0.0
      %v1806 = vmax.f32 %v1798, 0.0
      %v1807 = vmax.f32 %v1799, 0.0
      %v1808 = vmax.f32 %v1800, 0.0
      %v1809 = vmax.f32 %v1801, 0.0
      %v1810 = vmax.f32 %v1802, 0.0
      %v1811 = vmax.f32 %v1803, 0.0
      %1812 = vst [vmem:[#allocation3] sm:$0xff] %v1804
      %vm1813 = vcmask 490496
      %1814 = vst.msk [vmem:[#allocation3 + $0x8] sm:$0xff] %vm1813, %v1805
      %1815 = vst [vmem:[#allocation3 + $0x10] sm:$0xff] %v1806
      %1816 = vst.msk [vmem:[#allocation3 + $0x18] sm:$0xff] %vm1813, %v1807
      %1817 = vst [vmem:[#allocation3 + $0x20] sm:$0xff] %v1808
      %1818 = vst.msk [vmem:[#allocation3 + $0x28] sm:$0xff] %vm1813, %v1809
      %1819 = vst [vmem:[#allocation3 + $0x30] sm:$0xff] %v1810
      %1820 = vst.msk [vmem:[#allocation3 + $0x38] sm:$0xff] %vm1813, %v1811
      %v1821 = vld [vmem:[%s5] sm:$0xf]
      %v1822 = vld [vmem:[%s5 + $0x4] sm:$0xf]
      %v1823 = vld [vmem:[%s5 + $0x8] sm:$0xf]
      %v1824 = vld [vmem:[%s5 + $0xc] sm:$0xf]
      %v1825 = vld [vmem:[%s5 + $0x10] sm:$0xf]
      %v1826 = vld [vmem:[%s5 + $0x14] sm:$0xf]
      %v1827 = vld [vmem:[%s5 + $0x18] sm:$0xf]
      %v1828 = vld [vmem:[%s5 + $0x1c] sm:$0xf]
      %v1829 = vld [vmem:[#allocation3] sm:$0xff]
      %v1830 = vld [vmem:[#allocation3 + $0x8] sm:$0xff]
      %v1831 = vld [vmem:[#allocation3 + $0x10] sm:$0xff]
      %v1832 = vld [vmem:[#allocation3 + $0x18] sm:$0xff]
      %v1833 = vld [vmem:[#allocation3 + $0x20] sm:$0xff]
      %v1834 = vld [vmem:[#allocation3 + $0x28] sm:$0xff]
      %v1835 = vld [vmem:[#allocation3 + $0x30] sm:$0xff]
      %v1836 = vld [vmem:[#allocation3 + $0x38] sm:$0xff]
      %v1837 = vpack.c.bf16 %v1831, %v1829
      %v1838 = vpack.c.bf16 %v1832, %v1830
      %v1839 = vpack.c.bf16 %v1835, %v1833
      %v1840 = vpack.c.bf16 %v1836, %v1834
      %s1841 = scalar_lea.vmem %s5, 32
      %v1842 = vld [vmem:[%s1841] sm:$0xf]
      %v1843 = vld [vmem:[%s1841 + $0x4] sm:$0xf]
      %v1844 = vld [vmem:[%s1841 + $0x8] sm:$0xf]
      %v1845 = vld [vmem:[%s1841 + $0xc] sm:$0xf]
      %v1846 = vld [vmem:[%s1841 + $0x10] sm:$0xf]
      %v1847 = vld [vmem:[%s1841 + $0x14] sm:$0xf]
      %v1848 = vld [vmem:[%s1841 + $0x18] sm:$0xf]
      %v1849 = vld [vmem:[%s1841 + $0x1c] sm:$0xf]
      %v1858 = vunpack.c.l.b16 %v1842
      %v1859 = vunpack.c.l.b16 %v1843
      %v1860 = vunpack.c.l.b16 %v1844
      %v1861 = vunpack.c.l.b16 %v1845
      %v1862 = vunpack.c.l.b16 %v1846
      %v1863 = vunpack.c.l.b16 %v1847
      %v1864 = vunpack.c.l.b16 %v1848
      %v1865 = vunpack.c.l.b16 %v1849
      %v1866 = vpack.c.b16 %v1859, %v1858
      %v1867 = vpack.c.b16 %v1861, %v1860
      %v1868 = vpack.c.b16 %v1863, %v1862
      %v1869 = vpack.c.b16 %v1865, %v1864
      %1874 = vrot.lane.b32.xlu0 %v1837, 127
      %v1875 = vpop.permute.xlu0 %1874
      %1876 = vrot.lane.b32.xlu0 %v1838, 127
      %v1877 = vpop.permute.xlu0 %1876
      %1878 = vrot.lane.b32.xlu0 %v1839, 127
      %v1879 = vpop.permute.xlu0 %1878
      %1880 = vrot.lane.b32.xlu0 %v1840, 127
      %v1881 = vpop.permute.xlu0 %1880
      %v1882 = vsel %vm302, %v1875, %v1877
      %v1883 = vsel %vm302, %v1879, %v1881
      %vm1888 = vcmask 261120
      %v1890 = vsel %vm1888, %v1866, 0
      %v1893 = vsel %vm1888, %v1867, 0
      %v1896 = vsel %vm1888, %v1868, 0
      %v1899 = vsel %vm1888, %v1869, 0
      %1901 = vmatprep.subr.bf16.mxu0 %v1877
      %1902 = vmatpush1.bf16.msra.mxu0 %v1882
      %1903 = vmatprep.subr.bf16.mxu0 %v1881
      %1904 = vmatpush1.bf16.msra.mxu0 %v1883
      %1905 = vmatprep.subr.bf16.mxu0 0
      %1906 = vmatpush1.bf16.msra.mxu0 0
      %1907 = vmatprep.subr.bf16.mxu0 0
      %1908 = vmatpush1.bf16.msra.mxu0 0
      %1909 = vmatprep.subr.bf16.mxu0 0
      %1910 = vmatpush1.bf16.msra.mxu0 0
      %1911 = vmatprep.subr.bf16.mxu0 0
      %1912 = vmatpush1.bf16.msra.mxu0 0
      %1913 = vmatprep.subr.bf16.mxu0 0
      %1914 = vmatpush1.bf16.msra.mxu0 0
      %1915 = vmatprep.subr.bf16.mxu0 0
      %1916 = vmatpush1.bf16.msra.mxu0 0
      %1917 = vmatprep.subr.bf16.mxu0 0
      %1918 = vmatpush1.bf16.msra.mxu0 0
      %1919 = vmatprep.subr.bf16.mxu0 0
      %1920 = vmatpush1.bf16.msra.mxu0 0
      %1921 = vmatprep.subr.bf16.mxu0 0
      %1922 = vmatpush1.bf16.msra.mxu0 0
      %1923 = vmatprep.subr.bf16.mxu0 0
      %1924 = vmatpush1.bf16.msra.mxu0 0
      %1925 = vmatprep.subr.bf16.mxu0 0
      %1926 = vmatpush1.bf16.msra.mxu0 0
      %1927 = vmatprep.subr.bf16.mxu0 0
      %1928 = vmatpush1.bf16.msra.mxu0 0
      %1929 = vmatprep.subr.bf16.mxu0 0
      %1930 = vmatpush1.bf16.msra.mxu0 0
      %1931 = vmatprep.subr.bf16.mxu0 0
      %1932 = vmatpush1.bf16.msra.mxu0 0
      %1933 = vmatprep.mubr.bf16.mxu0 0
      %1934 = vmatmul.mubr.bf16.gmra.mrb[0].mxu0 %v1890
      %v1935 = vpop.f32.mrb[0].mxu0
      %v1936 = vadd.f32 0.0, %v1935
      %v1937 = vpop.f32.mrb[0].mxu0
      %v1938 = vadd.f32 0.0, %v1937
      %v1939 = vpop.f32.mrb[0].mxu0
      %v1940 = vadd.f32 0.0, %v1939
      %v1941 = vpop.f32.mrb[0].mxu0
      %v1942 = vadd.f32 0.0, %v1941
      %1943 = vmatprep.mubr.bf16.mxu0 0
      %1944 = vmatmul.mubr.bf16.gmra.mrb[0].mxu0 %v1893
      %v1945 = vpop.f32.mrb[0].mxu0
      %v1946 = vadd.f32 0.0, %v1945
      %v1947 = vpop.f32.mrb[0].mxu0
      %v1948 = vadd.f32 0.0, %v1947
      %v1949 = vpop.f32.mrb[0].mxu0
      %v1950 = vadd.f32 0.0, %v1949
      %v1951 = vpop.f32.mrb[0].mxu0
      %v1952 = vadd.f32 0.0, %v1951
      %1953 = vmatprep.mubr.bf16.mxu0 0
      %1954 = vmatmul.mubr.bf16.gmra.mrb[0].mxu0 %v1896
      %v1955 = vpop.f32.mrb[0].mxu0
      %v1956 = vadd.f32 0.0, %v1955
      %v1957 = vpop.f32.mrb[0].mxu0
      %v1958 = vadd.f32 0.0, %v1957
      %v1959 = vpop.f32.mrb[0].mxu0
      %v1960 = vadd.f32 0.0, %v1959
      %v1961 = vpop.f32.mrb[0].mxu0
      %v1962 = vadd.f32 0.0, %v1961
      %1963 = vmatprep.mubr.bf16.mxu0 0
      %1964 = vmatmul.mubr.bf16.gmra.mrb[0].mxu0 %v1899
      %v1965 = vpop.f32.mrb[0].mxu0
      %v1966 = vadd.f32 0.0, %v1965
      %v1967 = vpop.f32.mrb[0].mxu0
      %v1968 = vadd.f32 0.0, %v1967
      %v1969 = vpop.f32.mrb[0].mxu0
      %v1970 = vadd.f32 0.0, %v1969
      %v1971 = vpop.f32.mrb[0].mxu0
      %v1972 = vadd.f32 0.0, %v1971
      %1973 = vdwg.mxu0
      %v1982 = vunpack.c.l.b16 %v1821
      %v1983 = vunpack.c.l.b16 %v1822
      %v1984 = vunpack.c.l.b16 %v1823
      %v1985 = vunpack.c.l.b16 %v1824
      %v1986 = vunpack.c.l.b16 %v1825
      %v1987 = vunpack.c.l.b16 %v1826
      %v1988 = vunpack.c.l.b16 %v1827
      %v1989 = vunpack.c.l.b16 %v1828
      %v1990 = vpack.c.b16 %v1983, %v1982
      %v1991 = vpack.c.b16 %v1985, %v1984
      %v1992 = vpack.c.b16 %v1987, %v1986
      %v1993 = vpack.c.b16 %v1989, %v1988
      %v1995 = vsel %vm1888, %v1990, 0
      %v1998 = vsel %vm1888, %v1991, 0
      %v2001 = vsel %vm1888, %v1992, 0
      %v2004 = vsel %vm1888, %v1993, 0
      %2006 = vmatprep.subr.bf16.mxu0 %v1838
      %2007 = vmatpush1.bf16.msra.mxu0 %v1837
      %2008 = vmatprep.subr.bf16.mxu0 %v1840
      %2009 = vmatpush1.bf16.msra.mxu0 %v1839
      %2010 = vmatprep.subr.bf16.mxu0 0
      %2011 = vmatpush1.bf16.msra.mxu0 0
      %2012 = vmatprep.subr.bf16.mxu0 0
      %2013 = vmatpush1.bf16.msra.mxu0 0
      %2014 = vmatprep.subr.bf16.mxu0 0
      %2015 = vmatpush1.bf16.msra.mxu0 0
      %2016 = vmatprep.subr.bf16.mxu0 0
      %2017 = vmatpush1.bf16.msra.mxu0 0
      %2018 = vmatprep.subr.bf16.mxu0 0
      %2019 = vmatpush1.bf16.msra.mxu0 0
      %2020 = vmatprep.subr.bf16.mxu0 0
      %2021 = vmatpush1.bf16.msra.mxu0 0
      %2022 = vmatprep.subr.bf16.mxu0 0
      %2023 = vmatpush1.bf16.msra.mxu0 0
      %2024 = vmatprep.subr.bf16.mxu0 0
      %2025 = vmatpush1.bf16.msra.mxu0 0
      %2026 = vmatprep.subr.bf16.mxu0 0
      %2027 = vmatpush1.bf16.msra.mxu0 0
      %2028 = vmatprep.subr.bf16.mxu0 0
      %2029 = vmatpush1.bf16.msra.mxu0 0
      %2030 = vmatprep.subr.bf16.mxu0 0
      %2031 = vmatpush1.bf16.msra.mxu0 0
      %2032 = vmatprep.subr.bf16.mxu0 0
      %2033 = vmatpush1.bf16.msra.mxu0 0
      %2034 = vmatprep.subr.bf16.mxu0 0
      %2035 = vmatpush1.bf16.msra.mxu0 0
      %2036 = vmatprep.subr.bf16.mxu0 0
      %2037 = vmatpush1.bf16.msra.mxu0 0
      %2038 = vmatprep.mubr.bf16.mxu0 0
      %2039 = vmatmul.mubr.bf16.gmra.mrb[0].mxu0 %v1995
      %v2040 = vpop.f32.mrb[0].mxu0
      %v2041 = vadd.f32 %v1936, %v2040
      %v2042 = vpop.f32.mrb[0].mxu0
      %v2043 = vadd.f32 %v1938, %v2042
      %v2044 = vpop.f32.mrb[0].mxu0
      %v2045 = vadd.f32 %v1940, %v2044
      %v2046 = vpop.f32.mrb[0].mxu0
      %v2047 = vadd.f32 %v1942, %v2046
      %2048 = vmatprep.mubr.bf16.mxu0 0
      %2049 = vmatmul.mubr.bf16.gmra.mrb[0].mxu0 %v1998
      %v2050 = vpop.f32.mrb[0].mxu0
      %v2051 = vadd.f32 %v1946, %v2050
      %v2052 = vpop.f32.mrb[0].mxu0
      %v2053 = vadd.f32 %v1948, %v2052
      %v2054 = vpop.f32.mrb[0].mxu0
      %v2055 = vadd.f32 %v1950, %v2054
      %v2056 = vpop.f32.mrb[0].mxu0
      %v2057 = vadd.f32 %v1952, %v2056
      %2058 = vmatprep.mubr.bf16.mxu0 0
      %2059 = vmatmul.mubr.bf16.gmra.mrb[0].mxu0 %v2001
      %v2060 = vpop.f32.mrb[0].mxu0
      %v2061 = vadd.f32 %v1956, %v2060
      %v2062 = vpop.f32.mrb[0].mxu0
      %v2063 = vadd.f32 %v1958, %v2062
      %v2064 = vpop.f32.mrb[0].mxu0
      %v2065 = vadd.f32 %v1960, %v2064
      %v2066 = vpop.f32.mrb[0].mxu0
      %v2067 = vadd.f32 %v1962, %v2066
      %2068 = vmatprep.mubr.bf16.mxu0 0
      %2069 = vmatmul.mubr.bf16.gmra.mrb[0].mxu0 %v2004
      %v2070 = vpop.f32.mrb[0].mxu0
      %v2071 = vadd.f32 %v1966, %v2070
      %v2072 = vpop.f32.mrb[0].mxu0
      %v2073 = vadd.f32 %v1968, %v2072
      %v2074 = vpop.f32.mrb[0].mxu0
      %v2075 = vadd.f32 %v1970, %v2074
      %v2076 = vpop.f32.mrb[0].mxu0
      %v2077 = vadd.f32 %v1972, %v2076
      %2078 = vdwg.mxu0
      %s2079 = scalar_lea.vmem %s5, 64
      %v2080 = vld [vmem:[%s2079] sm:$0xf]
      %v2081 = vld [vmem:[%s2079 + $0x4] sm:$0xf]
      %v2082 = vld [vmem:[%s2079 + $0x8] sm:$0xf]
      %v2083 = vld [vmem:[%s2079 + $0xc] sm:$0xf]
      %v2084 = vld [vmem:[%s2079 + $0x10] sm:$0xf]
      %v2085 = vld [vmem:[%s2079 + $0x14] sm:$0xf]
      %v2086 = vld [vmem:[%s2079 + $0x18] sm:$0xf]
      %v2087 = vld [vmem:[%s2079 + $0x1c] sm:$0xf]
      %v2096 = vunpack.c.l.b16 %v2080
      %v2097 = vunpack.c.l.b16 %v2081
      %v2098 = vunpack.c.l.b16 %v2082
      %v2099 = vunpack.c.l.b16 %v2083
      %v2100 = vunpack.c.l.b16 %v2084
      %v2101 = vunpack.c.l.b16 %v2085
      %v2102 = vunpack.c.l.b16 %v2086
      %v2103 = vunpack.c.l.b16 %v2087
      %v2104 = vpack.c.b16 %v2097, %v2096
      %v2105 = vpack.c.b16 %v2099, %v2098
      %v2106 = vpack.c.b16 %v2101, %v2100
      %v2107 = vpack.c.b16 %v2103, %v2102
      %2108 = vrot.lane.b32.xlu0 %v1837, 126
      %v2109 = vpop.permute.xlu0 %2108
      %2110 = vrot.lane.b32.xlu0 %v1838, 126
      %v2111 = vpop.permute.xlu0 %2110
      %2112 = vrot.lane.b32.xlu0 %v1839, 126
      %v2113 = vpop.permute.xlu0 %2112
      %2114 = vrot.lane.b32.xlu0 %v1840, 126
      %v2115 = vpop.permute.xlu0 %2114
      %v2116 = vsel %vm435, %v2109, %v2111
      %v2117 = vsel %vm435, %v2113, %v2115
      %v2123 = vsel %vm1888, %v2104, 0
      %v2126 = vsel %vm1888, %v2105, 0
      %v2129 = vsel %vm1888, %v2106, 0
      %v2132 = vsel %vm1888, %v2107, 0
      %2134 = vmatprep.subr.bf16.mxu0 %v2111
      %2135 = vmatpush1.bf16.msra.mxu0 %v2116
      %2136 = vmatprep.subr.bf16.mxu0 %v2115
      %2137 = vmatpush1.bf16.msra.mxu0 %v2117
      %2138 = vmatprep.subr.bf16.mxu0 0
      %2139 = vmatpush1.bf16.msra.mxu0 0
      %2140 = vmatprep.subr.bf16.mxu0 0
      %2141 = vmatpush1.bf16.msra.mxu0 0
      %2142 = vmatprep.subr.bf16.mxu0 0
      %2143 = vmatpush1.bf16.msra.mxu0 0
      %2144 = vmatprep.subr.bf16.mxu0 0
      %2145 = vmatpush1.bf16.msra.mxu0 0
      %2146 = vmatprep.subr.bf16.mxu0 0
      %2147 = vmatpush1.bf16.msra.mxu0 0
      %2148 = vmatprep.subr.bf16.mxu0 0
      %2149 = vmatpush1.bf16.msra.mxu0 0
      %2150 = vmatprep.subr.bf16.mxu0 0
      %2151 = vmatpush1.bf16.msra.mxu0 0
      %2152 = vmatprep.subr.bf16.mxu0 0
      %2153 = vmatpush1.bf16.msra.mxu0 0
      %2154 = vmatprep.subr.bf16.mxu0 0
      %2155 = vmatpush1.bf16.msra.mxu0 0
      %2156 = vmatprep.subr.bf16.mxu0 0
      %2157 = vmatpush1.bf16.msra.mxu0 0
      %2158 = vmatprep.subr.bf16.mxu0 0
      %2159 = vmatpush1.bf16.msra.mxu0 0
      %2160 = vmatprep.subr.bf16.mxu0 0
      %2161 = vmatpush1.bf16.msra.mxu0 0
      %2162 = vmatprep.subr.bf16.mxu0 0
      %2163 = vmatpush1.bf16.msra.mxu0 0
      %2164 = vmatprep.subr.bf16.mxu0 0
      %2165 = vmatpush1.bf16.msra.mxu0 0
      %2166 = vmatprep.mubr.bf16.mxu0 0
      %2167 = vmatmul.mubr.bf16.gmra.mrb[0].mxu0 %v2123
      %v2168 = vpop.f32.mrb[0].mxu0
      %v2169 = vadd.f32 0.0, %v2168
      %v2170 = vpop.f32.mrb[0].mxu0
      %v2171 = vadd.f32 0.0, %v2170
      %v2172 = vpop.f32.mrb[0].mxu0
      %v2173 = vadd.f32 0.0, %v2172
      %v2174 = vpop.f32.mrb[0].mxu0
      %v2175 = vadd.f32 0.0, %v2174
      %2176 = vmatprep.mubr.bf16.mxu0 0
      %2177 = vmatmul.mubr.bf16.gmra.mrb[0].mxu0 %v2126
      %v2178 = vpop.f32.mrb[0].mxu0
      %v2179 = vadd.f32 0.0, %v2178
      %v2180 = vpop.f32.mrb[0].mxu0
      %v2181 = vadd.f32 0.0, %v2180
      %v2182 = vpop.f32.mrb[0].mxu0
      %v2183 = vadd.f32 0.0, %v2182
      %v2184 = vpop.f32.mrb[0].mxu0
      %v2185 = vadd.f32 0.0, %v2184
      %2186 = vmatprep.mubr.bf16.mxu0 0
      %2187 = vmatmul.mubr.bf16.gmra.mrb[0].mxu0 %v2129
      %v2188 = vpop.f32.mrb[0].mxu0
      %v2189 = vadd.f32 0.0, %v2188
      %v2190 = vpop.f32.mrb[0].mxu0
      %v2191 = vadd.f32 0.0, %v2190
      %v2192 = vpop.f32.mrb[0].mxu0
      %v2193 = vadd.f32 0.0, %v2192
      %v2194 = vpop.f32.mrb[0].mxu0
      %v2195 = vadd.f32 0.0, %v2194
      %2196 = vmatprep.mubr.bf16.mxu0 0
      %2197 = vmatmul.mubr.bf16.gmra.mrb[0].mxu0 %v2132
      %v2198 = vpop.f32.mrb[0].mxu0
      %v2199 = vadd.f32 0.0, %v2198
      %v2200 = vpop.f32.mrb[0].mxu0
      %v2201 = vadd.f32 0.0, %v2200
      %v2202 = vpop.f32.mrb[0].mxu0
      %v2203 = vadd.f32 0.0, %v2202
      %v2204 = vpop.f32.mrb[0].mxu0
      %v2205 = vadd.f32 0.0, %v2204
      %2206 = vdwg.mxu0
      %v2207 = vadd.f32 %v2041, %v2169
      %v2208 = vadd.f32 %v2043, %v2171
      %v2209 = vadd.f32 %v2045, %v2173
      %v2210 = vadd.f32 %v2047, %v2175
      %v2211 = vadd.f32 %v2051, %v2179
      %v2212 = vadd.f32 %v2053, %v2181
      %v2213 = vadd.f32 %v2055, %v2183
      %v2214 = vadd.f32 %v2057, %v2185
      %v2215 = vadd.f32 %v2061, %v2189
      %v2216 = vadd.f32 %v2063, %v2191
      %v2217 = vadd.f32 %v2065, %v2193
      %v2218 = vadd.f32 %v2067, %v2195
      %v2219 = vadd.f32 %v2071, %v2199
      %v2220 = vadd.f32 %v2073, %v2201
      %v2221 = vadd.f32 %v2075, %v2203
      %v2222 = vadd.f32 %v2077, %v2205
      %s2223 = scalar_lea.vmem %s5, 96
      %v2224 = vld [vmem:[%s2223] sm:$0xf]
      %v2225 = vld [vmem:[%s2223 + $0x4] sm:$0xf]
      %v2226 = vld [vmem:[%s2223 + $0x8] sm:$0xf]
      %v2227 = vld [vmem:[%s2223 + $0xc] sm:$0xf]
      %v2228 = vld [vmem:[%s2223 + $0x10] sm:$0xf]
      %v2229 = vld [vmem:[%s2223 + $0x14] sm:$0xf]
      %v2230 = vld [vmem:[%s2223 + $0x18] sm:$0xf]
      %v2231 = vld [vmem:[%s2223 + $0x1c] sm:$0xf]
      %v2240 = vunpack.c.l.b16 %v2224
      %v2241 = vunpack.c.l.b16 %v2225
      %v2242 = vunpack.c.l.b16 %v2226
      %v2243 = vunpack.c.l.b16 %v2227
      %v2244 = vunpack.c.l.b16 %v2228
      %v2245 = vunpack.c.l.b16 %v2229
      %v2246 = vunpack.c.l.b16 %v2230
      %v2247 = vunpack.c.l.b16 %v2231
      %v2248 = vpack.c.b16 %v2241, %v2240
      %v2249 = vpack.c.b16 %v2243, %v2242
      %v2250 = vpack.c.b16 %v2245, %v2244
      %v2251 = vpack.c.b16 %v2247, %v2246
      %2252 = vrot.lane.b32.xlu0 %v1837, 112
      %v2253 = vpop.permute.xlu0 %2252
      %2254 = vrot.lane.b32.xlu0 %v1838, 112
      %v2255 = vpop.permute.xlu0 %2254
      %2256 = vrot.lane.b32.xlu0 %v1839, 112
      %v2257 = vpop.permute.xlu0 %2256
      %2258 = vrot.lane.b32.xlu0 %v1840, 112
      %v2259 = vpop.permute.xlu0 %2258
      %v2260 = vsel %vm513, %v2253, %v2255
      %v2261 = vsel %vm513, %v2257, %v2259
      %v2267 = vsel %vm1888, %v2248, 0
      %v2270 = vsel %vm1888, %v2249, 0
      %v2273 = vsel %vm1888, %v2250, 0
      %v2276 = vsel %vm1888, %v2251, 0
      %2278 = vmatprep.subr.bf16.mxu0 %v2255
      %2279 = vmatpush1.bf16.msra.mxu0 %v2260
      %2280 = vmatprep.subr.bf16.mxu0 %v2259
      %2281 = vmatpush1.bf16.msra.mxu0 %v2261
      %2282 = vmatprep.subr.bf16.mxu0 0
      %2283 = vmatpush1.bf16.msra.mxu0 0
      %2284 = vmatprep.subr.bf16.mxu0 0
      %2285 = vmatpush1.bf16.msra.mxu0 0
      %2286 = vmatprep.subr.bf16.mxu0 0
      %2287 = vmatpush1.bf16.msra.mxu0 0
      %2288 = vmatprep.subr.bf16.mxu0 0
      %2289 = vmatpush1.bf16.msra.mxu0 0
      %2290 = vmatprep.subr.bf16.mxu0 0
      %2291 = vmatpush1.bf16.msra.mxu0 0
      %2292 = vmatprep.subr.bf16.mxu0 0
      %2293 = vmatpush1.bf16.msra.mxu0 0
      %2294 = vmatprep.subr.bf16.mxu0 0
      %2295 = vmatpush1.bf16.msra.mxu0 0
      %2296 = vmatprep.subr.bf16.mxu0 0
      %2297 = vmatpush1.bf16.msra.mxu0 0
      %2298 = vmatprep.subr.bf16.mxu0 0
      %2299 = vmatpush1.bf16.msra.mxu0 0
      %2300 = vmatprep.subr.bf16.mxu0 0
      %2301 = vmatpush1.bf16.msra.mxu0 0
      %2302 = vmatprep.subr.bf16.mxu0 0
      %2303 = vmatpush1.bf16.msra.mxu0 0
      %2304 = vmatprep.subr.bf16.mxu0 0
      %2305 = vmatpush1.bf16.msra.mxu0 0
      %2306 = vmatprep.subr.bf16.mxu0 0
      %2307 = vmatpush1.bf16.msra.mxu0 0
      %2308 = vmatprep.subr.bf16.mxu0 0
      %2309 = vmatpush1.bf16.msra.mxu0 0
      %2310 = vmatprep.mubr.bf16.mxu0 0
      %2311 = vmatmul.mubr.bf16.gmra.mrb[0].mxu0 %v2267
      %v2312 = vpop.f32.mrb[0].mxu0
      %v2313 = vadd.f32 0.0, %v2312
      %v2314 = vpop.f32.mrb[0].mxu0
      %v2315 = vadd.f32 0.0, %v2314
      %v2316 = vpop.f32.mrb[0].mxu0
      %v2317 = vadd.f32 0.0, %v2316
      %v2318 = vpop.f32.mrb[0].mxu0
      %v2319 = vadd.f32 0.0, %v2318
      %2320 = vmatprep.mubr.bf16.mxu0 0
      %2321 = vmatmul.mubr.bf16.gmra.mrb[0].mxu0 %v2270
      %v2322 = vpop.f32.mrb[0].mxu0
      %v2323 = vadd.f32 0.0, %v2322
      %v2324 = vpop.f32.mrb[0].mxu0
      %v2325 = vadd.f32 0.0, %v2324
      %v2326 = vpop.f32.mrb[0].mxu0
      %v2327 = vadd.f32 0.0, %v2326
      %v2328 = vpop.f32.mrb[0].mxu0
      %v2329 = vadd.f32 0.0, %v2328
      %2330 = vmatprep.mubr.bf16.mxu0 0
      %2331 = vmatmul.mubr.bf16.gmra.mrb[0].mxu0 %v2273
      %v2332 = vpop.f32.mrb[0].mxu0
      %v2333 = vadd.f32 0.0, %v2332
      %v2334 = vpop.f32.mrb[0].mxu0
      %v2335 = vadd.f32 0.0, %v2334
      %v2336 = vpop.f32.mrb[0].mxu0
      %v2337 = vadd.f32 0.0, %v2336
      %v2338 = vpop.f32.mrb[0].mxu0
      %v2339 = vadd.f32 0.0, %v2338
      %2340 = vmatprep.mubr.bf16.mxu0 0
      %2341 = vmatmul.mubr.bf16.gmra.mrb[0].mxu0 %v2276
      %v2342 = vpop.f32.mrb[0].mxu0
      %v2343 = vadd.f32 0.0, %v2342
      %v2344 = vpop.f32.mrb[0].mxu0
      %v2345 = vadd.f32 0.0, %v2344
      %v2346 = vpop.f32.mrb[0].mxu0
      %v2347 = vadd.f32 0.0, %v2346
      %v2348 = vpop.f32.mrb[0].mxu0
      %v2349 = vadd.f32 0.0, %v2348
      %2350 = vdwg.mxu0
      %v2351 = vadd.f32 %v2207, %v2313
      %v2352 = vadd.f32 %v2208, %v2315
      %v2353 = vadd.f32 %v2209, %v2317
      %v2354 = vadd.f32 %v2210, %v2319
      %v2355 = vadd.f32 %v2211, %v2323
      %v2356 = vadd.f32 %v2212, %v2325
      %v2357 = vadd.f32 %v2213, %v2327
      %v2358 = vadd.f32 %v2214, %v2329
      %v2359 = vadd.f32 %v2215, %v2333
      %v2360 = vadd.f32 %v2216, %v2335
      %v2361 = vadd.f32 %v2217, %v2337
      %v2362 = vadd.f32 %v2218, %v2339
      %v2363 = vadd.f32 %v2219, %v2343
      %v2364 = vadd.f32 %v2220, %v2345
      %v2365 = vadd.f32 %v2221, %v2347
      %v2366 = vadd.f32 %v2222, %v2349
      %s2367 = scalar_lea.vmem %s5, 128
      %v2368 = vld [vmem:[%s2367] sm:$0xf]
      %v2369 = vld [vmem:[%s2367 + $0x4] sm:$0xf]
      %v2370 = vld [vmem:[%s2367 + $0x8] sm:$0xf]
      %v2371 = vld [vmem:[%s2367 + $0xc] sm:$0xf]
      %v2372 = vld [vmem:[%s2367 + $0x10] sm:$0xf]
      %v2373 = vld [vmem:[%s2367 + $0x14] sm:$0xf]
      %v2374 = vld [vmem:[%s2367 + $0x18] sm:$0xf]
      %v2375 = vld [vmem:[%s2367 + $0x1c] sm:$0xf]
      %v2384 = vunpack.c.l.b16 %v2368
      %v2385 = vunpack.c.l.b16 %v2369
      %v2386 = vunpack.c.l.b16 %v2370
      %v2387 = vunpack.c.l.b16 %v2371
      %v2388 = vunpack.c.l.b16 %v2372
      %v2389 = vunpack.c.l.b16 %v2373
      %v2390 = vunpack.c.l.b16 %v2374
      %v2391 = vunpack.c.l.b16 %v2375
      %v2392 = vpack.c.b16 %v2385, %v2384
      %v2393 = vpack.c.b16 %v2387, %v2386
      %v2394 = vpack.c.b16 %v2389, %v2388
      %v2395 = vpack.c.b16 %v2391, %v2390
      %2396 = vrot.lane.b32.xlu0 %v1837, 111
      %v2397 = vpop.permute.xlu0 %2396
      %2398 = vrot.lane.b32.xlu0 %v1838, 111
      %v2399 = vpop.permute.xlu0 %2398
      %2400 = vrot.lane.b32.xlu0 %v1839, 111
      %v2401 = vpop.permute.xlu0 %2400
      %2402 = vrot.lane.b32.xlu0 %v1840, 111
      %v2403 = vpop.permute.xlu0 %2402
      %v2404 = vsel %vm591, %v2397, %v2399
      %v2405 = vsel %vm591, %v2401, %v2403
      %v2411 = vsel %vm1888, %v2392, 0
      %v2414 = vsel %vm1888, %v2393, 0
      %v2417 = vsel %vm1888, %v2394, 0
      %v2420 = vsel %vm1888, %v2395, 0
      %2422 = vmatprep.subr.bf16.mxu0 %v2399
      %2423 = vmatpush1.bf16.msra.mxu0 %v2404
      %2424 = vmatprep.subr.bf16.mxu0 %v2403
      %2425 = vmatpush1.bf16.msra.mxu0 %v2405
      %2426 = vmatprep.subr.bf16.mxu0 0
      %2427 = vmatpush1.bf16.msra.mxu0 0
      %2428 = vmatprep.subr.bf16.mxu0 0
      %2429 = vmatpush1.bf16.msra.mxu0 0
      %2430 = vmatprep.subr.bf16.mxu0 0
      %2431 = vmatpush1.bf16.msra.mxu0 0
      %2432 = vmatprep.subr.bf16.mxu0 0
      %2433 = vmatpush1.bf16.msra.mxu0 0
      %2434 = vmatprep.subr.bf16.mxu0 0
      %2435 = vmatpush1.bf16.msra.mxu0 0
      %2436 = vmatprep.subr.bf16.mxu0 0
      %2437 = vmatpush1.bf16.msra.mxu0 0
      %2438 = vmatprep.subr.bf16.mxu0 0
      %2439 = vmatpush1.bf16.msra.mxu0 0
      %2440 = vmatprep.subr.bf16.mxu0 0
      %2441 = vmatpush1.bf16.msra.mxu0 0
      %2442 = vmatprep.subr.bf16.mxu0 0
      %2443 = vmatpush1.bf16.msra.mxu0 0
      %2444 = vmatprep.subr.bf16.mxu0 0
      %2445 = vmatpush1.bf16.msra.mxu0 0
      %2446 = vmatprep.subr.bf16.mxu0 0
      %2447 = vmatpush1.bf16.msra.mxu0 0
      %2448 = vmatprep.subr.bf16.mxu0 0
      %2449 = vmatpush1.bf16.msra.mxu0 0
      %2450 = vmatprep.subr.bf16.mxu0 0
      %2451 = vmatpush1.bf16.msra.mxu0 0
      %2452 = vmatprep.subr.bf16.mxu0 0
      %2453 = vmatpush1.bf16.msra.mxu0 0
      %2454 = vmatprep.mubr.bf16.mxu0 0
      %2455 = vmatmul.mubr.bf16.gmra.mrb[0].mxu0 %v2411
      %v2456 = vpop.f32.mrb[0].mxu0
      %v2457 = vadd.f32 0.0, %v2456
      %v2458 = vpop.f32.mrb[0].mxu0
      %v2459 = vadd.f32 0.0, %v2458
      %v2460 = vpop.f32.mrb[0].mxu0
      %v2461 = vadd.f32 0.0, %v2460
      %v2462 = vpop.f32.mrb[0].mxu0
      %v2463 = vadd.f32 0.0, %v2462
      %2464 = vmatprep.mubr.bf16.mxu0 0
      %2465 = vmatmul.mubr.bf16.gmra.mrb[0].mxu0 %v2414
      %v2466 = vpop.f32.mrb[0].mxu0
      %v2467 = vadd.f32 0.0, %v2466
      %v2468 = vpop.f32.mrb[0].mxu0
      %v2469 = vadd.f32 0.0, %v2468
      %v2470 = vpop.f32.mrb[0].mxu0
      %v2471 = vadd.f32 0.0, %v2470
      %v2472 = vpop.f32.mrb[0].mxu0
      %v2473 = vadd.f32 0.0, %v2472
      %2474 = vmatprep.mubr.bf16.mxu0 0
      %2475 = vmatmul.mubr.bf16.gmra.mrb[0].mxu0 %v2417
      %v2476 = vpop.f32.mrb[0].mxu0
      %v2477 = vadd.f32 0.0, %v2476
      %v2478 = vpop.f32.mrb[0].mxu0
      %v2479 = vadd.f32 0.0, %v2478
      %v2480 = vpop.f32.mrb[0].mxu0
      %v2481 = vadd.f32 0.0, %v2480
      %v2482 = vpop.f32.mrb[0].mxu0
      %v2483 = vadd.f32 0.0, %v2482
      %2484 = vmatprep.mubr.bf16.mxu0 0
      %2485 = vmatmul.mubr.bf16.gmra.mrb[0].mxu0 %v2420
      %v2486 = vpop.f32.mrb[0].mxu0
      %v2487 = vadd.f32 0.0, %v2486
      %v2488 = vpop.f32.mrb[0].mxu0
      %v2489 = vadd.f32 0.0, %v2488
      %v2490 = vpop.f32.mrb[0].mxu0
      %v2491 = vadd.f32 0.0, %v2490
      %v2492 = vpop.f32.mrb[0].mxu0
      %v2493 = vadd.f32 0.0, %v2492
      %2494 = vdwg.mxu0
      %v2495 = vadd.f32 %v2351, %v2457
      %v2496 = vadd.f32 %v2352, %v2459
      %v2497 = vadd.f32 %v2353, %v2461
      %v2498 = vadd.f32 %v2354, %v2463
      %v2499 = vadd.f32 %v2355, %v2467
      %v2500 = vadd.f32 %v2356, %v2469
      %v2501 = vadd.f32 %v2357, %v2471
      %v2502 = vadd.f32 %v2358, %v2473
      %v2503 = vadd.f32 %v2359, %v2477
      %v2504 = vadd.f32 %v2360, %v2479
      %v2505 = vadd.f32 %v2361, %v2481
      %v2506 = vadd.f32 %v2362, %v2483
      %v2507 = vadd.f32 %v2363, %v2487
      %v2508 = vadd.f32 %v2364, %v2489
      %v2509 = vadd.f32 %v2365, %v2491
      %v2510 = vadd.f32 %v2366, %v2493
      %s2511 = scalar_lea.vmem %s5, 160
      %v2512 = vld [vmem:[%s2511] sm:$0xf]
      %v2513 = vld [vmem:[%s2511 + $0x4] sm:$0xf]
      %v2514 = vld [vmem:[%s2511 + $0x8] sm:$0xf]
      %v2515 = vld [vmem:[%s2511 + $0xc] sm:$0xf]
      %v2516 = vld [vmem:[%s2511 + $0x10] sm:$0xf]
      %v2517 = vld [vmem:[%s2511 + $0x14] sm:$0xf]
      %v2518 = vld [vmem:[%s2511 + $0x18] sm:$0xf]
      %v2519 = vld [vmem:[%s2511 + $0x1c] sm:$0xf]
      %v2528 = vunpack.c.l.b16 %v2512
      %v2529 = vunpack.c.l.b16 %v2513
      %v2530 = vunpack.c.l.b16 %v2514
      %v2531 = vunpack.c.l.b16 %v2515
      %v2532 = vunpack.c.l.b16 %v2516
      %v2533 = vunpack.c.l.b16 %v2517
      %v2534 = vunpack.c.l.b16 %v2518
      %v2535 = vunpack.c.l.b16 %v2519
      %v2536 = vpack.c.b16 %v2529, %v2528
      %v2537 = vpack.c.b16 %v2531, %v2530
      %v2538 = vpack.c.b16 %v2533, %v2532
      %v2539 = vpack.c.b16 %v2535, %v2534
      %2540 = vrot.lane.b32.xlu0 %v1837, 110
      %v2541 = vpop.permute.xlu0 %2540
      %2542 = vrot.lane.b32.xlu0 %v1838, 110
      %v2543 = vpop.permute.xlu0 %2542
      %2544 = vrot.lane.b32.xlu0 %v1839, 110
      %v2545 = vpop.permute.xlu0 %2544
      %2546 = vrot.lane.b32.xlu0 %v1840, 110
      %v2547 = vpop.permute.xlu0 %2546
      %v2548 = vsel %vm669, %v2541, %v2543
      %v2549 = vsel %vm669, %v2545, %v2547
      %v2555 = vsel %vm1888, %v2536, 0
      %v2558 = vsel %vm1888, %v2537, 0
      %v2561 = vsel %vm1888, %v2538, 0
      %v2564 = vsel %vm1888, %v2539, 0
      %2566 = vmatprep.subr.bf16.mxu0 %v2543
      %2567 = vmatpush1.bf16.msra.mxu0 %v2548
      %2568 = vmatprep.subr.bf16.mxu0 %v2547
      %2569 = vmatpush1.bf16.msra.mxu0 %v2549
      %2570 = vmatprep.subr.bf16.mxu0 0
      %2571 = vmatpush1.bf16.msra.mxu0 0
      %2572 = vmatprep.subr.bf16.mxu0 0
      %2573 = vmatpush1.bf16.msra.mxu0 0
      %2574 = vmatprep.subr.bf16.mxu0 0
      %2575 = vmatpush1.bf16.msra.mxu0 0
      %2576 = vmatprep.subr.bf16.mxu0 0
      %2577 = vmatpush1.bf16.msra.mxu0 0
      %2578 = vmatprep.subr.bf16.mxu0 0
      %2579 = vmatpush1.bf16.msra.mxu0 0
      %2580 = vmatprep.subr.bf16.mxu0 0
      %2581 = vmatpush1.bf16.msra.mxu0 0
      %2582 = vmatprep.subr.bf16.mxu0 0
      %2583 = vmatpush1.bf16.msra.mxu0 0
      %2584 = vmatprep.subr.bf16.mxu0 0
      %2585 = vmatpush1.bf16.msra.mxu0 0
      %2586 = vmatprep.subr.bf16.mxu0 0
      %2587 = vmatpush1.bf16.msra.mxu0 0
      %2588 = vmatprep.subr.bf16.mxu0 0
      %2589 = vmatpush1.bf16.msra.mxu0 0
      %2590 = vmatprep.subr.bf16.mxu0 0
      %2591 = vmatpush1.bf16.msra.mxu0 0
      %2592 = vmatprep.subr.bf16.mxu0 0
      %2593 = vmatpush1.bf16.msra.mxu0 0
      %2594 = vmatprep.subr.bf16.mxu0 0
      %2595 = vmatpush1.bf16.msra.mxu0 0
      %2596 = vmatprep.subr.bf16.mxu0 0
      %2597 = vmatpush1.bf16.msra.mxu0 0
      %2598 = vmatprep.mubr.bf16.mxu0 0
      %2599 = vmatmul.mubr.bf16.gmra.mrb[0].mxu0 %v2555
      %v2600 = vpop.f32.mrb[0].mxu0
      %v2601 = vadd.f32 0.0, %v2600
      %v2602 = vpop.f32.mrb[0].mxu0
      %v2603 = vadd.f32 0.0, %v2602
      %v2604 = vpop.f32.mrb[0].mxu0
      %v2605 = vadd.f32 0.0, %v2604
      %v2606 = vpop.f32.mrb[0].mxu0
      %v2607 = vadd.f32 0.0, %v2606
      %2608 = vmatprep.mubr.bf16.mxu0 0
      %2609 = vmatmul.mubr.bf16.gmra.mrb[0].mxu0 %v2558
      %v2610 = vpop.f32.mrb[0].mxu0
      %v2611 = vadd.f32 0.0, %v2610
      %v2612 = vpop.f32.mrb[0].mxu0
      %v2613 = vadd.f32 0.0, %v2612
      %v2614 = vpop.f32.mrb[0].mxu0
      %v2615 = vadd.f32 0.0, %v2614
      %v2616 = vpop.f32.mrb[0].mxu0
      %v2617 = vadd.f32 0.0, %v2616
      %2618 = vmatprep.mubr.bf16.mxu0 0
      %2619 = vmatmul.mubr.bf16.gmra.mrb[0].mxu0 %v2561
      %v2620 = vpop.f32.mrb[0].mxu0
      %v2621 = vadd.f32 0.0, %v2620
      %v2622 = vpop.f32.mrb[0].mxu0
      %v2623 = vadd.f32 0.0, %v2622
      %v2624 = vpop.f32.mrb[0].mxu0
      %v2625 = vadd.f32 0.0, %v2624
      %v2626 = vpop.f32.mrb[0].mxu0
      %v2627 = vadd.f32 0.0, %v2626
      %2628 = vmatprep.mubr.bf16.mxu0 0
      %2629 = vmatmul.mubr.bf16.gmra.mrb[0].mxu0 %v2564
      %v2630 = vpop.f32.mrb[0].mxu0
      %v2631 = vadd.f32 0.0, %v2630
      %v2632 = vpop.f32.mrb[0].mxu0
      %v2633 = vadd.f32 0.0, %v2632
      %v2634 = vpop.f32.mrb[0].mxu0
      %v2635 = vadd.f32 0.0, %v2634
      %v2636 = vpop.f32.mrb[0].mxu0
      %v2637 = vadd.f32 0.0, %v2636
      %2638 = vdwg.mxu0
      %v2639 = vadd.f32 %v2495, %v2601
      %v2640 = vadd.f32 %v2496, %v2603
      %v2641 = vadd.f32 %v2497, %v2605
      %v2642 = vadd.f32 %v2498, %v2607
      %v2643 = vadd.f32 %v2499, %v2611
      %v2644 = vadd.f32 %v2500, %v2613
      %v2645 = vadd.f32 %v2501, %v2615
      %v2646 = vadd.f32 %v2502, %v2617
      %v2647 = vadd.f32 %v2503, %v2621
      %v2648 = vadd.f32 %v2504, %v2623
      %v2649 = vadd.f32 %v2505, %v2625
      %v2650 = vadd.f32 %v2506, %v2627
      %v2651 = vadd.f32 %v2507, %v2631
      %v2652 = vadd.f32 %v2508, %v2633
      %v2653 = vadd.f32 %v2509, %v2635
      %v2654 = vadd.f32 %v2510, %v2637
      %s2655 = scalar_lea.vmem %s5, 192
      %v2656 = vld [vmem:[%s2655] sm:$0xf]
      %v2657 = vld [vmem:[%s2655 + $0x4] sm:$0xf]
      %v2658 = vld [vmem:[%s2655 + $0x8] sm:$0xf]
      %v2659 = vld [vmem:[%s2655 + $0xc] sm:$0xf]
      %v2660 = vld [vmem:[%s2655 + $0x10] sm:$0xf]
      %v2661 = vld [vmem:[%s2655 + $0x14] sm:$0xf]
      %v2662 = vld [vmem:[%s2655 + $0x18] sm:$0xf]
      %v2663 = vld [vmem:[%s2655 + $0x1c] sm:$0xf]
      %v2672 = vunpack.c.l.b16 %v2656
      %v2673 = vunpack.c.l.b16 %v2657
      %v2674 = vunpack.c.l.b16 %v2658
      %v2675 = vunpack.c.l.b16 %v2659
      %v2676 = vunpack.c.l.b16 %v2660
      %v2677 = vunpack.c.l.b16 %v2661
      %v2678 = vunpack.c.l.b16 %v2662
      %v2679 = vunpack.c.l.b16 %v2663
      %v2680 = vpack.c.b16 %v2673, %v2672
      %v2681 = vpack.c.b16 %v2675, %v2674
      %v2682 = vpack.c.b16 %v2677, %v2676
      %v2683 = vpack.c.b16 %v2679, %v2678
      %2684 = vrot.lane.b32.xlu0 %v1837, 96
      %v2685 = vpop.permute.xlu0 %2684
      %2686 = vrot.lane.b32.xlu0 %v1838, 96
      %v2687 = vpop.permute.xlu0 %2686
      %2688 = vrot.lane.b32.xlu0 %v1839, 96
      %v2689 = vpop.permute.xlu0 %2688
      %2690 = vrot.lane.b32.xlu0 %v1840, 96
      %v2691 = vpop.permute.xlu0 %2690
      %v2692 = vsel %vm747, %v2685, %v2687
      %v2693 = vsel %vm747, %v2689, %v2691
      %v2699 = vsel %vm1888, %v2680, 0
      %v2702 = vsel %vm1888, %v2681, 0
      %v2705 = vsel %vm1888, %v2682, 0
      %v2708 = vsel %vm1888, %v2683, 0
      %2710 = vmatprep.subr.bf16.mxu0 %v2687
      %2711 = vmatpush1.bf16.msra.mxu0 %v2692
      %2712 = vmatprep.subr.bf16.mxu0 %v2691
      %2713 = vmatpush1.bf16.msra.mxu0 %v2693
      %2714 = vmatprep.subr.bf16.mxu0 0
      %2715 = vmatpush1.bf16.msra.mxu0 0
      %2716 = vmatprep.subr.bf16.mxu0 0
      %2717 = vmatpush1.bf16.msra.mxu0 0
      %2718 = vmatprep.subr.bf16.mxu0 0
      %2719 = vmatpush1.bf16.msra.mxu0 0
      %2720 = vmatprep.subr.bf16.mxu0 0
      %2721 = vmatpush1.bf16.msra.mxu0 0
      %2722 = vmatprep.subr.bf16.mxu0 0
      %2723 = vmatpush1.bf16.msra.mxu0 0
      %2724 = vmatprep.subr.bf16.mxu0 0
      %2725 = vmatpush1.bf16.msra.mxu0 0
      %2726 = vmatprep.subr.bf16.mxu0 0
      %2727 = vmatpush1.bf16.msra.mxu0 0
      %2728 = vmatprep.subr.bf16.mxu0 0
      %2729 = vmatpush1.bf16.msra.mxu0 0
      %2730 = vmatprep.subr.bf16.mxu0 0
      %2731 = vmatpush1.bf16.msra.mxu0 0
      %2732 = vmatprep.subr.bf16.mxu0 0
      %2733 = vmatpush1.bf16.msra.mxu0 0
      %2734 = vmatprep.subr.bf16.mxu0 0
      %2735 = vmatpush1.bf16.msra.mxu0 0
      %2736 = vmatprep.subr.bf16.mxu0 0
      %2737 = vmatpush1.bf16.msra.mxu0 0
      %2738 = vmatprep.subr.bf16.mxu0 0
      %2739 = vmatpush1.bf16.msra.mxu0 0
      %2740 = vmatprep.subr.bf16.mxu0 0
      %2741 = vmatpush1.bf16.msra.mxu0 0
      %2742 = vmatprep.mubr.bf16.mxu0 0
      %2743 = vmatmul.mubr.bf16.gmra.mrb[0].mxu0 %v2699
      %v2744 = vpop.f32.mrb[0].mxu0
      %v2745 = vadd.f32 0.0, %v2744
      %v2746 = vpop.f32.mrb[0].mxu0
      %v2747 = vadd.f32 0.0, %v2746
      %v2748 = vpop.f32.mrb[0].mxu0
      %v2749 = vadd.f32 0.0, %v2748
      %v2750 = vpop.f32.mrb[0].mxu0
      %v2751 = vadd.f32 0.0, %v2750
      %2752 = vmatprep.mubr.bf16.mxu0 0
      %2753 = vmatmul.mubr.bf16.gmra.mrb[0].mxu0 %v2702
      %v2754 = vpop.f32.mrb[0].mxu0
      %v2755 = vadd.f32 0.0, %v2754
      %v2756 = vpop.f32.mrb[0].mxu0
      %v2757 = vadd.f32 0.0, %v2756
      %v2758 = vpop.f32.mrb[0].mxu0
      %v2759 = vadd.f32 0.0, %v2758
      %v2760 = vpop.f32.mrb[0].mxu0
      %v2761 = vadd.f32 0.0, %v2760
      %2762 = vmatprep.mubr.bf16.mxu0 0
      %2763 = vmatmul.mubr.bf16.gmra.mrb[0].mxu0 %v2705
      %v2764 = vpop.f32.mrb[0].mxu0
      %v2765 = vadd.f32 0.0, %v2764
      %v2766 = vpop.f32.mrb[0].mxu0
      %v2767 = vadd.f32 0.0, %v2766
      %v2768 = vpop.f32.mrb[0].mxu0
      %v2769 = vadd.f32 0.0, %v2768
      %v2770 = vpop.f32.mrb[0].mxu0
      %v2771 = vadd.f32 0.0, %v2770
      %2772 = vmatprep.mubr.bf16.mxu0 0
      %2773 = vmatmul.mubr.bf16.gmra.mrb[0].mxu0 %v2708
      %v2774 = vpop.f32.mrb[0].mxu0
      %v2775 = vadd.f32 0.0, %v2774
      %v2776 = vpop.f32.mrb[0].mxu0
      %v2777 = vadd.f32 0.0, %v2776
      %v2778 = vpop.f32.mrb[0].mxu0
      %v2779 = vadd.f32 0.0, %v2778
      %v2780 = vpop.f32.mrb[0].mxu0
      %v2781 = vadd.f32 0.0, %v2780
      %2782 = vdwg.mxu0
      %v2783 = vadd.f32 %v2639, %v2745
      %v2784 = vadd.f32 %v2640, %v2747
      %v2785 = vadd.f32 %v2641, %v2749
      %v2786 = vadd.f32 %v2642, %v2751
      %v2787 = vadd.f32 %v2643, %v2755
      %v2788 = vadd.f32 %v2644, %v2757
      %v2789 = vadd.f32 %v2645, %v2759
      %v2790 = vadd.f32 %v2646, %v2761
      %v2791 = vadd.f32 %v2647, %v2765
      %v2792 = vadd.f32 %v2648, %v2767
      %v2793 = vadd.f32 %v2649, %v2769
      %v2794 = vadd.f32 %v2650, %v2771
      %v2795 = vadd.f32 %v2651, %v2775
      %v2796 = vadd.f32 %v2652, %v2777
      %v2797 = vadd.f32 %v2653, %v2779
      %v2798 = vadd.f32 %v2654, %v2781
      %s2799 = scalar_lea.vmem %s5, 224
      %v2800 = vld [vmem:[%s2799] sm:$0xf]
      %v2801 = vld [vmem:[%s2799 + $0x4] sm:$0xf]
      %v2802 = vld [vmem:[%s2799 + $0x8] sm:$0xf]
      %v2803 = vld [vmem:[%s2799 + $0xc] sm:$0xf]
      %v2804 = vld [vmem:[%s2799 + $0x10] sm:$0xf]
      %v2805 = vld [vmem:[%s2799 + $0x14] sm:$0xf]
      %v2806 = vld [vmem:[%s2799 + $0x18] sm:$0xf]
      %v2807 = vld [vmem:[%s2799 + $0x1c] sm:$0xf]
      %v2816 = vunpack.c.l.b16 %v2800
      %v2817 = vunpack.c.l.b16 %v2801
      %v2818 = vunpack.c.l.b16 %v2802
      %v2819 = vunpack.c.l.b16 %v2803
      %v2820 = vunpack.c.l.b16 %v2804
      %v2821 = vunpack.c.l.b16 %v2805
      %v2822 = vunpack.c.l.b16 %v2806
      %v2823 = vunpack.c.l.b16 %v2807
      %v2824 = vpack.c.b16 %v2817, %v2816
      %v2825 = vpack.c.b16 %v2819, %v2818
      %v2826 = vpack.c.b16 %v2821, %v2820
      %v2827 = vpack.c.b16 %v2823, %v2822
      %2828 = vrot.lane.b32.xlu0 %v1837, 95
      %v2829 = vpop.permute.xlu0 %2828
      %2830 = vrot.lane.b32.xlu0 %v1838, 95
      %v2831 = vpop.permute.xlu0 %2830
      %2832 = vrot.lane.b32.xlu0 %v1839, 95
      %v2833 = vpop.permute.xlu0 %2832
      %2834 = vrot.lane.b32.xlu0 %v1840, 95
      %v2835 = vpop.permute.xlu0 %2834
      %v2836 = vsel %vm825, %v2829, %v2831
      %v2837 = vsel %vm825, %v2833, %v2835
      %v2843 = vsel %vm1888, %v2824, 0
      %v2846 = vsel %vm1888, %v2825, 0
      %v2849 = vsel %vm1888, %v2826, 0
      %v2852 = vsel %vm1888, %v2827, 0
      %2854 = vmatprep.subr.bf16.mxu0 %v2831
      %2855 = vmatpush1.bf16.msra.mxu0 %v2836
      %2856 = vmatprep.subr.bf16.mxu0 %v2835
      %2857 = vmatpush1.bf16.msra.mxu0 %v2837
      %2858 = vmatprep.subr.bf16.mxu0 0
      %2859 = vmatpush1.bf16.msra.mxu0 0
      %2860 = vmatprep.subr.bf16.mxu0 0
      %2861 = vmatpush1.bf16.msra.mxu0 0
      %2862 = vmatprep.subr.bf16.mxu0 0
      %2863 = vmatpush1.bf16.msra.mxu0 0
      %2864 = vmatprep.subr.bf16.mxu0 0
      %2865 = vmatpush1.bf16.msra.mxu0 0
      %2866 = vmatprep.subr.bf16.mxu0 0
      %2867 = vmatpush1.bf16.msra.mxu0 0
      %2868 = vmatprep.subr.bf16.mxu0 0
      %2869 = vmatpush1.bf16.msra.mxu0 0
      %2870 = vmatprep.subr.bf16.mxu0 0
      %2871 = vmatpush1.bf16.msra.mxu0 0
      %2872 = vmatprep.subr.bf16.mxu0 0
      %2873 = vmatpush1.bf16.msra.mxu0 0
      %2874 = vmatprep.subr.bf16.mxu0 0
      %2875 = vmatpush1.bf16.msra.mxu0 0
      %2876 = vmatprep.subr.bf16.mxu0 0
      %2877 = vmatpush1.bf16.msra.mxu0 0
      %2878 = vmatprep.subr.bf16.mxu0 0
      %2879 = vmatpush1.bf16.msra.mxu0 0
      %2880 = vmatprep.subr.bf16.mxu0 0
      %2881 = vmatpush1.bf16.msra.mxu0 0
      %2882 = vmatprep.subr.bf16.mxu0 0
      %2883 = vmatpush1.bf16.msra.mxu0 0
      %2884 = vmatprep.subr.bf16.mxu0 0
      %2885 = vmatpush1.bf16.msra.mxu0 0
      %2886 = vmatprep.mubr.bf16.mxu0 0
      %2887 = vmatmul.mubr.bf16.gmra.mrb[0].mxu0 %v2843
      %v2888 = vpop.f32.mrb[0].mxu0
      %v2889 = vadd.f32 0.0, %v2888
      %v2890 = vpop.f32.mrb[0].mxu0
      %v2891 = vadd.f32 0.0, %v2890
      %v2892 = vpop.f32.mrb[0].mxu0
      %v2893 = vadd.f32 0.0, %v2892
      %v2894 = vpop.f32.mrb[0].mxu0
      %v2895 = vadd.f32 0.0, %v2894
      %2896 = vmatprep.mubr.bf16.mxu0 0
      %2897 = vmatmul.mubr.bf16.gmra.mrb[0].mxu0 %v2846
      %v2898 = vpop.f32.mrb[0].mxu0
      %v2899 = vadd.f32 0.0, %v2898
      %v2900 = vpop.f32.mrb[0].mxu0
      %v2901 = vadd.f32 0.0, %v2900
      %v2902 = vpop.f32.mrb[0].mxu0
      %v2903 = vadd.f32 0.0, %v2902
      %v2904 = vpop.f32.mrb[0].mxu0
      %v2905 = vadd.f32 0.0, %v2904
      %2906 = vmatprep.mubr.bf16.mxu0 0
      %2907 = vmatmul.mubr.bf16.gmra.mrb[0].mxu0 %v2849
      %v2908 = vpop.f32.mrb[0].mxu0
      %v2909 = vadd.f32 0.0, %v2908
      %v2910 = vpop.f32.mrb[0].mxu0
      %v2911 = vadd.f32 0.0, %v2910
      %v2912 = vpop.f32.mrb[0].mxu0
      %v2913 = vadd.f32 0.0, %v2912
      %v2914 = vpop.f32.mrb[0].mxu0
      %v2915 = vadd.f32 0.0, %v2914
      %2916 = vmatprep.mubr.bf16.mxu0 0
      %2917 = vmatmul.mubr.bf16.gmra.mrb[0].mxu0 %v2852
      %v2918 = vpop.f32.mrb[0].mxu0
      %v2919 = vadd.f32 0.0, %v2918
      %v2920 = vpop.f32.mrb[0].mxu0
      %v2921 = vadd.f32 0.0, %v2920
      %v2922 = vpop.f32.mrb[0].mxu0
      %v2923 = vadd.f32 0.0, %v2922
      %v2924 = vpop.f32.mrb[0].mxu0
      %v2925 = vadd.f32 0.0, %v2924
      %2926 = vdwg.mxu0
      %v2927 = vadd.f32 %v2783, %v2889
      %v2928 = vadd.f32 %v2784, %v2891
      %v2929 = vadd.f32 %v2785, %v2893
      %v2930 = vadd.f32 %v2786, %v2895
      %v2931 = vadd.f32 %v2787, %v2899
      %v2932 = vadd.f32 %v2788, %v2901
      %v2933 = vadd.f32 %v2789, %v2903
      %v2934 = vadd.f32 %v2790, %v2905
      %v2935 = vadd.f32 %v2791, %v2909
      %v2936 = vadd.f32 %v2792, %v2911
      %v2937 = vadd.f32 %v2793, %v2913
      %v2938 = vadd.f32 %v2794, %v2915
      %v2939 = vadd.f32 %v2795, %v2919
      %v2940 = vadd.f32 %v2796, %v2921
      %v2941 = vadd.f32 %v2797, %v2923
      %v2942 = vadd.f32 %v2798, %v2925
      %s2943 = scalar_lea.vmem %s5, 256
      %v2944 = vld [vmem:[%s2943] sm:$0xf]
      %v2945 = vld [vmem:[%s2943 + $0x4] sm:$0xf]
      %v2946 = vld [vmem:[%s2943 + $0x8] sm:$0xf]
      %v2947 = vld [vmem:[%s2943 + $0xc] sm:$0xf]
      %v2948 = vld [vmem:[%s2943 + $0x10] sm:$0xf]
      %v2949 = vld [vmem:[%s2943 + $0x14] sm:$0xf]
      %v2950 = vld [vmem:[%s2943 + $0x18] sm:$0xf]
      %v2951 = vld [vmem:[%s2943 + $0x1c] sm:$0xf]
      %v2960 = vunpack.c.l.b16 %v2944
      %v2961 = vunpack.c.l.b16 %v2945
      %v2962 = vunpack.c.l.b16 %v2946
      %v2963 = vunpack.c.l.b16 %v2947
      %v2964 = vunpack.c.l.b16 %v2948
      %v2965 = vunpack.c.l.b16 %v2949
      %v2966 = vunpack.c.l.b16 %v2950
      %v2967 = vunpack.c.l.b16 %v2951
      %v2968 = vpack.c.b16 %v2961, %v2960
      %v2969 = vpack.c.b16 %v2963, %v2962
      %v2970 = vpack.c.b16 %v2965, %v2964
      %v2971 = vpack.c.b16 %v2967, %v2966
      %2972 = vrot.lane.b32.xlu0 %v1837, 94
      %v2973 = vpop.permute.xlu0 %2972
      %2974 = vrot.lane.b32.xlu0 %v1838, 94
      %v2975 = vpop.permute.xlu0 %2974
      %2976 = vrot.lane.b32.xlu0 %v1839, 94
      %v2977 = vpop.permute.xlu0 %2976
      %2978 = vrot.lane.b32.xlu0 %v1840, 94
      %v2979 = vpop.permute.xlu0 %2978
      %v2980 = vsel %vm903, %v2973, %v2975
      %v2981 = vsel %vm903, %v2977, %v2979
      %v2987 = vsel %vm1888, %v2968, 0
      %v2990 = vsel %vm1888, %v2969, 0
      %v2993 = vsel %vm1888, %v2970, 0
      %v2996 = vsel %vm1888, %v2971, 0
      %2998 = vmatprep.subr.bf16.mxu0 %v2975
      %2999 = vmatpush1.bf16.msra.mxu0 %v2980
      %3000 = vmatprep.subr.bf16.mxu0 %v2979
      %3001 = vmatpush1.bf16.msra.mxu0 %v2981
      %3002 = vmatprep.subr.bf16.mxu0 0
      %3003 = vmatpush1.bf16.msra.mxu0 0
      %3004 = vmatprep.subr.bf16.mxu0 0
      %3005 = vmatpush1.bf16.msra.mxu0 0
      %3006 = vmatprep.subr.bf16.mxu0 0
      %3007 = vmatpush1.bf16.msra.mxu0 0
      %3008 = vmatprep.subr.bf16.mxu0 0
      %3009 = vmatpush1.bf16.msra.mxu0 0
      %3010 = vmatprep.subr.bf16.mxu0 0
      %3011 = vmatpush1.bf16.msra.mxu0 0
      %3012 = vmatprep.subr.bf16.mxu0 0
      %3013 = vmatpush1.bf16.msra.mxu0 0
      %3014 = vmatprep.subr.bf16.mxu0 0
      %3015 = vmatpush1.bf16.msra.mxu0 0
      %3016 = vmatprep.subr.bf16.mxu0 0
      %3017 = vmatpush1.bf16.msra.mxu0 0
      %3018 = vmatprep.subr.bf16.mxu0 0
      %3019 = vmatpush1.bf16.msra.mxu0 0
      %3020 = vmatprep.subr.bf16.mxu0 0
      %3021 = vmatpush1.bf16.msra.mxu0 0
      %3022 = vmatprep.subr.bf16.mxu0 0
      %3023 = vmatpush1.bf16.msra.mxu0 0
      %3024 = vmatprep.subr.bf16.mxu0 0
      %3025 = vmatpush1.bf16.msra.mxu0 0
      %3026 = vmatprep.subr.bf16.mxu0 0
      %3027 = vmatpush1.bf16.msra.mxu0 0
      %3028 = vmatprep.subr.bf16.mxu0 0
      %3029 = vmatpush1.bf16.msra.mxu0 0
      %3030 = vmatprep.mubr.bf16.mxu0 0
      %3031 = vmatmul.mubr.bf16.gmra.mrb[0].mxu0 %v2987
      %v3032 = vpop.f32.mrb[0].mxu0
      %v3033 = vadd.f32 0.0, %v3032
      %v3034 = vpop.f32.mrb[0].mxu0
      %v3035 = vadd.f32 0.0, %v3034
      %v3036 = vpop.f32.mrb[0].mxu0
      %v3037 = vadd.f32 0.0, %v3036
      %v3038 = vpop.f32.mrb[0].mxu0
      %v3039 = vadd.f32 0.0, %v3038
      %3040 = vmatprep.mubr.bf16.mxu0 0
      %3041 = vmatmul.mubr.bf16.gmra.mrb[0].mxu0 %v2990
      %v3042 = vpop.f32.mrb[0].mxu0
      %v3043 = vadd.f32 0.0, %v3042
      %v3044 = vpop.f32.mrb[0].mxu0
      %v3045 = vadd.f32 0.0, %v3044
      %v3046 = vpop.f32.mrb[0].mxu0
      %v3047 = vadd.f32 0.0, %v3046
      %v3048 = vpop.f32.mrb[0].mxu0
      %v3049 = vadd.f32 0.0, %v3048
      %3050 = vmatprep.mubr.bf16.mxu0 0
      %3051 = vmatmul.mubr.bf16.gmra.mrb[0].mxu0 %v2993
      %v3052 = vpop.f32.mrb[0].mxu0
      %v3053 = vadd.f32 0.0, %v3052
      %v3054 = vpop.f32.mrb[0].mxu0
      %v3055 = vadd.f32 0.0, %v3054
      %v3056 = vpop.f32.mrb[0].mxu0
      %v3057 = vadd.f32 0.0, %v3056
      %v3058 = vpop.f32.mrb[0].mxu0
      %v3059 = vadd.f32 0.0, %v3058
      %3060 = vmatprep.mubr.bf16.mxu0 0
      %3061 = vmatmul.mubr.bf16.gmra.mrb[0].mxu0 %v2996
      %v3062 = vpop.f32.mrb[0].mxu0
      %v3063 = vadd.f32 0.0, %v3062
      %v3064 = vpop.f32.mrb[0].mxu0
      %v3065 = vadd.f32 0.0, %v3064
      %v3066 = vpop.f32.mrb[0].mxu0
      %v3067 = vadd.f32 0.0, %v3066
      %v3068 = vpop.f32.mrb[0].mxu0
      %v3069 = vadd.f32 0.0, %v3068
      %3070 = vdwg.mxu0
      %v3071 = vadd.f32 %v2927, %v3033
      %v3072 = vadd.f32 %v2928, %v3035
      %v3073 = vadd.f32 %v2929, %v3037
      %v3074 = vadd.f32 %v2930, %v3039
      %v3075 = vadd.f32 %v2931, %v3043
      %v3076 = vadd.f32 %v2932, %v3045
      %v3077 = vadd.f32 %v2933, %v3047
      %v3078 = vadd.f32 %v2934, %v3049
      %v3079 = vadd.f32 %v2935, %v3053
      %v3080 = vadd.f32 %v2936, %v3055
      %v3081 = vadd.f32 %v2937, %v3057
      %v3082 = vadd.f32 %v2938, %v3059
      %v3083 = vadd.f32 %v2939, %v3063
      %v3084 = vadd.f32 %v2940, %v3065
      %v3085 = vadd.f32 %v2941, %v3067
      %v3086 = vadd.f32 %v2942, %v3069
      %v3087 = vld [vmem:[%s6] sm:$0xff]
      %v3088 = vld [vmem:[%s6 + $0x8] sm:$0xff]
      %v3089 = vld [vmem:[%s6 + $0x10] sm:$0xff]
      %v3090 = vld [vmem:[%s6 + $0x18] sm:$0xff]
      %v3091 = vld [vmem:[%s6 + $0x20] sm:$0xff]
      %v3092 = vld [vmem:[%s6 + $0x28] sm:$0xff]
      %v3093 = vld [vmem:[%s6 + $0x30] sm:$0xff]
      %v3094 = vld [vmem:[%s6 + $0x38] sm:$0xff]
      %3096 = vset.pattern.permute.xlu0 0
      %3097 = vperm.xlu0 %3096, %v3087
      %v3098 = vpop.permute.xlu0 %3097
      %3101 = vset.pattern.permute.xlu0 0
      %3102 = vperm.xlu0 %3101, %v3088
      %v3103 = vpop.permute.xlu0 %3102
      %3106 = vset.pattern.permute.xlu0 0
      %3107 = vperm.xlu0 %3106, %v3089
      %v3108 = vpop.permute.xlu0 %3107
      %3111 = vset.pattern.permute.xlu0 0
      %3112 = vperm.xlu0 %3111, %v3090
      %v3113 = vpop.permute.xlu0 %3112
      %3116 = vset.pattern.permute.xlu0 0
      %3117 = vperm.xlu0 %3116, %v3091
      %v3118 = vpop.permute.xlu0 %3117
      %3121 = vset.pattern.permute.xlu0 0
      %3122 = vperm.xlu0 %3121, %v3092
      %v3123 = vpop.permute.xlu0 %3122
      %3126 = vset.pattern.permute.xlu0 0
      %3127 = vperm.xlu0 %3126, %v3093
      %v3128 = vpop.permute.xlu0 %3127
      %3131 = vset.pattern.permute.xlu0 0
      %3132 = vperm.xlu0 %3131, %v3094
      %v3133 = vpop.permute.xlu0 %3132
      %v3135 = vadd.f32 %v3071, %v3098
      %v3136 = vadd.f32 %v3072, %v3098
      %v3137 = vadd.f32 %v3073, %v3103
      %v3138 = vadd.f32 %v3074, %v3103
      %v3139 = vadd.f32 %v3075, %v3108
      %v3140 = vadd.f32 %v3076, %v3108
      %v3141 = vadd.f32 %v3077, %v3113
      %v3142 = vadd.f32 %v3078, %v3113
      %v3143 = vadd.f32 %v3079, %v3118
      %v3144 = vadd.f32 %v3080, %v3118
      %v3145 = vadd.f32 %v3081, %v3123
      %v3146 = vadd.f32 %v3082, %v3123
      %v3147 = vadd.f32 %v3083, %v3128
      %v3148 = vadd.f32 %v3084, %v3128
      %v3149 = vadd.f32 %v3085, %v3133
      %v3150 = vadd.f32 %v3086, %v3133
      %v3151 = vmax.f32 %v3135, 0.0
      %v3152 = vmax.f32 %v3136, 0.0
      %v3153 = vmax.f32 %v3137, 0.0
      %v3154 = vmax.f32 %v3138, 0.0
      %v3155 = vmax.f32 %v3139, 0.0
      %v3156 = vmax.f32 %v3140, 0.0
      %v3157 = vmax.f32 %v3141, 0.0
      %v3158 = vmax.f32 %v3142, 0.0
      %v3159 = vmax.f32 %v3143, 0.0
      %v3160 = vmax.f32 %v3144, 0.0
      %v3161 = vmax.f32 %v3145, 0.0
      %v3162 = vmax.f32 %v3146, 0.0
      %v3163 = vmax.f32 %v3147, 0.0
      %v3164 = vmax.f32 %v3148, 0.0
      %v3165 = vmax.f32 %v3149, 0.0
      %v3166 = vmax.f32 %v3150, 0.0
      %3167 = vst [vmem:[#allocation4] sm:$0xff] %v3151
      %vm3168 = vcmask 211968
      %3169 = vst.msk [vmem:[#allocation4 + $0x8] sm:$0xff] %vm3168, %v3152
      %3170 = vst [vmem:[#allocation4 + $0x10] sm:$0xff] %v3153
      %3171 = vst.msk [vmem:[#allocation4 + $0x18] sm:$0xff] %vm3168, %v3154
      %3172 = vst [vmem:[#allocation4 + $0x20] sm:$0xff] %v3155
      %3173 = vst.msk [vmem:[#allocation4 + $0x28] sm:$0xff] %vm3168, %v3156
      %3174 = vst [vmem:[#allocation4 + $0x30] sm:$0xff] %v3157
      %3175 = vst.msk [vmem:[#allocation4 + $0x38] sm:$0xff] %vm3168, %v3158
      %3176 = vst [vmem:[#allocation4 + $0x40] sm:$0xff] %v3159
      %3177 = vst.msk [vmem:[#allocation4 + $0x48] sm:$0xff] %vm3168, %v3160
      %3178 = vst [vmem:[#allocation4 + $0x50] sm:$0xff] %v3161
      %3179 = vst.msk [vmem:[#allocation4 + $0x58] sm:$0xff] %vm3168, %v3162
      %3180 = vst [vmem:[#allocation4 + $0x60] sm:$0xff] %v3163
      %3181 = vst.msk [vmem:[#allocation4 + $0x68] sm:$0xff] %vm3168, %v3164
      %3182 = vst [vmem:[#allocation4 + $0x70] sm:$0xff] %v3165
      %3183 = vst.msk [vmem:[#allocation4 + $0x78] sm:$0xff] %vm3168, %v3166
      %v3184 = vld [vmem:[#allocation4] sm:$0xff]
      %v3185 = vld [vmem:[#allocation4 + $0x10] sm:$0xff]
      %v3186 = vld [vmem:[#allocation4 + $0x20] sm:$0xff]
      %v3187 = vld [vmem:[#allocation4 + $0x30] sm:$0xff]
      %v3188 = vld [vmem:[#allocation4 + $0x40] sm:$0xff]
      %v3189 = vld [vmem:[#allocation4 + $0x50] sm:$0xff]
      %v3190 = vld [vmem:[#allocation4 + $0x60] sm:$0xff]
      %v3191 = vld [vmem:[#allocation4 + $0x70] sm:$0xff]
      %vm3192 = vcmask 80896
      %3193 = vst.msk [vmem:[%s278] sm:$0xff] %vm3192, %v3184
      %3194 = vst.msk [vmem:[%s278 + $0x8] sm:$0xff] %vm3192, %v3185
      %3195 = vst.msk [vmem:[%s278 + $0x10] sm:$0xff] %vm3192, %v3186
      %3196 = vst.msk [vmem:[%s278 + $0x18] sm:$0xff] %vm3192, %v3187
      %3197 = vst.msk [vmem:[%s278 + $0x20] sm:$0xff] %vm3192, %v3188
      %3198 = vst.msk [vmem:[%s278 + $0x28] sm:$0xff] %vm3192, %v3189
      %3199 = vst.msk [vmem:[%s278 + $0x30] sm:$0xff] %vm3192, %v3190
      %3200 = vst.msk [vmem:[%s278 + $0x38] sm:$0xff] %vm3192, %v3191
      %v3201 = vld [vmem:[#allocation4] sm:$0xff]
      %v3202 = vld [vmem:[#allocation4 + $0x10] sm:$0xff]
      %v3203 = vld [vmem:[#allocation4 + $0x20] sm:$0xff]
      %v3204 = vld [vmem:[#allocation4 + $0x30] sm:$0xff]
      %v3205 = vld [vmem:[#allocation4 + $0x40] sm:$0xff]
      %v3206 = vld [vmem:[#allocation4 + $0x50] sm:$0xff]
      %v3207 = vld [vmem:[#allocation4 + $0x60] sm:$0xff]
      %v3208 = vld [vmem:[#allocation4 + $0x70] sm:$0xff]
      %3217 = vrot.lane.b32.xlu0 %v3201, 122
      %v3218 = vpop.permute.xlu0 %3217
      %3219 = vrot.lane.b32.xlu0 %v3202, 122
      %v3220 = vpop.permute.xlu0 %3219
      %3221 = vrot.lane.b32.xlu0 %v3203, 122
      %v3222 = vpop.permute.xlu0 %3221
      %3223 = vrot.lane.b32.xlu0 %v3204, 122
      %v3224 = vpop.permute.xlu0 %3223
      %3225 = vrot.lane.b32.xlu0 %v3205, 122
      %v3226 = vpop.permute.xlu0 %3225
      %3227 = vrot.lane.b32.xlu0 %v3206, 122
      %v3228 = vpop.permute.xlu0 %3227
      %3229 = vrot.lane.b32.xlu0 %v3207, 122
      %v3230 = vpop.permute.xlu0 %3229
      %3231 = vrot.lane.b32.xlu0 %v3208, 122
      %v3232 = vpop.permute.xlu0 %3231
      %vm3241 = vcmask 162896
      %3242 = vst.msk [vmem:[%s278] sm:$0xff] %vm3241, %v3218
      %3243 = vst.msk [vmem:[%s278 + $0x8] sm:$0xff] %vm3241, %v3220
      %3244 = vst.msk [vmem:[%s278 + $0x10] sm:$0xff] %vm3241, %v3222
      %3245 = vst.msk [vmem:[%s278 + $0x18] sm:$0xff] %vm3241, %v3224
      %3246 = vst.msk [vmem:[%s278 + $0x20] sm:$0xff] %vm3241, %v3226
      %3247 = vst.msk [vmem:[%s278 + $0x28] sm:$0xff] %vm3241, %v3228
      %3248 = vst.msk [vmem:[%s278 + $0x30] sm:$0xff] %vm3241, %v3230
      %3249 = vst.msk [vmem:[%s278 + $0x38] sm:$0xff] %vm3241, %v3232
      %v3250 = vld [vmem:[#allocation4] sm:$0xff]
      %v3251 = vld [vmem:[#allocation4 + $0x10] sm:$0xff]
      %v3252 = vld [vmem:[#allocation4 + $0x20] sm:$0xff]
      %v3253 = vld [vmem:[#allocation4 + $0x30] sm:$0xff]
      %v3254 = vld [vmem:[#allocation4 + $0x40] sm:$0xff]
      %v3255 = vld [vmem:[#allocation4 + $0x50] sm:$0xff]
      %v3256 = vld [vmem:[#allocation4 + $0x60] sm:$0xff]
      %v3257 = vld [vmem:[#allocation4 + $0x70] sm:$0xff]
      %3266 = vrot.lane.b32.xlu0 %v3250, 116
      %v3267 = vpop.permute.xlu0 %3266
      %3268 = vrot.lane.b32.xlu0 %v3251, 116
      %v3269 = vpop.permute.xlu0 %3268
      %3270 = vrot.lane.b32.xlu0 %v3252, 116
      %v3271 = vpop.permute.xlu0 %3270
      %3272 = vrot.lane.b32.xlu0 %v3253, 116
      %v3273 = vpop.permute.xlu0 %3272
      %3274 = vrot.lane.b32.xlu0 %v3254, 116
      %v3275 = vpop.permute.xlu0 %3274
      %3276 = vrot.lane.b32.xlu0 %v3255, 116
      %v3277 = vpop.permute.xlu0 %3276
      %3278 = vrot.lane.b32.xlu0 %v3256, 116
      %v3279 = vpop.permute.xlu0 %3278
      %3280 = vrot.lane.b32.xlu0 %v3257, 116
      %v3281 = vpop.permute.xlu0 %3280
      %vm3290 = vcmask 244896
      %3291 = vst.msk [vmem:[%s278] sm:$0xff] %vm3290, %v3267
      %3292 = vst.msk [vmem:[%s278 + $0x8] sm:$0xff] %vm3290, %v3269
      %3293 = vst.msk [vmem:[%s278 + $0x10] sm:$0xff] %vm3290, %v3271
      %3294 = vst.msk [vmem:[%s278 + $0x18] sm:$0xff] %vm3290, %v3273
      %3295 = vst.msk [vmem:[%s278 + $0x20] sm:$0xff] %vm3290, %v3275
      %3296 = vst.msk [vmem:[%s278 + $0x28] sm:$0xff] %vm3290, %v3277
      %3297 = vst.msk [vmem:[%s278 + $0x30] sm:$0xff] %vm3290, %v3279
      %3298 = vst.msk [vmem:[%s278 + $0x38] sm:$0xff] %vm3290, %v3281
      %v3299 = vld [vmem:[#allocation4] sm:$0xff]
      %v3300 = vld [vmem:[#allocation4 + $0x10] sm:$0xff]
      %v3301 = vld [vmem:[#allocation4 + $0x20] sm:$0xff]
      %v3302 = vld [vmem:[#allocation4 + $0x30] sm:$0xff]
      %v3303 = vld [vmem:[#allocation4 + $0x40] sm:$0xff]
      %v3304 = vld [vmem:[#allocation4 + $0x50] sm:$0xff]
      %v3305 = vld [vmem:[#allocation4 + $0x60] sm:$0xff]
      %v3306 = vld [vmem:[#allocation4 + $0x70] sm:$0xff]
      %3315 = vrot.lane.b32.xlu0 %v3299, 110
      %v3316 = vpop.permute.xlu0 %3315
      %3317 = vrot.lane.b32.xlu0 %v3300, 110
      %v3318 = vpop.permute.xlu0 %3317
      %3319 = vrot.lane.b32.xlu0 %v3301, 110
      %v3320 = vpop.permute.xlu0 %3319
      %3321 = vrot.lane.b32.xlu0 %v3302, 110
      %v3322 = vpop.permute.xlu0 %3321
      %3323 = vrot.lane.b32.xlu0 %v3303, 110
      %v3324 = vpop.permute.xlu0 %3323
      %3325 = vrot.lane.b32.xlu0 %v3304, 110
      %v3326 = vpop.permute.xlu0 %3325
      %3327 = vrot.lane.b32.xlu0 %v3305, 110
      %v3328 = vpop.permute.xlu0 %3327
      %3329 = vrot.lane.b32.xlu0 %v3306, 110
      %v3330 = vpop.permute.xlu0 %3329
      %vm3339 = vcmask 326896
      %3340 = vst.msk [vmem:[%s278] sm:$0xff] %vm3339, %v3316
      %3341 = vst.msk [vmem:[%s278 + $0x8] sm:$0xff] %vm3339, %v3318
      %3342 = vst.msk [vmem:[%s278 + $0x10] sm:$0xff] %vm3339, %v3320
      %3343 = vst.msk [vmem:[%s278 + $0x18] sm:$0xff] %vm3339, %v3322
      %3344 = vst.msk [vmem:[%s278 + $0x20] sm:$0xff] %vm3339, %v3324
      %3345 = vst.msk [vmem:[%s278 + $0x28] sm:$0xff] %vm3339, %v3326
      %3346 = vst.msk [vmem:[%s278 + $0x30] sm:$0xff] %vm3339, %v3328
      %3347 = vst.msk [vmem:[%s278 + $0x38] sm:$0xff] %vm3339, %v3330
      %v3348 = vld [vmem:[#allocation4] sm:$0xff]
      %v3349 = vld [vmem:[#allocation4 + $0x10] sm:$0xff]
      %v3350 = vld [vmem:[#allocation4 + $0x20] sm:$0xff]
      %v3351 = vld [vmem:[#allocation4 + $0x30] sm:$0xff]
      %v3352 = vld [vmem:[#allocation4 + $0x40] sm:$0xff]
      %v3353 = vld [vmem:[#allocation4 + $0x50] sm:$0xff]
      %v3354 = vld [vmem:[#allocation4 + $0x60] sm:$0xff]
      %v3355 = vld [vmem:[#allocation4 + $0x70] sm:$0xff]
      %3364 = vrot.lane.b32.xlu0 %v3348, 104
      %v3365 = vpop.permute.xlu0 %3364
      %3366 = vrot.lane.b32.xlu0 %v3349, 104
      %v3367 = vpop.permute.xlu0 %3366
      %3368 = vrot.lane.b32.xlu0 %v3350, 104
      %v3369 = vpop.permute.xlu0 %3368
      %3370 = vrot.lane.b32.xlu0 %v3351, 104
      %v3371 = vpop.permute.xlu0 %3370
      %3372 = vrot.lane.b32.xlu0 %v3352, 104
      %v3373 = vpop.permute.xlu0 %3372
      %3374 = vrot.lane.b32.xlu0 %v3353, 104
      %v3375 = vpop.permute.xlu0 %3374
      %3376 = vrot.lane.b32.xlu0 %v3354, 104
      %v3377 = vpop.permute.xlu0 %3376
      %3378 = vrot.lane.b32.xlu0 %v3355, 104
      %v3379 = vpop.permute.xlu0 %3378
      %vm3388 = vcmask 408896
      %3389 = vst.msk [vmem:[%s278] sm:$0xff] %vm3388, %v3365
      %3390 = vst.msk [vmem:[%s278 + $0x8] sm:$0xff] %vm3388, %v3367
      %3391 = vst.msk [vmem:[%s278 + $0x10] sm:$0xff] %vm3388, %v3369
      %3392 = vst.msk [vmem:[%s278 + $0x18] sm:$0xff] %vm3388, %v3371
      %3393 = vst.msk [vmem:[%s278 + $0x20] sm:$0xff] %vm3388, %v3373
      %3394 = vst.msk [vmem:[%s278 + $0x28] sm:$0xff] %vm3388, %v3375
      %3395 = vst.msk [vmem:[%s278 + $0x30] sm:$0xff] %vm3388, %v3377
      %3396 = vst.msk [vmem:[%s278 + $0x38] sm:$0xff] %vm3388, %v3379
      %v3397 = vld [vmem:[#allocation4] sm:$0xff]
      %v3398 = vld [vmem:[#allocation4 + $0x10] sm:$0xff]
      %v3399 = vld [vmem:[#allocation4 + $0x20] sm:$0xff]
      %v3400 = vld [vmem:[#allocation4 + $0x30] sm:$0xff]
      %v3401 = vld [vmem:[#allocation4 + $0x40] sm:$0xff]
      %v3402 = vld [vmem:[#allocation4 + $0x50] sm:$0xff]
      %v3403 = vld [vmem:[#allocation4 + $0x60] sm:$0xff]
      %v3404 = vld [vmem:[#allocation4 + $0x70] sm:$0xff]
      %3413 = vrot.lane.b32.xlu0 %v3397, 98
      %v3414 = vpop.permute.xlu0 %3413
      %3415 = vrot.lane.b32.xlu0 %v3398, 98
      %v3416 = vpop.permute.xlu0 %3415
      %3417 = vrot.lane.b32.xlu0 %v3399, 98
      %v3418 = vpop.permute.xlu0 %3417
      %3419 = vrot.lane.b32.xlu0 %v3400, 98
      %v3420 = vpop.permute.xlu0 %3419
      %3421 = vrot.lane.b32.xlu0 %v3401, 98
      %v3422 = vpop.permute.xlu0 %3421
      %3423 = vrot.lane.b32.xlu0 %v3402, 98
      %v3424 = vpop.permute.xlu0 %3423
      %3425 = vrot.lane.b32.xlu0 %v3403, 98
      %v3426 = vpop.permute.xlu0 %3425
      %3427 = vrot.lane.b32.xlu0 %v3404, 98
      %v3428 = vpop.permute.xlu0 %3427
      %vm3437 = vcmask 490896
      %3438 = vst.msk [vmem:[%s278] sm:$0xff] %vm3437, %v3414
      %3439 = vst.msk [vmem:[%s278 + $0x8] sm:$0xff] %vm3437, %v3416
      %3440 = vst.msk [vmem:[%s278 + $0x10] sm:$0xff] %vm3437, %v3418
      %3441 = vst.msk [vmem:[%s278 + $0x18] sm:$0xff] %vm3437, %v3420
      %3442 = vst.msk [vmem:[%s278 + $0x20] sm:$0xff] %vm3437, %v3422
      %3443 = vst.msk [vmem:[%s278 + $0x28] sm:$0xff] %vm3437, %v3424
      %3444 = vst.msk [vmem:[%s278 + $0x30] sm:$0xff] %vm3437, %v3426
      %3445 = vst.msk [vmem:[%s278 + $0x38] sm:$0xff] %vm3437, %v3428
      %v3446 = vld [vmem:[#allocation4] sm:$0xff]
      %v3447 = vld [vmem:[#allocation4 + $0x10] sm:$0xff]
      %v3448 = vld [vmem:[#allocation4 + $0x20] sm:$0xff]
      %v3449 = vld [vmem:[#allocation4 + $0x30] sm:$0xff]
      %v3450 = vld [vmem:[#allocation4 + $0x40] sm:$0xff]
      %v3451 = vld [vmem:[#allocation4 + $0x50] sm:$0xff]
      %v3452 = vld [vmem:[#allocation4 + $0x60] sm:$0xff]
      %v3453 = vld [vmem:[#allocation4 + $0x70] sm:$0xff]
      %3462 = vrot.lane.b32.xlu0 %v3446, 92
      %v3463 = vpop.permute.xlu0 %3462
      %3464 = vrot.lane.b32.xlu0 %v3447, 92
      %v3465 = vpop.permute.xlu0 %3464
      %3466 = vrot.lane.b32.xlu0 %v3448, 92
      %v3467 = vpop.permute.xlu0 %3466
      %3468 = vrot.lane.b32.xlu0 %v3449, 92
      %v3469 = vpop.permute.xlu0 %3468
      %3470 = vrot.lane.b32.xlu0 %v3450, 92
      %v3471 = vpop.permute.xlu0 %3470
      %3472 = vrot.lane.b32.xlu0 %v3451, 92
      %v3473 = vpop.permute.xlu0 %3472
      %3474 = vrot.lane.b32.xlu0 %v3452, 92
      %v3475 = vpop.permute.xlu0 %3474
      %3476 = vrot.lane.b32.xlu0 %v3453, 92
      %v3477 = vpop.permute.xlu0 %3476
      %vm3486 = vcmask 572896
      %3487 = vst.msk [vmem:[%s278] sm:$0xff] %vm3486, %v3463
      %3488 = vst.msk [vmem:[%s278 + $0x8] sm:$0xff] %vm3486, %v3465
      %3489 = vst.msk [vmem:[%s278 + $0x10] sm:$0xff] %vm3486, %v3467
      %3490 = vst.msk [vmem:[%s278 + $0x18] sm:$0xff] %vm3486, %v3469
      %3491 = vst.msk [vmem:[%s278 + $0x20] sm:$0xff] %vm3486, %v3471
      %3492 = vst.msk [vmem:[%s278 + $0x28] sm:$0xff] %vm3486, %v3473
      %3493 = vst.msk [vmem:[%s278 + $0x30] sm:$0xff] %vm3486, %v3475
      %3494 = vst.msk [vmem:[%s278 + $0x38] sm:$0xff] %vm3486, %v3477
      %v3495 = vld [vmem:[#allocation4] sm:$0xff]
      %v3496 = vld [vmem:[#allocation4 + $0x10] sm:$0xff]
      %v3497 = vld [vmem:[#allocation4 + $0x20] sm:$0xff]
      %v3498 = vld [vmem:[#allocation4 + $0x30] sm:$0xff]
      %v3499 = vld [vmem:[#allocation4 + $0x40] sm:$0xff]
      %v3500 = vld [vmem:[#allocation4 + $0x50] sm:$0xff]
      %v3501 = vld [vmem:[#allocation4 + $0x60] sm:$0xff]
      %v3502 = vld [vmem:[#allocation4 + $0x70] sm:$0xff]
      %3511 = vrot.lane.b32.xlu0 %v3495, 86
      %v3512 = vpop.permute.xlu0 %3511
      %3513 = vrot.lane.b32.xlu0 %v3496, 86
      %v3514 = vpop.permute.xlu0 %3513
      %3515 = vrot.lane.b32.xlu0 %v3497, 86
      %v3516 = vpop.permute.xlu0 %3515
      %3517 = vrot.lane.b32.xlu0 %v3498, 86
      %v3518 = vpop.permute.xlu0 %3517
      %3519 = vrot.lane.b32.xlu0 %v3499, 86
      %v3520 = vpop.permute.xlu0 %3519
      %3521 = vrot.lane.b32.xlu0 %v3500, 86
      %v3522 = vpop.permute.xlu0 %3521
      %3523 = vrot.lane.b32.xlu0 %v3501, 86
      %v3524 = vpop.permute.xlu0 %3523
      %3525 = vrot.lane.b32.xlu0 %v3502, 86
      %v3526 = vpop.permute.xlu0 %3525
      %vm3535 = vcmask 654896
      %3536 = vst.msk [vmem:[%s278] sm:$0xff] %vm3535, %v3512
      %3537 = vst.msk [vmem:[%s278 + $0x8] sm:$0xff] %vm3535, %v3514
      %3538 = vst.msk [vmem:[%s278 + $0x10] sm:$0xff] %vm3535, %v3516
      %3539 = vst.msk [vmem:[%s278 + $0x18] sm:$0xff] %vm3535, %v3518
      %3540 = vst.msk [vmem:[%s278 + $0x20] sm:$0xff] %vm3535, %v3520
      %3541 = vst.msk [vmem:[%s278 + $0x28] sm:$0xff] %vm3535, %v3522
      %3542 = vst.msk [vmem:[%s278 + $0x30] sm:$0xff] %vm3535, %v3524
      %3543 = vst.msk [vmem:[%s278 + $0x38] sm:$0xff] %vm3535, %v3526
      %v3544 = vld [vmem:[#allocation4 + $0x8] sm:$0xff]
      %v3545 = vld [vmem:[#allocation4 + $0x18] sm:$0xff]
      %v3546 = vld [vmem:[#allocation4 + $0x28] sm:$0xff]
      %v3547 = vld [vmem:[#allocation4 + $0x38] sm:$0xff]
      %v3548 = vld [vmem:[#allocation4 + $0x48] sm:$0xff]
      %v3549 = vld [vmem:[#allocation4 + $0x58] sm:$0xff]
      %v3550 = vld [vmem:[#allocation4 + $0x68] sm:$0xff]
      %v3551 = vld [vmem:[#allocation4 + $0x78] sm:$0xff]
      %3560 = vrot.lane.b32.xlu0 %v3544, 80
      %v3561 = vpop.permute.xlu0 %3560
      %3562 = vrot.lane.b32.xlu0 %v3545, 80
      %v3563 = vpop.permute.xlu0 %3562
      %3564 = vrot.lane.b32.xlu0 %v3546, 80
      %v3565 = vpop.permute.xlu0 %3564
      %3566 = vrot.lane.b32.xlu0 %v3547, 80
      %v3567 = vpop.permute.xlu0 %3566
      %3568 = vrot.lane.b32.xlu0 %v3548, 80
      %v3569 = vpop.permute.xlu0 %3568
      %3570 = vrot.lane.b32.xlu0 %v3549, 80
      %v3571 = vpop.permute.xlu0 %3570
      %3572 = vrot.lane.b32.xlu0 %v3550, 80
      %v3573 = vpop.permute.xlu0 %3572
      %3574 = vrot.lane.b32.xlu0 %v3551, 80
      %v3575 = vpop.permute.xlu0 %3574
      %vm3584 = vcmask 736896
      %3585 = vst.msk [vmem:[%s278] sm:$0xff] %vm3584, %v3561
      %3586 = vst.msk [vmem:[%s278 + $0x8] sm:$0xff] %vm3584, %v3563
      %3587 = vst.msk [vmem:[%s278 + $0x10] sm:$0xff] %vm3584, %v3565
      %3588 = vst.msk [vmem:[%s278 + $0x18] sm:$0xff] %vm3584, %v3567
      %3589 = vst.msk [vmem:[%s278 + $0x20] sm:$0xff] %vm3584, %v3569
      %3590 = vst.msk [vmem:[%s278 + $0x28] sm:$0xff] %vm3584, %v3571
      %3591 = vst.msk [vmem:[%s278 + $0x30] sm:$0xff] %vm3584, %v3573
      %3592 = vst.msk [vmem:[%s278 + $0x38] sm:$0xff] %vm3584, %v3575
      %v3593 = vld [vmem:[#allocation4 + $0x8] sm:$0xff]
      %v3594 = vld [vmem:[#allocation4 + $0x18] sm:$0xff]
      %v3595 = vld [vmem:[#allocation4 + $0x28] sm:$0xff]
      %v3596 = vld [vmem:[#allocation4 + $0x38] sm:$0xff]
      %v3597 = vld [vmem:[#allocation4 + $0x48] sm:$0xff]
      %v3598 = vld [vmem:[#allocation4 + $0x58] sm:$0xff]
      %v3599 = vld [vmem:[#allocation4 + $0x68] sm:$0xff]
      %v3600 = vld [vmem:[#allocation4 + $0x78] sm:$0xff]
      %3609 = vrot.lane.b32.xlu0 %v3593, 74
      %v3610 = vpop.permute.xlu0 %3609
      %3611 = vrot.lane.b32.xlu0 %v3594, 74
      %v3612 = vpop.permute.xlu0 %3611
      %3613 = vrot.lane.b32.xlu0 %v3595, 74
      %v3614 = vpop.permute.xlu0 %3613
      %3615 = vrot.lane.b32.xlu0 %v3596, 74
      %v3616 = vpop.permute.xlu0 %3615
      %3617 = vrot.lane.b32.xlu0 %v3597, 74
      %v3618 = vpop.permute.xlu0 %3617
      %3619 = vrot.lane.b32.xlu0 %v3598, 74
      %v3620 = vpop.permute.xlu0 %3619
      %3621 = vrot.lane.b32.xlu0 %v3599, 74
      %v3622 = vpop.permute.xlu0 %3621
      %3623 = vrot.lane.b32.xlu0 %v3600, 74
      %v3624 = vpop.permute.xlu0 %3623
      %vm3633 = vcmask 818896
      %3634 = vst.msk [vmem:[%s278] sm:$0xff] %vm3633, %v3610
      %3635 = vst.msk [vmem:[%s278 + $0x8] sm:$0xff] %vm3633, %v3612
      %3636 = vst.msk [vmem:[%s278 + $0x10] sm:$0xff] %vm3633, %v3614
      %3637 = vst.msk [vmem:[%s278 + $0x18] sm:$0xff] %vm3633, %v3616
      %3638 = vst.msk [vmem:[%s278 + $0x20] sm:$0xff] %vm3633, %v3618
      %3639 = vst.msk [vmem:[%s278 + $0x28] sm:$0xff] %vm3633, %v3620
      %3640 = vst.msk [vmem:[%s278 + $0x30] sm:$0xff] %vm3633, %v3622
      %3641 = vst.msk [vmem:[%s278 + $0x38] sm:$0xff] %vm3633, %v3624
      %p3642 = scmp.lt.s32.totalorder %s18, 1
      %s3643 = scalar_select %p3642, %s18, 1
      %s3644 = smul.addr %s3643, 8
      %s3645 = smul.addr %s3644, 8
      %s3646 = scalar_lea.vmem %s7, %s3645
      // Predicated region
      $region49: #{conv_network_forward.2} parent=47 // pred_check
        %p3647 = pneg %p188
      $region50: #{conv_network_forward.2} parent=47 // pred_check_branch
        %3649 = sbr.rel (%p3647) target = $region52
      $region51: #{conv_network_forward.2} parent=47 // pred_region
        _
      $region52: #{conv_network_forward.2} parent=47 // pred_fallthru
        _
    $region48: #{conv_network_forward.2} parent=5 // pred_fallthru
      _
    %p3650 = scmp.le.s32.totalorder 2, %s13
    // Predicated region
    $region53: #{conv_network_forward.2} parent=5 // pred_check
      %p3651 = pneg %p3650
    $region54: #{conv_network_forward.2} parent=5 // pred_check_branch
      %3653 = sbr.rel (%p3651) target = $region56
    $region55: #{conv_network_forward.2} parent=5 // pred_region
      %s3654 = ssub.s32 %s13, 2
      // Predicated region
      $region57: #{conv_network_forward.2} parent=55 // pred_check
        %p3655 = pneg %p194
      $region58: #{conv_network_forward.2} parent=55 // pred_check_branch
        %3657 = sbr.rel (%p3655) target = $region60
      $region59: #{conv_network_forward.2} parent=55 // pred_region
        %p3658 = scmp.lt.s32.totalorder %s19, 1
        %s3659 = scalar_select %p3658, %s19, 1
        %s3660 = smul.addr %s3659, 8
        %s3661 = smul.addr %s3660, 8
        %s3662 = scalar_lea.vmem %s7, %s3661
      $region60: #{conv_network_forward.2} parent=55 // pred_fallthru
        _
    $region56: #{conv_network_forward.2} parent=5 // pred_fallthru
      _
  $region6: #{conv_network_forward.2} parent=0 // loop_footer
    %s17 = sadd.s32 1, %s13
  $region7: #{conv_network_forward.2} parent=0 // loop_footer_branch
    %12 = sbr.rel target = $region3
  $region8: #{conv_network_forward.2} parent=0 // loop_exit
    _

</llo_original>
